<compile_context>
chip_gen: v7x
topology: tpu7x:2x2x1
jax: 0.10.0
libtpu: 0.0.40
codegen_flags: <defaults>
</compile_context>

<pallas_src>
import functools

import jax
import jax.numpy as jnp
from jax.experimental import pallas as pl
from jax.experimental.pallas import tpu as pltpu

# --------------------------------------------------------------------------
# Small synthetic config (analog of 768-dim / 12-head / 12-layer real models)
# --------------------------------------------------------------------------
D = 256            # embed dim (2 x 128 lanes -> lane-dense)
NUM_HEADS = 2
HEAD_DIM = D // NUM_HEADS          # 128 -> every per-head slice is tile-aligned
MLP_HIDDEN = 512
N_LAYERS = 2
VOCAB = 128

IMG_SIZE = 16
VIT_PATCH = 8      # -> 4 patches  + CLS = 5  tokens (analog of 197)
BLIP_PATCH = 4     # -> 16 patches + CLS = 17 tokens (analog of 577)
TXT_SEQ = 8

# Stacked per-layer weight order (leading dim = layer index).
_STACK = ('ln1_g', 'ln1_b', 'wqkv', 'bqkv', 'wo', 'bo',
          'ln2_g', 'ln2_b', 'w1', 'b1', 'w2', 'b2')


# --------------------------------------------------------------------------
# In-kernel math helpers (operate on jnp values loaded from VMEM refs)
# --------------------------------------------------------------------------
def _layernorm(v, g, b):
    mu = jnp.mean(v, axis=-1, keepdims=True)
    var = jnp.mean((v - mu) ** 2, axis=-1, keepdims=True)
    return (v - mu) * jax.lax.rsqrt(var + 1e-5) * g + b


def _gelu(x):
    c = 0.7978845608028654  # sqrt(2/pi)
    return 0.5 * x * (1.0 + jnp.tanh(c * (x + 0.044715 * x * x * x)))


def _encoder_layer(x, bias, ln1_g, ln1_b, wqkv, bqkv, wo, bo,
                   ln2_g, ln2_b, w1, b1, w2, b2):
    """One pre-LN transformer layer on a per-example (S, D) block.

    x      : (S, D) f32 activation
    bias   : None, or (1, S) f32 additive key-padding bias (text)
    weights: bf16 matmul weights / f32 LN params & biases for ONE layer
    """
    bf16 = jnp.bfloat16
    f32 = jnp.float32

    # ---- multi-head self-attention (pre-LN) ----
    h = _layernorm(x, ln1_g, ln1_b)
    # Fused QKV projection; attention scale already folded into the Q columns.
    qkv = jnp.dot(h.astype(bf16), wqkv, preferred_element_type=f32) + bqkv    # (S, 3D)

    attn_out = jnp.zeros_like(x)
    for hh in range(NUM_HEADS):          # static unroll; all slices 128-aligned
        o0 = hh * HEAD_DIM
        qh = qkv[:, o0:o0 + HEAD_DIM].astype(bf16)                 # (S, 128)
        kh = qkv[:, D + o0:D + o0 + HEAD_DIM].astype(bf16)
        vh = qkv[:, 2 * D + o0:2 * D + o0 + HEAD_DIM].astype(bf16)

        s = jnp.dot(qh, kh.T, preferred_element_type=f32)          # (S, S)
        if bias is not None:
            s = s + bias                                           # (1, S) bcast
        s = s - jnp.max(s, axis=-1, keepdims=True)
        p = jnp.exp(s)
        p = p * pl.reciprocal(jnp.sum(p, axis=-1, keepdims=True), approx=True)

        oh = jnp.dot(p.astype(bf16), vh, preferred_element_type=f32)   # (S, 128)
        # per-head K-chunk of the output projection (128-row aligned slice)
        attn_out = attn_out + jnp.dot(oh.astype(bf16), wo[o0:o0 + HEAD_DIM, :],
                                      preferred_element_type=f32)
    x = x + attn_out + bo

    # ---- MLP (pre-LN) ----
    h2 = _layernorm(x, ln2_g, ln2_b)
    m = jnp.dot(h2.astype(bf16), w1, preferred_element_type=f32) + b1
    m = _gelu(m)
    m = jnp.dot(m.astype(bf16), w2, preferred_element_type=f32) + b2
    return x + m


# --------------------------------------------------------------------------
# Kernels.  grid = (B, N_LAYERS), dimension_semantics = ("parallel","arbitrary").
# Per-layer weights are streamed (index_map (l, 0, 0)); the activation lives in
# a VMEM scratch carried across the layer axis; output written on the last l.
# --------------------------------------------------------------------------
def _vision_encoder_kernel(tok_ref, pw_ref, pos_ref, lng_ref, lnb_ref,
                           ln1g_ref, ln1b_ref, wqkv_ref, bqkv_ref, wo_ref, bo_ref,
                           ln2g_ref, ln2b_ref, w1_ref, b1_ref, w2_ref, b2_ref,
                           o_ref, x_scr, *, cls_only):
    l = pl.program_id(1)

    @pl.when(l == 0)
    def _():
        # Fused patch embed (bf16 matmul, f32 accumulate).  Row 0 of tok_ref is
        # all-zero (CLS slot); pos_ref row 0 carries cls + pos[0], rows 1..
        # carry pos + patch_b, so one matmul + add covers every token.
        x_scr[...] = jnp.dot(tok_ref[...], pw_ref[...],
                             preferred_element_type=jnp.float32) + pos_ref[...]

    x_scr[...] = _encoder_layer(
        x_scr[...], None,
        ln1g_ref[...], ln1b_ref[...], wqkv_ref[...], bqkv_ref[...],
        wo_ref[...], bo_ref[...], ln2g_ref[...], ln2b_ref[...],
        w1_ref[...], b1_ref[...], w2_ref[...], b2_ref[...])

    @pl.when(l == pl.num_programs(1) - 1)
    def _():
        y = x_scr[0:1, :] if cls_only else x_scr[...]
        o_ref[...] = _layernorm(y, lng_ref[...], lnb_ref[...])


def _text_encoder_kernel(x_ref, mask_ref,
                         ln1g_ref, ln1b_ref, wqkv_ref, bqkv_ref, wo_ref, bo_ref,
                         ln2g_ref, ln2b_ref, w1_ref, b1_ref, w2_ref, b2_ref,
                         o_ref, x_scr, *, cls_only):
    l = pl.program_id(1)

    @pl.when(l == 0)
    def _():
        x_scr[...] = x_ref[...]

    # Key-padding additive bias built in-kernel from the tiny (1, S) mask
    # (no dense (S, S) bias array ever DMA'd from HBM).
    bias = jnp.where(mask_ref[...] > 0.0, 0.0, -1e9)

    x_scr[...] = _encoder_layer(
        x_scr[...], bias,
        ln1g_ref[...], ln1b_ref[...], wqkv_ref[...], bqkv_ref[...],
        wo_ref[...], bo_ref[...], ln2g_ref[...], ln2b_ref[...],
        w1_ref[...], b1_ref[...], w2_ref[...], b2_ref[...])

    @pl.when(l == pl.num_programs(1) - 1)
    def _():
        o_ref[...] = x_scr[0:1, :] if cls_only else x_scr[...]


# --------------------------------------------------------------------------
# Parameter init (deterministic, in-script); per-layer weights stacked on axis 0
# Matmul weights are stored in bf16; LN params / biases stay f32.
# --------------------------------------------------------------------------
def init_layer_stack(key, n_layers):
    s = 0.02
    scale = 1.0 / (HEAD_DIM ** 0.5)

    def one(k):
        kk = jax.random.split(k, 6)
        wq = s * jax.random.normal(kk[0], (D, D), jnp.float32)
        wk = s * jax.random.normal(kk[1], (D, D), jnp.float32)
        wv = s * jax.random.normal(kk[2], (D, D), jnp.float32)
        # Fused QKV weight; 1/sqrt(head_dim) folded into the Q columns.
        wqkv = jnp.concatenate([wq * scale, wk, wv], axis=1).astype(jnp.bfloat16)
        return dict(
            ln1_g=jnp.ones((1, D), jnp.float32), ln1_b=jnp.zeros((1, D), jnp.float32),
            wqkv=wqkv, bqkv=jnp.zeros((1, 3 * D), jnp.float32),
            wo=(s * jax.random.normal(kk[3], (D, D), jnp.float32)).astype(jnp.bfloat16),
            bo=jnp.zeros((1, D), jnp.float32),
            ln2_g=jnp.ones((1, D), jnp.float32), ln2_b=jnp.zeros((1, D), jnp.float32),
            w1=(s * jax.random.normal(kk[4], (D, MLP_HIDDEN), jnp.float32)).astype(jnp.bfloat16),
            b1=jnp.zeros((1, MLP_HIDDEN), jnp.float32),
            w2=(s * jax.random.normal(kk[5], (MLP_HIDDEN, D), jnp.float32)).astype(jnp.bfloat16),
            b2=jnp.zeros((1, D), jnp.float32),
        )

    per_layer = [one(k) for k in jax.random.split(key, n_layers)]
    return {name: jnp.stack([lay[name] for lay in per_layer], axis=0) for name in _STACK}


def init_vision_encoder(key, patch):
    n_patch = (IMG_SIZE // patch) ** 2
    seq = n_patch + 1
    patch_dim = 3 * patch * patch
    ks = jax.random.split(key, 4)
    return dict(
        patch=patch, seq=seq,
        patch_w=(0.02 * jax.random.normal(ks[0], (patch_dim, D), jnp.float32)).astype(jnp.bfloat16),
        patch_b=jnp.zeros((1, D), jnp.float32),
        cls=0.02 * jax.random.normal(ks[1], (1, D), jnp.float32),
        pos=0.02 * jax.random.normal(ks[2], (seq, D), jnp.float32),
        ln_g=jnp.ones((1, D), jnp.float32), ln_b=jnp.zeros((1, D), jnp.float32),
        layers=init_layer_stack(ks[3], N_LAYERS),
    )


def init_text_encoder(key):
    ks = jax.random.split(key, 3)
    return dict(
        tok=0.02 * jax.random.normal(ks[0], (VOCAB, D), jnp.float32),
        pos=0.02 * jax.random.normal(ks[1], (1, TXT_SEQ, D), jnp.float32),
        layers=init_layer_stack(ks[2], N_LAYERS),
    )


# --------------------------------------------------------------------------
# Glue (plain JAX): patchify, embeddings, and the pallas_call wrappers
# --------------------------------------------------------------------------
def patchify(pixel, patch):
    # pixel: NCHW (B, 3, H, W) -> (B, n_patches, 3*p*p), matching Conv2d(stride=p)
    B, C, H, W = pixel.shape
    gh, gw = H // patch, W // patch
    x = pixel.reshape(B, C, gh, patch, gw, patch)
    x = x.transpose(0, 2, 4, 1, 3, 5)            # (B, gh, gw, C, p, p)
    return x.reshape(B, gh * gw, C * patch * patch)


def _stacked_weight_specs(layers):
    # Per-layer weight streaming: block the layer axis, index_map -> (l, 0, 0)
    return [pl.BlockSpec((None,) + tuple(layers[name].shape[1:]),
                         lambda b, l: (l, 0, 0))
            for name in _STACK]


_COMPILER_PARAMS = pltpu.CompilerParams(
    dimension_semantics=("parallel", "arbitrary"))   # batch parallel, layers carried


def vision_forward(p, pixel, cls_only=False):
    B = pixel.shape[0]
    S = p['seq']
    tokens = patchify(pixel, p['patch'])                                 # (B, nP, Pd)
    Pd = tokens.shape[-1]
    # Zero row in the CLS slot; pos_adj row 0 = cls + pos[0], rows 1.. = pos + patch_b.
    tokens_ext = jnp.concatenate([jnp.zeros((B, 1, Pd), jnp.float32), tokens],
                                 axis=1).astype(jnp.bfloat16)            # (B, S, Pd)
    pos_adj = jnp.concatenate([p['cls'] + p['pos'][:1],
                               p['pos'][1:] + p['patch_b']], axis=0)     # (S, D)
    lw = p['layers']
    out_rows = 1 if cls_only else S

    in_specs = ([pl.BlockSpec((None, S, Pd), lambda b, l: (b, 0, 0)),    # tokens
                 pl.BlockSpec((Pd, D), lambda b, l: (0, 0)),             # patch_w
                 pl.BlockSpec((S, D), lambda b, l: (0, 0)),              # pos_adj
                 pl.BlockSpec((1, D), lambda b, l: (0, 0)),              # final ln_g
                 pl.BlockSpec((1, D), lambda b, l: (0, 0))]              # final ln_b
                + _stacked_weight_specs(lw))

    return pl.pallas_call(
        functools.partial(_vision_encoder_kernel, cls_only=cls_only),
        grid=(B, N_LAYERS),
        in_specs=in_specs,
        out_specs=pl.BlockSpec((None, out_rows, D), lambda b, l: (b, 0, 0)),
        out_shape=jax.ShapeDtypeStruct((B, out_rows, D), jnp.float32),
        scratch_shapes=[pltpu.VMEM((S, D), jnp.float32)],
        compiler_params=_COMPILER_PARAMS,
    )(tokens_ext, p['patch_w'], pos_adj, p['ln_g'], p['ln_b'],
      *[lw[name] for name in _STACK])


def text_forward(p, ids, attn_mask, cls_only=False):
    B, S = ids.shape
    # TODO(synk): token-embedding gather stays in plain JAX (no clean tiny-Pallas form).
    x = (jnp.take(p['tok'], ids, axis=0) + p['pos']).astype(jnp.float32)  # (B, S, D)
    mask = attn_mask.astype(jnp.float32).reshape(B, 1, S)                 # (B, 1, S)
    lw = p['layers']
    out_rows = 1 if cls_only else S

    in_specs = ([pl.BlockSpec((None, S, D), lambda b, l: (b, 0, 0)),      # embedded x
                 pl.BlockSpec((None, 1, S), lambda b, l: (b, 0, 0))]      # key mask
                + _stacked_weight_specs(lw))

    return pl.pallas_call(
        functools.partial(_text_encoder_kernel, cls_only=cls_only),
        grid=(B, N_LAYERS),
        in_specs=in_specs,
        out_specs=pl.BlockSpec((None, out_rows, D), lambda b, l: (b, 0, 0)),
        out_shape=jax.ShapeDtypeStruct((B, out_rows, D), jnp.float32),
        scratch_shapes=[pltpu.VMEM((S, D), jnp.float32)],
        compiler_params=_COMPILER_PARAMS,
    )(x, mask, *[lw[name] for name in _STACK])


# --------------------------------------------------------------------------
# FeatureExtractionLayer equivalent
# --------------------------------------------------------------------------
class FeatureExtractionLayer:
    def __init__(self, empty_img, empty_txt, empty_attn_mask, embed_dim, trainable, key):
        del embed_dim, trainable  # `trainable` only toggles requires_grad (no-op at inference)
        ks = jax.random.split(key, 3)
        self.vit = init_vision_encoder(ks[0], VIT_PATCH)
        self.bert = init_text_encoder(ks[1])
        # blip / blip_img / blip_txt are three copies of the SAME checkpoint in
        # the reference module -> share one set of weights here.
        blip = init_vision_encoder(ks[2], BLIP_PATCH)
        self.blip = self.blip_img = self.blip_txt = blip
        self.empty_img = empty_img              # (1, 3, H, W)
        self.empty_txt = empty_txt              # (1, TXT_SEQ)
        self.empty_attn_mask = empty_attn_mask  # (1, TXT_SEQ)
        # blip_txt always sees the constant empty image -> its vision-encoder
        # output depends only on the weights: precompute it ONCE here.
        self.blip_txt_empty_enc = vision_forward(self.blip_txt, empty_img)   # (1, Sv, D)

    def __call__(self, blip_pixel_values, blip_input_ids, blip_attn_mask,
                 vit_pixel_values, bert_input_ids, bert_attn_mask):
        BSZ = blip_pixel_values.shape[0]
        # TODO(synk): blip_input_ids / blip_attn_mask (and empty_txt/empty_attn_mask)
        # feed BLIP's text branch whose output is not part of `.last_hidden_state`
        # (HF BLIP-ITM returns the vision encoder output); kept for interface fidelity.
        cls_multi = jnp.zeros((BSZ, 1, D), jnp.float32)

        # CLS-only outputs -> (B, 1, D), no full-sequence writeback for these branches.
        vit_cls = vision_forward(self.vit, vit_pixel_values, cls_only=True)
        bert_cls = text_forward(self.bert, bert_input_ids, bert_attn_mask, cls_only=True)

        # blip and blip_img share weights AND input -> bit-identical outputs:
        # run the heavy BLIP vision pass ONCE and reuse it.
        blip_shared = vision_forward(self.blip, blip_pixel_values)          # (B, Sv, D)
        # blip_txt(empty_img) was precomputed at __init__; broadcast over batch.
        blip_t = jnp.broadcast_to(self.blip_txt_empty_enc,
                                  (BSZ,) + self.blip_txt_empty_enc.shape[1:])

        image_feature = jnp.concatenate([vit_cls, blip_shared], axis=1)
        txt_feature = jnp.concatenate([bert_cls, blip_t], axis=1)
        multimodal_feature = jnp.concatenate([cls_multi, blip_shared], axis=1)
        return image_feature, txt_feature, multimodal_feature


# --------------------------------------------------------------------------
# Main
# --------------------------------------------------------------------------
if __name__ == "__main__":
    key = jax.random.PRNGKey(0)
    k_model, k_bp, k_vp, k_bi, k_ti = jax.random.split(key, 5)

    B = 2
    blip_pixel_values = jax.random.normal(k_bp, (B, 3, IMG_SIZE, IMG_SIZE), jnp.float32)
    vit_pixel_values = jax.random.normal(k_vp, (B, 3, IMG_SIZE, IMG_SIZE), jnp.float32)
    blip_input_ids = jax.random.randint(k_bi, (B, TXT_SEQ), 0, VOCAB, jnp.int32)
    bert_input_ids = jax.random.randint(k_ti, (B, TXT_SEQ), 0, VOCAB, jnp.int32)
    blip_attn_mask = jnp.ones((B, TXT_SEQ), jnp.int32)
    bert_attn_mask = jnp.ones((B, TXT_SEQ), jnp.int32)

    empty_img = jnp.zeros((1, 3, IMG_SIZE, IMG_SIZE), jnp.float32)
    empty_txt = jnp.zeros((1, TXT_SEQ), jnp.int32)
    empty_attn_mask = jnp.ones((1, TXT_SEQ), jnp.int32)

    layer = FeatureExtractionLayer(empty_img, empty_txt, empty_attn_mask,
                                   embed_dim=D, trainable=1, key=k_model)

    image_feature, txt_feature, multimodal_feature = layer(
        blip_pixel_values, blip_input_ids, blip_attn_mask,
        vit_pixel_values, bert_input_ids, bert_attn_mask)

    jax.block_until_ready((image_feature, txt_feature, multimodal_feature))

    S_blip = (IMG_SIZE // BLIP_PATCH) ** 2 + 1
    assert image_feature.shape == (B, 1 + S_blip, D), image_feature.shape
    assert txt_feature.shape == (B, 1 + S_blip, D), txt_feature.shape
    assert multimodal_feature.shape == (B, 1 + S_blip, D), multimodal_feature.shape
    assert bool(jnp.all(multimodal_feature[:, 0] == 0.0))
    assert bool(jnp.all(jnp.isfinite(image_feature)))
    assert bool(jnp.all(jnp.isfinite(txt_feature)))
    assert bool(jnp.all(jnp.isfinite(multimodal_feature)))

    print("KERNEL_OK")
</pallas_src>

<mosaic_0001>
module attributes {stable_mosaic.version = 11 : i64} {
  func.func @_vision_encoder_kernel(%arg0: i32, %arg1: i32, %arg2: memref<1x17x48xbf16, #tpu.memory_space<vmem>>, %arg3: memref<48x256xbf16, #tpu.memory_space<vmem>>, %arg4: memref<17x256xf32, #tpu.memory_space<vmem>>, %arg5: memref<1x256xf32, #tpu.memory_space<vmem>>, %arg6: memref<1x256xf32, #tpu.memory_space<vmem>>, %arg7: memref<1x1x256xf32, #tpu.memory_space<vmem>>, %arg8: memref<1x1x256xf32, #tpu.memory_space<vmem>>, %arg9: memref<1x256x768xbf16, #tpu.memory_space<vmem>>, %arg10: memref<1x1x768xf32, #tpu.memory_space<vmem>>, %arg11: memref<1x256x256xbf16, #tpu.memory_space<vmem>>, %arg12: memref<1x1x256xf32, #tpu.memory_space<vmem>>, %arg13: memref<1x1x256xf32, #tpu.memory_space<vmem>>, %arg14: memref<1x1x256xf32, #tpu.memory_space<vmem>>, %arg15: memref<1x256x512xbf16, #tpu.memory_space<vmem>>, %arg16: memref<1x1x512xf32, #tpu.memory_space<vmem>>, %arg17: memref<1x512x256xbf16, #tpu.memory_space<vmem>>, %arg18: memref<1x1x256xf32, #tpu.memory_space<vmem>>, %arg19: memref<1x17x256xf32, #tpu.memory_space<vmem>>, %arg20: memref<17x256xf32, #tpu.memory_space<vmem>>) attributes {dimension_semantics = [#tpu.dimension_semantics<parallel>, #tpu.dimension_semantics<arbitrary>], iteration_bounds = array<i64: 1, 2>, scalar_prefetch = 0 : i64, scratch_operands = 1 : i64, tpu.core_type = #tpu.core_type<tc>, window_params = [{transform_indices = @transform_0, window_bounds = array<i64: 1, 17, 48>}, {pipeline_mode = #tpu.pipeline_mode<synchronous>, transform_indices = @transform_1, window_bounds = array<i64: 48, 256>}, {pipeline_mode = #tpu.pipeline_mode<synchronous>, transform_indices = @transform_2, window_bounds = array<i64: 17, 256>}, {pipeline_mode = #tpu.pipeline_mode<synchronous>, transform_indices = @transform_3, window_bounds = array<i64: 1, 256>}, {pipeline_mode = #tpu.pipeline_mode<synchronous>, transform_indices = @transform_4, window_bounds = array<i64: 1, 256>}, {transform_indices = @transform_5, window_bounds = array<i64: 1, 1, 256>}, {transform_indices = @transform_6, window_bounds = array<i64: 1, 1, 256>}, {transform_indices = @transform_7, window_bounds = array<i64: 1, 256, 768>}, {transform_indices = @transform_8, window_bounds = array<i64: 1, 1, 768>}, {transform_indices = @transform_9, window_bounds = array<i64: 1, 256, 256>}, {transform_indices = @transform_10, window_bounds = array<i64: 1, 1, 256>}, {transform_indices = @transform_11, window_bounds = array<i64: 1, 1, 256>}, {transform_indices = @transform_12, window_bounds = array<i64: 1, 1, 256>}, {transform_indices = @transform_13, window_bounds = array<i64: 1, 256, 512>}, {transform_indices = @transform_14, window_bounds = array<i64: 1, 1, 512>}, {transform_indices = @transform_15, window_bounds = array<i64: 1, 512, 256>}, {transform_indices = @transform_16, window_bounds = array<i64: 1, 1, 256>}, {transform_indices = @transform_17, window_bounds = array<i64: 1, 17, 256>}]} {
    %c0_i32 = arith.constant 0 : i32
    %0 = arith.cmpi eq, %arg1, %c0_i32 : i32
    %1 = arith.extui %0 : i1 to i32
    %c0_i32_0 = arith.constant 0 : i32
    %2 = arith.cmpi ne, %1, %c0_i32_0 : i32
    scf.if %2 {
      %c0_68 = arith.constant 0 : index
      %c0_69 = arith.constant 0 : index
      %c0_70 = arith.constant 0 : index
      %154 = vector.load %arg2[%c0_68, %c0_69, %c0_70] : memref<1x17x48xbf16, #tpu.memory_space<vmem>>, vector<1x17x48xbf16>
      %155 = vector.shape_cast %154 : vector<1x17x48xbf16> to vector<17x48xbf16>
      %c0_71 = arith.constant 0 : index
      %c0_72 = arith.constant 0 : index
      %156 = vector.load %arg3[%c0_71, %c0_72] : memref<48x256xbf16, #tpu.memory_space<vmem>>, vector<48x256xbf16>
      %cst_73 = arith.constant dense<0.000000e+00> : vector<17x256xf32>
      %157 = tpu.matmul %155, %156, %cst_73 {dimension_numbers = #tpu.dot_dimension_numbers<[1], [0], [0], [1], [0, 0, 1, 1], [], []>} : vector<17x48xbf16>, vector<48x256xbf16>, vector<17x256xf32> -> vector<17x256xf32>
      %c0_74 = arith.constant 0 : index
      %c0_75 = arith.constant 0 : index
      %158 = vector.load %arg4[%c0_74, %c0_75] : memref<17x256xf32, #tpu.memory_space<vmem>>, vector<17x256xf32>
      %159 = arith.addf %157, %158 : vector<17x256xf32>
      %c0_76 = arith.constant 0 : index
      %c0_77 = arith.constant 0 : index
      %160 = vector.load %arg20[%c0_76, %c0_77] : memref<17x256xf32, #tpu.memory_space<vmem>>, vector<17x256xf32>
      tpu.vector_store %arg20[%c0_76, %c0_77], %159 {strides = array<i32>} : memref<17x256xf32, #tpu.memory_space<vmem>>, vector<17x256xf32>,
    } else {
    }
    %c0 = arith.constant 0 : index
    %c0_1 = arith.constant 0 : index
    %3 = vector.load %arg20[%c0, %c0_1] : memref<17x256xf32, #tpu.memory_space<vmem>>, vector<17x256xf32>
    %c0_2 = arith.constant 0 : index
    %c0_3 = arith.constant 0 : index
    %c0_4 = arith.constant 0 : index
    %4 = vector.load %arg7[%c0_2, %c0_3, %c0_4] : memref<1x1x256xf32, #tpu.memory_space<vmem>>, vector<1x1x256xf32>
    %5 = vector.shape_cast %4 : vector<1x1x256xf32> to vector<1x256xf32>
    %c0_5 = arith.constant 0 : index
    %c0_6 = arith.constant 0 : index
    %c0_7 = arith.constant 0 : index
    %6 = vector.load %arg8[%c0_5, %c0_6, %c0_7] : memref<1x1x256xf32, #tpu.memory_space<vmem>>, vector<1x1x256xf32>
    %7 = vector.shape_cast %6 : vector<1x1x256xf32> to vector<1x256xf32>
    %c0_8 = arith.constant 0 : index
    %c0_9 = arith.constant 0 : index
    %c0_10 = arith.constant 0 : index
    %8 = vector.load %arg9[%c0_8, %c0_9, %c0_10] : memref<1x256x768xbf16, #tpu.memory_space<vmem>>, vector<1x256x768xbf16>
    %9 = vector.shape_cast %8 : vector<1x256x768xbf16> to vector<256x768xbf16>
    %c0_11 = arith.constant 0 : index
    %c0_12 = arith.constant 0 : index
    %c0_13 = arith.constant 0 : index
    %10 = vector.load %arg10[%c0_11, %c0_12, %c0_13] : memref<1x1x768xf32, #tpu.memory_space<vmem>>, vector<1x1x768xf32>
    %11 = vector.shape_cast %10 : vector<1x1x768xf32> to vector<1x768xf32>
    %c0_14 = arith.constant 0 : index
    %c0_15 = arith.constant 0 : index
    %c0_16 = arith.constant 0 : index
    %12 = vector.load %arg11[%c0_14, %c0_15, %c0_16] : memref<1x256x256xbf16, #tpu.memory_space<vmem>>, vector<1x256x256xbf16>
    %13 = vector.shape_cast %12 : vector<1x256x256xbf16> to vector<256x256xbf16>
    %c0_17 = arith.constant 0 : index
    %c0_18 = arith.constant 0 : index
    %c0_19 = arith.constant 0 : index
    %14 = vector.load %arg12[%c0_17, %c0_18, %c0_19] : memref<1x1x256xf32, #tpu.memory_space<vmem>>, vector<1x1x256xf32>
    %15 = vector.shape_cast %14 : vector<1x1x256xf32> to vector<1x256xf32>
    %c0_20 = arith.constant 0 : index
    %c0_21 = arith.constant 0 : index
    %c0_22 = arith.constant 0 : index
    %16 = vector.load %arg13[%c0_20, %c0_21, %c0_22] : memref<1x1x256xf32, #tpu.memory_space<vmem>>, vector<1x1x256xf32>
    %17 = vector.shape_cast %16 : vector<1x1x256xf32> to vector<1x256xf32>
    %c0_23 = arith.constant 0 : index
    %c0_24 = arith.constant 0 : index
    %c0_25 = arith.constant 0 : index
    %18 = vector.load %arg14[%c0_23, %c0_24, %c0_25] : memref<1x1x256xf32, #tpu.memory_space<vmem>>, vector<1x1x256xf32>
    %19 = vector.shape_cast %18 : vector<1x1x256xf32> to vector<1x256xf32>
    %c0_26 = arith.constant 0 : index
    %c0_27 = arith.constant 0 : index
    %c0_28 = arith.constant 0 : index
    %20 = vector.load %arg15[%c0_26, %c0_27, %c0_28] : memref<1x256x512xbf16, #tpu.memory_space<vmem>>, vector<1x256x512xbf16>
    %21 = vector.shape_cast %20 : vector<1x256x512xbf16> to vector<256x512xbf16>
    %c0_29 = arith.constant 0 : index
    %c0_30 = arith.constant 0 : index
    %c0_31 = arith.constant 0 : index
    %22 = vector.load %arg16[%c0_29, %c0_30, %c0_31] : memref<1x1x512xf32, #tpu.memory_space<vmem>>, vector<1x1x512xf32>
    %23 = vector.shape_cast %22 : vector<1x1x512xf32> to vector<1x512xf32>
    %c0_32 = arith.constant 0 : index
    %c0_33 = arith.constant 0 : index
    %c0_34 = arith.constant 0 : index
    %24 = vector.load %arg17[%c0_32, %c0_33, %c0_34] : memref<1x512x256xbf16, #tpu.memory_space<vmem>>, vector<1x512x256xbf16>
    %25 = vector.shape_cast %24 : vector<1x512x256xbf16> to vector<512x256xbf16>
    %c0_35 = arith.constant 0 : index
    %c0_36 = arith.constant 0 : index
    %c0_37 = arith.constant 0 : index
    %26 = vector.load %arg18[%c0_35, %c0_36, %c0_37] : memref<1x1x256xf32, #tpu.memory_space<vmem>>, vector<1x1x256xf32>
    %27 = vector.shape_cast %26 : vector<1x1x256xf32> to vector<1x256xf32>
    %cst = arith.constant dense<0.000000e+00> : vector<17xf32>
    %28 = vector.multi_reduction <add>, %3, %cst [1] : vector<17x256xf32> to vector<17xf32>
    %29 = vector.shape_cast %28 : vector<17xf32> to vector<17x1xf32>
    %cst_38 = arith.constant 2.560000e+02 : f32
    %30 = vector.broadcast %cst_38 : f32 to vector<17x1xf32>
    %31 = arith.divf %29, %30 : vector<17x1xf32>
    %32 = vector.broadcast %31 : vector<17x1xf32> to vector<17x256xf32>
    %33 = arith.subf %3, %32 : vector<17x256xf32>
    %34 = arith.mulf %33, %33 : vector<17x256xf32>
    %cst_39 = arith.constant dense<0.000000e+00> : vector<17xf32>
    %35 = vector.multi_reduction <add>, %34, %cst_39 [1] : vector<17x256xf32> to vector<17xf32>
    %36 = vector.shape_cast %35 : vector<17xf32> to vector<17x1xf32>
    %cst_40 = arith.constant 2.560000e+02 : f32
    %37 = vector.broadcast %cst_40 : f32 to vector<17x1xf32>
    %38 = arith.divf %36, %37 : vector<17x1xf32>
    %39 = vector.broadcast %31 : vector<17x1xf32> to vector<17x256xf32>
    %40 = arith.subf %3, %39 : vector<17x256xf32>
    %cst_41 = arith.constant 9.99999974E-6 : f32
    %41 = vector.broadcast %cst_41 : f32 to vector<17x1xf32>
    %42 = arith.addf %38, %41 : vector<17x1xf32>
    %43 = math.rsqrt %42 : vector<17x1xf32>
    %44 = vector.broadcast %43 : vector<17x1xf32> to vector<17x256xf32>
    %45 = arith.mulf %40, %44 : vector<17x256xf32>
    %46 = vector.broadcast %5 : vector<1x256xf32> to vector<17x256xf32>
    %47 = arith.mulf %45, %46 : vector<17x256xf32>
    %48 = vector.broadcast %7 : vector<1x256xf32> to vector<17x256xf32>
    %49 = arith.addf %47, %48 : vector<17x256xf32>
    %50 = arith.truncf %49 : vector<17x256xf32> to vector<17x256xbf16>
    %cst_42 = arith.constant dense<0.000000e+00> : vector<17x768xf32>
    %51 = tpu.matmul %50, %9, %cst_42 {dimension_numbers = #tpu.dot_dimension_numbers<[1], [0], [0], [1], [0, 0, 1, 1], [], []>} : vector<17x256xbf16>, vector<256x768xbf16>, vector<17x768xf32> -> vector<17x768xf32>
    %52 = vector.broadcast %11 : vector<1x768xf32> to vector<17x768xf32>
    %53 = arith.addf %51, %52 : vector<17x768xf32>
    %cst_43 = arith.constant 0.000000e+00 : f32
    %54 = vector.broadcast %cst_43 : f32 to vector<17x256xf32>
    %55 = vector.extract_strided_slice %53 {offsets = [0, 0], sizes = [17, 128], strides = [1, 1]} : vector<17x768xf32> to vector<17x128xf32>
    %56 = arith.truncf %55 : vector<17x128xf32> to vector<17x128xbf16>
    %57 = vector.extract_strided_slice %53 {offsets = [0, 256], sizes = [17, 128], strides = [1, 1]} : vector<17x768xf32> to vector<17x128xf32>
    %58 = arith.truncf %57 : vector<17x128xf32> to vector<17x128xbf16>
    %59 = vector.extract_strided_slice %53 {offsets = [0, 512], sizes = [17, 128], strides = [1, 1]} : vector<17x768xf32> to vector<17x128xf32>
    %60 = arith.truncf %59 : vector<17x128xf32> to vector<17x128xbf16>
    %61 = tpu.transpose %58, [1, 0] : vector<17x128xbf16> -> vector<128x17xbf16>
    %cst_44 = arith.constant dense<0.000000e+00> : vector<17x17xf32>
    %62 = tpu.matmul %56, %61, %cst_44 {dimension_numbers = #tpu.dot_dimension_numbers<[1], [0], [0], [1], [0, 0, 1, 1], [], []>} : vector<17x128xbf16>, vector<128x17xbf16>, vector<17x17xf32> -> vector<17x17xf32>
    %cst_45 = arith.constant dense<0xFF800000> : vector<17xf32>
    %63 = vector.multi_reduction <maximumf>, %62, %cst_45 [1] : vector<17x17xf32> to vector<17xf32>
    %64 = vector.shape_cast %63 : vector<17xf32> to vector<17x1xf32>
    %65 = vector.broadcast %64 : vector<17x1xf32> to vector<17x17xf32>
    %66 = arith.subf %62, %65 : vector<17x17xf32>
    %67 = math.exp %66 : vector<17x17xf32>
    %cst_46 = arith.constant dense<0.000000e+00> : vector<17xf32>
    %68 = vector.multi_reduction <add>, %67, %cst_46 [1] : vector<17x17xf32> to vector<17xf32>
    %69 = vector.shape_cast %68 : vector<17xf32> to vector<17x1xf32>
    %70 = tpu.reciprocal %69 {approx = true} : vector<17x1xf32> -> vector<17x1xf32>
    %71 = vector.broadcast %70 : vector<17x1xf32> to vector<17x17xf32>
    %72 = arith.mulf %67, %71 : vector<17x17xf32>
    %73 = arith.truncf %72 : vector<17x17xf32> to vector<17x17xbf16>
    %cst_47 = arith.constant dense<0.000000e+00> : vector<17x128xf32>
    %74 = tpu.matmul %73, %60, %cst_47 {dimension_numbers = #tpu.dot_dimension_numbers<[1], [0], [0], [1], [0, 0, 1, 1], [], []>} : vector<17x17xbf16>, vector<17x128xbf16>, vector<17x128xf32> -> vector<17x128xf32>
    %75 = arith.truncf %74 : vector<17x128xf32> to vector<17x128xbf16>
    %76 = vector.extract_strided_slice %13 {offsets = [0, 0], sizes = [128, 256], strides = [1, 1]} : vector<256x256xbf16> to vector<128x256xbf16>
    %cst_48 = arith.constant dense<0.000000e+00> : vector<17x256xf32>
    %77 = tpu.matmul %75, %76, %cst_48 {dimension_numbers = #tpu.dot_dimension_numbers<[1], [0], [0], [1], [0, 0, 1, 1], [], []>} : vector<17x128xbf16>, vector<128x256xbf16>, vector<17x256xf32> -> vector<17x256xf32>
    %78 = arith.addf %54, %77 : vector<17x256xf32>
    %79 = vector.extract_strided_slice %53 {offsets = [0, 128], sizes = [17, 128], strides = [1, 1]} : vector<17x768xf32> to vector<17x128xf32>
    %80 = arith.truncf %79 : vector<17x128xf32> to vector<17x128xbf16>
    %81 = vector.extract_strided_slice %53 {offsets = [0, 384], sizes = [17, 128], strides = [1, 1]} : vector<17x768xf32> to vector<17x128xf32>
    %82 = arith.truncf %81 : vector<17x128xf32> to vector<17x128xbf16>
    %83 = vector.extract_strided_slice %53 {offsets = [0, 640], sizes = [17, 128], strides = [1, 1]} : vector<17x768xf32> to vector<17x128xf32>
    %84 = arith.truncf %83 : vector<17x128xf32> to vector<17x128xbf16>
    %85 = tpu.transpose %82, [1, 0] : vector<17x128xbf16> -> vector<128x17xbf16>
    %cst_49 = arith.constant dense<0.000000e+00> : vector<17x17xf32>
    %86 = tpu.matmul %80, %85, %cst_49 {dimension_numbers = #tpu.dot_dimension_numbers<[1], [0], [0], [1], [0, 0, 1, 1], [], []>} : vector<17x128xbf16>, vector<128x17xbf16>, vector<17x17xf32> -> vector<17x17xf32>
    %cst_50 = arith.constant dense<0xFF800000> : vector<17xf32>
    %87 = vector.multi_reduction <maximumf>, %86, %cst_50 [1] : vector<17x17xf32> to vector<17xf32>
    %88 = vector.shape_cast %87 : vector<17xf32> to vector<17x1xf32>
    %89 = vector.broadcast %88 : vector<17x1xf32> to vector<17x17xf32>
    %90 = arith.subf %86, %89 : vector<17x17xf32>
    %91 = math.exp %90 : vector<17x17xf32>
    %cst_51 = arith.constant dense<0.000000e+00> : vector<17xf32>
    %92 = vector.multi_reduction <add>, %91, %cst_51 [1] : vector<17x17xf32> to vector<17xf32>
    %93 = vector.shape_cast %92 : vector<17xf32> to vector<17x1xf32>
    %94 = tpu.reciprocal %93 {approx = true} : vector<17x1xf32> -> vector<17x1xf32>
    %95 = vector.broadcast %94 : vector<17x1xf32> to vector<17x17xf32>
    %96 = arith.mulf %91, %95 : vector<17x17xf32>
    %97 = arith.truncf %96 : vector<17x17xf32> to vector<17x17xbf16>
    %cst_52 = arith.constant dense<0.000000e+00> : vector<17x128xf32>
    %98 = tpu.matmul %97, %84, %cst_52 {dimension_numbers = #tpu.dot_dimension_numbers<[1], [0], [0], [1], [0, 0, 1, 1], [], []>} : vector<17x17xbf16>, vector<17x128xbf16>, vector<17x128xf32> -> vector<17x128xf32>
    %99 = arith.truncf %98 : vector<17x128xf32> to vector<17x128xbf16>
    %100 = vector.extract_strided_slice %13 {offsets = [128, 0], sizes = [128, 256], strides = [1, 1]} : vector<256x256xbf16> to vector<128x256xbf16>
    %cst_53 = arith.constant dense<0.000000e+00> : vector<17x256xf32>
    %101 = tpu.matmul %99, %100, %cst_53 {dimension_numbers = #tpu.dot_dimension_numbers<[1], [0], [0], [1], [0, 0, 1, 1], [], []>} : vector<17x128xbf16>, vector<128x256xbf16>, vector<17x256xf32> -> vector<17x256xf32>
    %102 = arith.addf %78, %101 : vector<17x256xf32>
    %103 = arith.addf %3, %102 : vector<17x256xf32>
    %104 = vector.broadcast %15 : vector<1x256xf32> to vector<17x256xf32>
    %105 = arith.addf %103, %104 : vector<17x256xf32>
    %cst_54 = arith.constant dense<0.000000e+00> : vector<17xf32>
    %106 = vector.multi_reduction <add>, %105, %cst_54 [1] : vector<17x256xf32> to vector<17xf32>
    %107 = vector.shape_cast %106 : vector<17xf32> to vector<17x1xf32>
    %cst_55 = arith.constant 2.560000e+02 : f32
    %108 = vector.broadcast %cst_55 : f32 to vector<17x1xf32>
    %109 = arith.divf %107, %108 : vector<17x1xf32>
    %110 = vector.broadcast %109 : vector<17x1xf32> to vector<17x256xf32>
    %111 = arith.subf %105, %110 : vector<17x256xf32>
    %112 = arith.mulf %111, %111 : vector<17x256xf32>
    %cst_56 = arith.constant dense<0.000000e+00> : vector<17xf32>
    %113 = vector.multi_reduction <add>, %112, %cst_56 [1] : vector<17x256xf32> to vector<17xf32>
    %114 = vector.shape_cast %113 : vector<17xf32> to vector<17x1xf32>
    %cst_57 = arith.constant 2.560000e+02 : f32
    %115 = vector.broadcast %cst_57 : f32 to vector<17x1xf32>
    %116 = arith.divf %114, %115 : vector<17x1xf32>
    %117 = vector.broadcast %109 : vector<17x1xf32> to vector<17x256xf32>
    %118 = arith.subf %105, %117 : vector<17x256xf32>
    %cst_58 = arith.constant 9.99999974E-6 : f32
    %119 = vector.broadcast %cst_58 : f32 to vector<17x1xf32>
    %120 = arith.addf %116, %119 : vector<17x1xf32>
    %121 = math.rsqrt %120 : vector<17x1xf32>
    %122 = vector.broadcast %121 : vector<17x1xf32> to vector<17x256xf32>
    %123 = arith.mulf %118, %122 : vector<17x256xf32>
    %124 = vector.broadcast %17 : vector<1x256xf32> to vector<17x256xf32>
    %125 = arith.mulf %123, %124 : vector<17x256xf32>
    %126 = vector.broadcast %19 : vector<1x256xf32> to vector<17x256xf32>
    %127 = arith.addf %125, %126 : vector<17x256xf32>
    %128 = arith.truncf %127 : vector<17x256xf32> to vector<17x256xbf16>
    %cst_59 = arith.constant dense<0.000000e+00> : vector<17x512xf32>
    %129 = tpu.matmul %128, %21, %cst_59 {dimension_numbers = #tpu.dot_dimension_numbers<[1], [0], [0], [1], [0, 0, 1, 1], [], []>} : vector<17x256xbf16>, vector<256x512xbf16>, vector<17x512xf32> -> vector<17x512xf32>
    %130 = vector.broadcast %23 : vector<1x512xf32> to vector<17x512xf32>
    %131 = arith.addf %129, %130 : vector<17x512xf32>
    %cst_60 = arith.constant 5.000000e-01 : f32
    %132 = vector.broadcast %cst_60 : f32 to vector<17x512xf32>
    %133 = arith.mulf %132, %131 : vector<17x512xf32>
    %cst_61 = arith.constant 4.471500e-02 : f32
    %134 = vector.broadcast %cst_61 : f32 to vector<17x512xf32>
    %135 = arith.mulf %134, %131 : vector<17x512xf32>
    %136 = arith.mulf %135, %131 : vector<17x512xf32>
    %137 = arith.mulf %136, %131 : vector<17x512xf32>
    %138 = arith.addf %131, %137 : vector<17x512xf32>
    %cst_62 = arith.constant 0.797884583 : f32
    %139 = vector.broadcast %cst_62 : f32 to vector<17x512xf32>
    %140 = arith.mulf %139, %138 : vector<17x512xf32>
    %141 = math.tanh %140 : vector<17x512xf32>
    %cst_63 = arith.constant 1.000000e+00 : f32
    %142 = vector.broadcast %cst_63 : f32 to vector<17x512xf32>
    %143 = arith.addf %142, %141 : vector<17x512xf32>
    %144 = arith.mulf %133, %143 : vector<17x512xf32>
    %145 = arith.truncf %144 : vector<17x512xf32> to vector<17x512xbf16>
    %cst_64 = arith.constant dense<0.000000e+00> : vector<17x256xf32>
    %146 = tpu.matmul %145, %25, %cst_64 {dimension_numbers = #tpu.dot_dimension_numbers<[1], [0], [0], [1], [0, 0, 1, 1], [], []>} : vector<17x512xbf16>, vector<512x256xbf16>, vector<17x256xf32> -> vector<17x256xf32>
    %147 = vector.broadcast %27 : vector<1x256xf32> to vector<17x256xf32>
    %148 = arith.addf %146, %147 : vector<17x256xf32>
    %149 = arith.addf %105, %148 : vector<17x256xf32>
    %c0_65 = arith.constant 0 : index
    %c0_66 = arith.constant 0 : index
    %150 = vector.load %arg20[%c0_65, %c0_66] : memref<17x256xf32, #tpu.memory_space<vmem>>, vector<17x256xf32>
    tpu.vector_store %arg20[%c0_65, %c0_66], %149 {strides = array<i32>} : memref<17x256xf32, #tpu.memory_space<vmem>>, vector<17x256xf32>,
    %c1_i32 = arith.constant 1 : i32
    %151 = arith.cmpi eq, %arg1, %c1_i32 : i32
    %152 = arith.extui %151 : i1 to i32
    %c0_i32_67 = arith.constant 0 : i32
    %153 = arith.cmpi ne, %152, %c0_i32_67 : i32
    scf.if %153 {
      %c0_68 = arith.constant 0 : index
      %c0_69 = arith.constant 0 : index
      %154 = vector.load %arg20[%c0_68, %c0_69] : memref<17x256xf32, #tpu.memory_space<vmem>>, vector<17x256xf32>
      %c0_70 = arith.constant 0 : index
      %c0_71 = arith.constant 0 : index
      %155 = vector.load %arg5[%c0_70, %c0_71] : memref<1x256xf32, #tpu.memory_space<vmem>>, vector<1x256xf32>
      %c0_72 = arith.constant 0 : index
      %c0_73 = arith.constant 0 : index
      %156 = vector.load %arg6[%c0_72, %c0_73] : memref<1x256xf32, #tpu.memory_space<vmem>>, vector<1x256xf32>
      %cst_74 = arith.constant dense<0.000000e+00> : vector<17xf32>
      %157 = vector.multi_reduction <add>, %154, %cst_74 [1] : vector<17x256xf32> to vector<17xf32>
      %158 = vector.shape_cast %157 : vector<17xf32> to vector<17x1xf32>
      %cst_75 = arith.constant 2.560000e+02 : f32
      %159 = vector.broadcast %cst_75 : f32 to vector<17x1xf32>
      %160 = arith.divf %158, %159 : vector<17x1xf32>
      %161 = vector.broadcast %160 : vector<17x1xf32> to vector<17x256xf32>
      %162 = arith.subf %154, %161 : vector<17x256xf32>
      %163 = arith.mulf %162, %162 : vector<17x256xf32>
      %cst_76 = arith.constant dense<0.000000e+00> : vector<17xf32>
      %164 = vector.multi_reduction <add>, %163, %cst_76 [1] : vector<17x256xf32> to vector<17xf32>
      %165 = vector.shape_cast %164 : vector<17xf32> to vector<17x1xf32>
      %cst_77 = arith.constant 2.560000e+02 : f32
      %166 = vector.broadcast %cst_77 : f32 to vector<17x1xf32>
      %167 = arith.divf %165, %166 : vector<17x1xf32>
      %168 = vector.broadcast %160 : vector<17x1xf32> to vector<17x256xf32>
      %169 = arith.subf %154, %168 : vector<17x256xf32>
      %cst_78 = arith.constant 9.99999974E-6 : f32
      %170 = vector.broadcast %cst_78 : f32 to vector<17x1xf32>
      %171 = arith.addf %167, %170 : vector<17x1xf32>
      %172 = math.rsqrt %171 : vector<17x1xf32>
      %173 = vector.broadcast %172 : vector<17x1xf32> to vector<17x256xf32>
      %174 = arith.mulf %169, %173 : vector<17x256xf32>
      %175 = vector.broadcast %155 : vector<1x256xf32> to vector<17x256xf32>
      %176 = arith.mulf %174, %175 : vector<17x256xf32>
      %177 = vector.broadcast %156 : vector<1x256xf32> to vector<17x256xf32>
      %178 = arith.addf %176, %177 : vector<17x256xf32>
      %c0_79 = arith.constant 0 : index
      %c0_80 = arith.constant 0 : index
      %c0_81 = arith.constant 0 : index
      %179 = vector.load %arg19[%c0_79, %c0_80, %c0_81] : memref<1x17x256xf32, #tpu.memory_space<vmem>>, vector<1x17x256xf32>
      %180 = vector.shape_cast %179 : vector<1x17x256xf32> to vector<17x256xf32>
      %181 = vector.shape_cast %178 : vector<17x256xf32> to vector<1x17x256xf32>
      tpu.vector_store %arg19[%c0_79, %c0_80, %c0_81], %181 {strides = array<i32>} : memref<1x17x256xf32, #tpu.memory_space<vmem>>, vector<1x17x256xf32>,
    } else {
    }
    return
  }
  func.func @transform_0(%arg0: i32, %arg1: i32) -> (i32, i32, i32) {
    %c0_i32 = arith.constant 0 : i32
    %c0_i32_0 = arith.constant 0 : i32
    %c0_i32_1 = arith.constant 0 : i32
    return %arg0, %c0_i32, %c0_i32_0 : i32, i32, i32
  }
  func.func @transform_1(%arg0: i32, %arg1: i32) -> (i32, i32) {
    %c0_i32 = arith.constant 0 : i32
    %c0_i32_0 = arith.constant 0 : i32
    %c0_i32_1 = arith.constant 0 : i32
    return %c0_i32, %c0_i32_0 : i32, i32
  }
  func.func @transform_2(%arg0: i32, %arg1: i32) -> (i32, i32) {
    %c0_i32 = arith.constant 0 : i32
    %c0_i32_0 = arith.constant 0 : i32
    %c0_i32_1 = arith.constant 0 : i32
    return %c0_i32, %c0_i32_0 : i32, i32
  }
  func.func @transform_3(%arg0: i32, %arg1: i32) -> (i32, i32) {
    %c0_i32 = arith.constant 0 : i32
    %c0_i32_0 = arith.constant 0 : i32
    %c0_i32_1 = arith.constant 0 : i32
    return %c0_i32, %c0_i32_0 : i32, i32
  }
  func.func @transform_4(%arg0: i32, %arg1: i32) -> (i32, i32) {
    %c0_i32 = arith.constant 0 : i32
    %c0_i32_0 = arith.constant 0 : i32
    %c0_i32_1 = arith.constant 0 : i32
    return %c0_i32, %c0_i32_0 : i32, i32
  }
  func.func @transform_5(%arg0: i32, %arg1: i32) -> (i32, i32, i32) {
    %c0_i32 = arith.constant 0 : i32
    %c0_i32_0 = arith.constant 0 : i32
    %c0_i32_1 = arith.constant 0 : i32
    return %arg1, %c0_i32, %c0_i32_0 : i32, i32, i32
  }
  func.func @transform_6(%arg0: i32, %arg1: i32) -> (i32, i32, i32) {
    %c0_i32 = arith.constant 0 : i32
    %c0_i32_0 = arith.constant 0 : i32
    %c0_i32_1 = arith.constant 0 : i32
    return %arg1, %c0_i32, %c0_i32_0 : i32, i32, i32
  }
  func.func @transform_7(%arg0: i32, %arg1: i32) -> (i32, i32, i32) {
    %c0_i32 = arith.constant 0 : i32
    %c0_i32_0 = arith.constant 0 : i32
    %c0_i32_1 = arith.constant 0 : i32
    return %arg1, %c0_i32, %c0_i32_0 : i32, i32, i32
  }
  func.func @transform_8(%arg0: i32, %arg1: i32) -> (i32, i32, i32) {
    %c0_i32 = arith.constant 0 : i32
    %c0_i32_0 = arith.constant 0 : i32
    %c0_i32_1 = arith.constant 0 : i32
    return %arg1, %c0_i32, %c0_i32_0 : i32, i32, i32
  }
  func.func @transform_9(%arg0: i32, %arg1: i32) -> (i32, i32, i32) {
    %c0_i32 = arith.constant 0 : i32
    %c0_i32_0 = arith.constant 0 : i32
    %c0_i32_1 = arith.constant 0 : i32
    return %arg1, %c0_i32, %c0_i32_0 : i32, i32, i32
  }
  func.func @transform_10(%arg0: i32, %arg1: i32) -> (i32, i32, i32) {
    %c0_i32 = arith.constant 0 : i32
    %c0_i32_0 = arith.constant 0 : i32
    %c0_i32_1 = arith.constant 0 : i32
    return %arg1, %c0_i32, %c0_i32_0 : i32, i32, i32
  }
  func.func @transform_11(%arg0: i32, %arg1: i32) -> (i32, i32, i32) {
    %c0_i32 = arith.constant 0 : i32
    %c0_i32_0 = arith.constant 0 : i32
    %c0_i32_1 = arith.constant 0 : i32
    return %arg1, %c0_i32, %c0_i32_0 : i32, i32, i32
  }
  func.func @transform_12(%arg0: i32, %arg1: i32) -> (i32, i32, i32) {
    %c0_i32 = arith.constant 0 : i32
    %c0_i32_0 = arith.constant 0 : i32
    %c0_i32_1 = arith.constant 0 : i32
    return %arg1, %c0_i32, %c0_i32_0 : i32, i32, i32
  }
  func.func @transform_13(%arg0: i32, %arg1: i32) -> (i32, i32, i32) {
    %c0_i32 = arith.constant 0 : i32
    %c0_i32_0 = arith.constant 0 : i32
    %c0_i32_1 = arith.constant 0 : i32
    return %arg1, %c0_i32, %c0_i32_0 : i32, i32, i32
  }
  func.func @transform_14(%arg0: i32, %arg1: i32) -> (i32, i32, i32) {
    %c0_i32 = arith.constant 0 : i32
    %c0_i32_0 = arith.constant 0 : i32
    %c0_i32_1 = arith.constant 0 : i32
    return %arg1, %c0_i32, %c0_i32_0 : i32, i32, i32
  }
  func.func @transform_15(%arg0: i32, %arg1: i32) -> (i32, i32, i32) {
    %c0_i32 = arith.constant 0 : i32
    %c0_i32_0 = arith.constant 0 : i32
    %c0_i32_1 = arith.constant 0 : i32
    return %arg1, %c0_i32, %c0_i32_0 : i32, i32, i32
  }
  func.func @transform_16(%arg0: i32, %arg1: i32) -> (i32, i32, i32) {
    %c0_i32 = arith.constant 0 : i32
    %c0_i32_0 = arith.constant 0 : i32
    %c0_i32_1 = arith.constant 0 : i32
    return %arg1, %c0_i32, %c0_i32_0 : i32, i32, i32
  }
  func.func @transform_17(%arg0: i32, %arg1: i32) -> (i32, i32, i32) {
    %c0_i32 = arith.constant 0 : i32
    %c0_i32_0 = arith.constant 0 : i32
    %c0_i32_1 = arith.constant 0 : i32
    return %arg0, %c0_i32, %c0_i32_0 : i32, i32, i32
  }
}

</mosaic_0001>

<llo_original>
// kernel: tpu_custom_call.1
$region0: #{tpu_custom_call.1}
  #allocation0 [shape = 'u32[]', space=smem, size = 0x4, offset = 0x4, fixed_abs, tag = 'smem constant byte address 0x4 - core index']
  #allocation1 [shape = 'u32[144,128]{1,0:T(1,128)}', space=vmem, size = 0x12000, scoped, tag = 'internal scratch']
  #allocation2 [shape = 'f32[17,256]{1,0:T(8,128)}', space=vmem, size = 0x6000, scoped, tag = 'scratch operand']
  %s0 = inlined_call_operand.hbm [shape: bf16[1,17,48], index: 0, kind: input, shape index: {}]
  %s1 = inlined_call_operand.hbm [shape: bf16[48,256], index: 1, kind: input, shape index: {}]
  %s2 = inlined_call_operand.hbm [shape: f32[17,256], index: 2, kind: input, shape index: {}]
  %s3 = inlined_call_operand.hbm [shape: f32[1,256], index: 3, kind: input, shape index: {}]
  %s4 = inlined_call_operand.hbm [shape: f32[1,256], index: 4, kind: input, shape index: {}]
  %s5 = inlined_call_operand.hbm [shape: f32[2,1,256], index: 5, kind: input, shape index: {}]
  %s6 = inlined_call_operand.hbm [shape: f32[2,1,256], index: 6, kind: input, shape index: {}]
  %s7 = inlined_call_operand.hbm [shape: bf16[2,256,768], index: 7, kind: input, shape index: {}]
  %s8 = inlined_call_operand.vmem [shape: f32[2,1,768], index: 8, kind: input, shape index: {}]
  %s9 = inlined_call_operand.hbm [shape: bf16[2,256,256], index: 9, kind: input, shape index: {}]
  %s10 = inlined_call_operand.vmem [shape: f32[2,1,256], index: 10, kind: input, shape index: {}]
  %s11 = inlined_call_operand.vmem [shape: f32[2,1,256], index: 11, kind: input, shape index: {}]
  %s12 = inlined_call_operand.vmem [shape: f32[2,1,256], index: 12, kind: input, shape index: {}]
  %s13 = inlined_call_operand.hbm [shape: bf16[2,256,512], index: 13, kind: input, shape index: {}]
  %s14 = inlined_call_operand.vmem [shape: f32[2,1,512], index: 14, kind: input, shape index: {}]
  %s15 = inlined_call_operand.hbm [shape: bf16[2,512,256], index: 15, kind: input, shape index: {}]
  %s16 = inlined_call_operand.vmem [shape: f32[2,1,256], index: 16, kind: input, shape index: {}]
  %s17 = inlined_call_operand.vmem [shape: f32[1,17,256], index: 17, kind: output, shape index: {}]
  %s18 = sld [smem:[#allocation0]]
  $region153: #{tpu_custom_call.1} parent=0
    _
  %s20 = ssub.s32 1, %s18
  %s21 = scalar_select 0, %s20, %s18
  $region1: #{tpu_custom_call.1} parent=0
    #allocation3 [shape = 'u8[6144]{0}', space=vmem, size = 0x1800, scoped, tag = 'input window, operand 0, single buffered']
    #allocation4 [shape = 's32[2]{0}', space=sflag, size = 0x8, scoped, tag = 'scoped memory for tpu_custom_call.1']
    #allocation5 [shape = 'u8[24576]{0}', space=vmem, size = 0x6000, scoped, tag = 'input window, operand 1, single buffered']
    #allocation6 [shape = 's32[1]{0}', space=sflag, size = 0x4, scoped, tag = 'scoped memory for tpu_custom_call.1']
    #allocation7 [shape = 'u8[24576]{0}', space=vmem, size = 0x6000, scoped, tag = 'input window, operand 2, single buffered']
    #allocation8 [shape = 'u8[1024]{0}', space=vmem, size = 0x400, scoped, tag = 'input window, operand 3, single buffered']
    #allocation9 [shape = 's32[1]{0}', space=sflag, size = 0x4, scoped, tag = 'scoped memory for tpu_custom_call.1']
    #allocation10 [shape = 'u8[1024]{0}', space=vmem, size = 0x400, scoped, tag = 'input window, operand 4, single buffered']
    #allocation11 [shape = 'u8[2048]{0}', space=vmem, size = 0x800, scoped, tag = 'input window, operand 5']
    #allocation12 [shape = 's32[2]{0}', space=sflag, size = 0x8, scoped, tag = 'scoped memory for tpu_custom_call.1']
    #allocation13 [shape = 'u8[2048]{0}', space=vmem, size = 0x800, scoped, tag = 'input window, operand 6']
    #allocation14 [shape = 'u8[786432]{0}', space=vmem, size = 0xc0000, scoped, tag = 'input window, operand 7']
    #allocation15 [shape = 's32[2]{0}', space=sflag, size = 0x8, scoped, tag = 'scoped memory for tpu_custom_call.1']
    #allocation16 [shape = 'u8[262144]{0}', space=vmem, size = 0x40000, scoped, tag = 'input window, operand 9']
    #allocation17 [shape = 'u8[524288]{0}', space=vmem, size = 0x80000, scoped, tag = 'input window, operand 13']
    #allocation18 [shape = 's32[2]{0}', space=sflag, size = 0x8, scoped, tag = 'scoped memory for tpu_custom_call.1']
    #allocation19 [shape = 'u8[524288]{0}', space=vmem, size = 0x80000, scoped, tag = 'input window, operand 15']
    %22 = vsyncpa [#allocation4], 0
    %23 = vsyncpa [#allocation6], 0
    %24 = vsyncpa [#allocation9], 0
    %25 = vsyncpa [#allocation12], 0
    %s26 = scalar_lea.sflag [#allocation12], 1
    %27 = vsyncpa %s26, 0
    %28 = vsyncpa [#allocation15], 0
    %s29 = scalar_lea.sflag [#allocation15], 1
    %30 = vsyncpa %s29, 0
    %31 = vsyncpa [#allocation18], 0
    %s32 = scalar_lea.sflag [#allocation18], 1
    %33 = vsyncpa %s32, 0
    loop: start=0, step=1, limit=4
    $region2: #{tpu_custom_call.1} parent=1 // loop_pre_header
      _
    $region3: #{tpu_custom_call.1} parent=1 // loop_header
      %s35 = sphi 0, %s39
      %p36 = scmp.ge.s32.totalorder %s35, 4
      %s42 = sphi 0, %s54
      %s43 = sphi 0, %s50
      %s44 = sphi 0, %s42
      %s45 = sphi 0, %s43
      %s46 = sphi 0, %s44
      %s47 = sphi 0, %s45
      %s57 = sphi 0, %s59
      %s60 = sphi 0, %s57
      %s61 = sphi 0, %s60
      %s77 = sphi 0, %s61
      %s81 = sphi 0, %s81
      %s83 = sphi 0, %s81
      %s84 = sphi 0, %s83
      %s98 = sphi 0, %s84
      %s102 = sphi 0, %s102
      %s104 = sphi 0, %s102
      %s105 = sphi 0, %s104
      %s119 = sphi 0, %s105
      %s123 = sphi 0, %s123
      %s125 = sphi 0, %s123
      %s126 = sphi 0, %s125
      %s140 = sphi 0, %s126
      %s144 = sphi 0, %s144
      %s146 = sphi 0, %s144
      %s147 = sphi 0, %s146
      %s161 = sphi 0, %s147
      %s167 = sphi 0, %s169
      %s170 = sphi 0, %s167
      %s171 = sphi 0, %s170
      %s187 = sphi 0, %s171
      %s193 = sphi 0, %s195
      %s196 = sphi 0, %s193
      %s197 = sphi 0, %s196
      %s213 = sphi 0, %s197
      %s219 = sphi 0, %s221
      %s222 = sphi 0, %s219
      %s223 = sphi 0, %s222
      %s239 = sphi 0, %s223
      %s245 = sphi 0, %s247
      %s248 = sphi 0, %s245
      %s249 = sphi 0, %s248
      %s265 = sphi 0, %s249
      %s271 = sphi 0, %s273
      %s274 = sphi 0, %s271
      %s275 = sphi 0, %s274
      %s291 = sphi 0, %s275
      %s297 = sphi 0, %s299
      %s300 = sphi 0, %s297
      %s301 = sphi 0, %s300
      %s317 = sphi 0, %s301
      %s323 = sphi 0, %s325
      %s326 = sphi 0, %s323
      %s327 = sphi 0, %s326
      %s343 = sphi 0, %s327
      %s349 = sphi 0, %s351
      %s352 = sphi 0, %s349
      %s353 = sphi 0, %s352
      %s369 = sphi 0, %s353
      %s375 = sphi 0, %s377
      %s378 = sphi 0, %s375
      %s379 = sphi 0, %s378
      %s395 = sphi 0, %s379
      %s401 = sphi 0, %s403
      %s404 = sphi 0, %s401
      %s405 = sphi 0, %s404
      %s421 = sphi 0, %s405
      %s427 = sphi 0, %s429
      %s430 = sphi 0, %s427
      %s431 = sphi 0, %s430
      %s447 = sphi 0, %s431
      %s453 = sphi 0, %s455
      %s456 = sphi 0, %s453
      %s457 = sphi 0, %s456
      %s473 = sphi 0, %s457
      %s479 = sphi 0, %s481
      %s482 = sphi 0, %s479
      %s483 = sphi 0, %s482
      %s499 = sphi 0, %s483
    $region4: #{tpu_custom_call.1} parent=1 // loop_header_branch
      %38 = sbr.rel (%p36) target = $region8
    $region5: #{tpu_custom_call.1} parent=1 // loop_body
      %s40 = ssub.s32 %s35, 1
      %s41 = ssub.s32 %s35, 2
      %s48 = sadd.s32 1, %s43
      %p49 = scmp.ge.s32.totalorder %s48, 2
      %s50 = scalar_select %p49, 0, %s48
      %s51 = sadd.s32 1, %s42
      %s52 = scalar_select %p49, %s51, %s42
      %p53 = scmp.ge.s32.totalorder %s52, 1
      %s54 = scalar_select %p53, 0, %s52
      %s55 = ssub.s32 %s42, %s54
      %p56 = scmp.eq.s32.totalorder %s55, 0
      %s58 = sadd.s32 %s57, 1
      %s59 = scalar_select %p56, %s57, %s58
      %p62 = pneg %p56
      %p63 = scmp.eq.s32.totalorder %s35, 1
      %p64 = por %p62, %p63
      %p65 = scmp.ne.s32.totalorder %s57, %s60
      %p66 = scmp.eq.s32.totalorder %s35, 0
      %p67 = por %p65, %p66
      %p68 = scmp.ne.s32.totalorder %s57, %s60
      %p69 = scmp.eq.s32.totalorder %s40, 1
      %p70 = por %p68, %p69
      %p71 = scmp.ne.s32.totalorder %s60, %s61
      %p72 = scmp.eq.s32.totalorder %s40, 0
      %p73 = por %p71, %p72
      %p74 = scmp.ne.s32.totalorder %s60, %s61
      %p75 = scmp.eq.s32.totalorder %s41, 1
      %p76 = por %p74, %p75
      %p78 = scmp.ne.s32.totalorder %s61, %s77
      %p79 = scmp.eq.s32.totalorder %s41, 0
      %p80 = por %p78, %p79
      %s82 = sadd.s32 %s81, 1
      %p85 = scmp.eq.s32.totalorder %s35, 1
      %p86 = scmp.ne.s32.totalorder %s81, %s83
      %p87 = scmp.eq.s32.totalorder %s35, 0
      %p88 = por %p86, %p87
      %p89 = scmp.ne.s32.totalorder %s81, %s83
      %p90 = scmp.eq.s32.totalorder %s40, 1
      %p91 = por %p89, %p90
      %p92 = scmp.ne.s32.totalorder %s83, %s84
      %p93 = scmp.eq.s32.totalorder %s40, 0
      %p94 = por %p92, %p93
      %p95 = scmp.ne.s32.totalorder %s83, %s84
      %p96 = scmp.eq.s32.totalorder %s41, 1
      %p97 = por %p95, %p96
      %p99 = scmp.ne.s32.totalorder %s84, %s98
      %p100 = scmp.eq.s32.totalorder %s41, 0
      %p101 = por %p99, %p100
      %s103 = sadd.s32 %s102, 1
      %p106 = scmp.eq.s32.totalorder %s35, 1
      %p107 = scmp.ne.s32.totalorder %s102, %s104
      %p108 = scmp.eq.s32.totalorder %s35, 0
      %p109 = por %p107, %p108
      %p110 = scmp.ne.s32.totalorder %s102, %s104
      %p111 = scmp.eq.s32.totalorder %s40, 1
      %p112 = por %p110, %p111
      %p113 = scmp.ne.s32.totalorder %s104, %s105
      %p114 = scmp.eq.s32.totalorder %s40, 0
      %p115 = por %p113, %p114
      %p116 = scmp.ne.s32.totalorder %s104, %s105
      %p117 = scmp.eq.s32.totalorder %s41, 1
      %p118 = por %p116, %p117
      %p120 = scmp.ne.s32.totalorder %s105, %s119
      %p121 = scmp.eq.s32.totalorder %s41, 0
      %p122 = por %p120, %p121
      %s124 = sadd.s32 %s123, 1
      %p127 = scmp.eq.s32.totalorder %s35, 1
      %p128 = scmp.ne.s32.totalorder %s123, %s125
      %p129 = scmp.eq.s32.totalorder %s35, 0
      %p130 = por %p128, %p129
      %p131 = scmp.ne.s32.totalorder %s123, %s125
      %p132 = scmp.eq.s32.totalorder %s40, 1
      %p133 = por %p131, %p132
      %p134 = scmp.ne.s32.totalorder %s125, %s126
      %p135 = scmp.eq.s32.totalorder %s40, 0
      %p136 = por %p134, %p135
      %p137 = scmp.ne.s32.totalorder %s125, %s126
      %p138 = scmp.eq.s32.totalorder %s41, 1
      %p139 = por %p137, %p138
      %p141 = scmp.ne.s32.totalorder %s126, %s140
      %p142 = scmp.eq.s32.totalorder %s41, 0
      %p143 = por %p141, %p142
      %s145 = sadd.s32 %s144, 1
      %p148 = scmp.eq.s32.totalorder %s35, 1
      %p149 = scmp.ne.s32.totalorder %s144, %s146
      %p150 = scmp.eq.s32.totalorder %s35, 0
      %p151 = por %p149, %p150
      %p152 = scmp.ne.s32.totalorder %s144, %s146
      %p153 = scmp.eq.s32.totalorder %s40, 1
      %p154 = por %p152, %p153
      %p155 = scmp.ne.s32.totalorder %s146, %s147
      %p156 = scmp.eq.s32.totalorder %s40, 0
      %p157 = por %p155, %p156
      %p158 = scmp.ne.s32.totalorder %s146, %s147
      %p159 = scmp.eq.s32.totalorder %s41, 1
      %p160 = por %p158, %p159
      %p162 = scmp.ne.s32.totalorder %s147, %s161
      %p163 = scmp.eq.s32.totalorder %s41, 0
      %p164 = por %p162, %p163
      %s165 = ssub.s32 %s43, %s50
      %p166 = scmp.eq.s32.totalorder %s165, 0
      %s168 = sadd.s32 %s167, 1
      %s169 = scalar_select %p166, %s167, %s168
      %p172 = pneg %p166
      %p173 = scmp.eq.s32.totalorder %s35, 1
      %p174 = por %p172, %p173
      %p175 = scmp.ne.s32.totalorder %s167, %s170
      %p176 = scmp.eq.s32.totalorder %s35, 0
      %p177 = por %p175, %p176
      %p178 = scmp.ne.s32.totalorder %s167, %s170
      %p179 = scmp.eq.s32.totalorder %s40, 1
      %p180 = por %p178, %p179
      %p181 = scmp.ne.s32.totalorder %s170, %s171
      %p182 = scmp.eq.s32.totalorder %s40, 0
      %p183 = por %p181, %p182
      %p184 = scmp.ne.s32.totalorder %s170, %s171
      %p185 = scmp.eq.s32.totalorder %s41, 1
      %p186 = por %p184, %p185
      %p188 = scmp.ne.s32.totalorder %s171, %s187
      %p189 = scmp.eq.s32.totalorder %s41, 0
      %p190 = por %p188, %p189
      %s191 = ssub.s32 %s43, %s50
      %p192 = scmp.eq.s32.totalorder %s191, 0
      %s194 = sadd.s32 %s193, 1
      %s195 = scalar_select %p192, %s193, %s194
      %p198 = pneg %p192
      %p199 = scmp.eq.s32.totalorder %s35, 1
      %p200 = por %p198, %p199
      %p201 = scmp.ne.s32.totalorder %s193, %s196
      %p202 = scmp.eq.s32.totalorder %s35, 0
      %p203 = por %p201, %p202
      %p204 = scmp.ne.s32.totalorder %s193, %s196
      %p205 = scmp.eq.s32.totalorder %s40, 1
      %p206 = por %p204, %p205
      %p207 = scmp.ne.s32.totalorder %s196, %s197
      %p208 = scmp.eq.s32.totalorder %s40, 0
      %p209 = por %p207, %p208
      %p210 = scmp.ne.s32.totalorder %s196, %s197
      %p211 = scmp.eq.s32.totalorder %s41, 1
      %p212 = por %p210, %p211
      %p214 = scmp.ne.s32.totalorder %s197, %s213
      %p215 = scmp.eq.s32.totalorder %s41, 0
      %p216 = por %p214, %p215
      %s217 = ssub.s32 %s43, %s50
      %p218 = scmp.eq.s32.totalorder %s217, 0
      %s220 = sadd.s32 %s219, 1
      %s221 = scalar_select %p218, %s219, %s220
      %p224 = pneg %p218
      %p225 = scmp.eq.s32.totalorder %s35, 1
      %p226 = por %p224, %p225
      %p227 = scmp.ne.s32.totalorder %s219, %s222
      %p228 = scmp.eq.s32.totalorder %s35, 0
      %p229 = por %p227, %p228
      %p230 = scmp.ne.s32.totalorder %s219, %s222
      %p231 = scmp.eq.s32.totalorder %s40, 1
      %p232 = por %p230, %p231
      %p233 = scmp.ne.s32.totalorder %s222, %s223
      %p234 = scmp.eq.s32.totalorder %s40, 0
      %p235 = por %p233, %p234
      %p236 = scmp.ne.s32.totalorder %s222, %s223
      %p237 = scmp.eq.s32.totalorder %s41, 1
      %p238 = por %p236, %p237
      %p240 = scmp.ne.s32.totalorder %s223, %s239
      %p241 = scmp.eq.s32.totalorder %s41, 0
      %p242 = por %p240, %p241
      %s243 = ssub.s32 %s43, %s50
      %p244 = scmp.eq.s32.totalorder %s243, 0
      %s246 = sadd.s32 %s245, 1
      %s247 = scalar_select %p244, %s245, %s246
      %p250 = pneg %p244
      %p251 = scmp.eq.s32.totalorder %s35, 1
      %p252 = por %p250, %p251
      %p253 = scmp.ne.s32.totalorder %s245, %s248
      %p254 = scmp.eq.s32.totalorder %s35, 0
      %p255 = por %p253, %p254
      %p256 = scmp.ne.s32.totalorder %s245, %s248
      %p257 = scmp.eq.s32.totalorder %s40, 1
      %p258 = por %p256, %p257
      %p259 = scmp.ne.s32.totalorder %s248, %s249
      %p260 = scmp.eq.s32.totalorder %s40, 0
      %p261 = por %p259, %p260
      %p262 = scmp.ne.s32.totalorder %s248, %s249
      %p263 = scmp.eq.s32.totalorder %s41, 1
      %p264 = por %p262, %p263
      %p266 = scmp.ne.s32.totalorder %s249, %s265
      %p267 = scmp.eq.s32.totalorder %s41, 0
      %p268 = por %p266, %p267
      %s269 = ssub.s32 %s43, %s50
      %p270 = scmp.eq.s32.totalorder %s269, 0
      %s272 = sadd.s32 %s271, 1
      %s273 = scalar_select %p270, %s271, %s272
      %p276 = pneg %p270
      %p277 = scmp.eq.s32.totalorder %s35, 1
      %p278 = por %p276, %p277
      %p279 = scmp.ne.s32.totalorder %s271, %s274
      %p280 = scmp.eq.s32.totalorder %s35, 0
      %p281 = por %p279, %p280
      %p282 = scmp.ne.s32.totalorder %s271, %s274
      %p283 = scmp.eq.s32.totalorder %s40, 1
      %p284 = por %p282, %p283
      %p285 = scmp.ne.s32.totalorder %s274, %s275
      %p286 = scmp.eq.s32.totalorder %s40, 0
      %p287 = por %p285, %p286
      %p288 = scmp.ne.s32.totalorder %s274, %s275
      %p289 = scmp.eq.s32.totalorder %s41, 1
      %p290 = por %p288, %p289
      %p292 = scmp.ne.s32.totalorder %s275, %s291
      %p293 = scmp.eq.s32.totalorder %s41, 0
      %p294 = por %p292, %p293
      %s295 = ssub.s32 %s43, %s50
      %p296 = scmp.eq.s32.totalorder %s295, 0
      %s298 = sadd.s32 %s297, 1
      %s299 = scalar_select %p296, %s297, %s298
      %p302 = pneg %p296
      %p303 = scmp.eq.s32.totalorder %s35, 1
      %p304 = por %p302, %p303
      %p305 = scmp.ne.s32.totalorder %s297, %s300
      %p306 = scmp.eq.s32.totalorder %s35, 0
      %p307 = por %p305, %p306
      %p308 = scmp.ne.s32.totalorder %s297, %s300
      %p309 = scmp.eq.s32.totalorder %s40, 1
      %p310 = por %p308, %p309
      %p311 = scmp.ne.s32.totalorder %s300, %s301
      %p312 = scmp.eq.s32.totalorder %s40, 0
      %p313 = por %p311, %p312
      %p314 = scmp.ne.s32.totalorder %s300, %s301
      %p315 = scmp.eq.s32.totalorder %s41, 1
      %p316 = por %p314, %p315
      %p318 = scmp.ne.s32.totalorder %s301, %s317
      %p319 = scmp.eq.s32.totalorder %s41, 0
      %p320 = por %p318, %p319
      %s321 = ssub.s32 %s43, %s50
      %p322 = scmp.eq.s32.totalorder %s321, 0
      %s324 = sadd.s32 %s323, 1
      %s325 = scalar_select %p322, %s323, %s324
      %p328 = pneg %p322
      %p329 = scmp.eq.s32.totalorder %s35, 1
      %p330 = por %p328, %p329
      %p331 = scmp.ne.s32.totalorder %s323, %s326
      %p332 = scmp.eq.s32.totalorder %s35, 0
      %p333 = por %p331, %p332
      %p334 = scmp.ne.s32.totalorder %s323, %s326
      %p335 = scmp.eq.s32.totalorder %s40, 1
      %p336 = por %p334, %p335
      %p337 = scmp.ne.s32.totalorder %s326, %s327
      %p338 = scmp.eq.s32.totalorder %s40, 0
      %p339 = por %p337, %p338
      %p340 = scmp.ne.s32.totalorder %s326, %s327
      %p341 = scmp.eq.s32.totalorder %s41, 1
      %p342 = por %p340, %p341
      %p344 = scmp.ne.s32.totalorder %s327, %s343
      %p345 = scmp.eq.s32.totalorder %s41, 0
      %p346 = por %p344, %p345
      %s347 = ssub.s32 %s43, %s50
      %p348 = scmp.eq.s32.totalorder %s347, 0
      %s350 = sadd.s32 %s349, 1
      %s351 = scalar_select %p348, %s349, %s350
      %p354 = pneg %p348
      %p355 = scmp.eq.s32.totalorder %s35, 1
      %p356 = por %p354, %p355
      %p357 = scmp.ne.s32.totalorder %s349, %s352
      %p358 = scmp.eq.s32.totalorder %s35, 0
      %p359 = por %p357, %p358
      %p360 = scmp.ne.s32.totalorder %s349, %s352
      %p361 = scmp.eq.s32.totalorder %s40, 1
      %p362 = por %p360, %p361
      %p363 = scmp.ne.s32.totalorder %s352, %s353
      %p364 = scmp.eq.s32.totalorder %s40, 0
      %p365 = por %p363, %p364
      %p366 = scmp.ne.s32.totalorder %s352, %s353
      %p367 = scmp.eq.s32.totalorder %s41, 1
      %p368 = por %p366, %p367
      %p370 = scmp.ne.s32.totalorder %s353, %s369
      %p371 = scmp.eq.s32.totalorder %s41, 0
      %p372 = por %p370, %p371
      %s373 = ssub.s32 %s43, %s50
      %p374 = scmp.eq.s32.totalorder %s373, 0
      %s376 = sadd.s32 %s375, 1
      %s377 = scalar_select %p374, %s375, %s376
      %p380 = pneg %p374
      %p381 = scmp.eq.s32.totalorder %s35, 1
      %p382 = por %p380, %p381
      %p383 = scmp.ne.s32.totalorder %s375, %s378
      %p384 = scmp.eq.s32.totalorder %s35, 0
      %p385 = por %p383, %p384
      %p386 = scmp.ne.s32.totalorder %s375, %s378
      %p387 = scmp.eq.s32.totalorder %s40, 1
      %p388 = por %p386, %p387
      %p389 = scmp.ne.s32.totalorder %s378, %s379
      %p390 = scmp.eq.s32.totalorder %s40, 0
      %p391 = por %p389, %p390
      %p392 = scmp.ne.s32.totalorder %s378, %s379
      %p393 = scmp.eq.s32.totalorder %s41, 1
      %p394 = por %p392, %p393
      %p396 = scmp.ne.s32.totalorder %s379, %s395
      %p397 = scmp.eq.s32.totalorder %s41, 0
      %p398 = por %p396, %p397
      %s399 = ssub.s32 %s43, %s50
      %p400 = scmp.eq.s32.totalorder %s399, 0
      %s402 = sadd.s32 %s401, 1
      %s403 = scalar_select %p400, %s401, %s402
      %p406 = pneg %p400
      %p407 = scmp.eq.s32.totalorder %s35, 1
      %p408 = por %p406, %p407
      %p409 = scmp.ne.s32.totalorder %s401, %s404
      %p410 = scmp.eq.s32.totalorder %s35, 0
      %p411 = por %p409, %p410
      %p412 = scmp.ne.s32.totalorder %s401, %s404
      %p413 = scmp.eq.s32.totalorder %s40, 1
      %p414 = por %p412, %p413
      %p415 = scmp.ne.s32.totalorder %s404, %s405
      %p416 = scmp.eq.s32.totalorder %s40, 0
      %p417 = por %p415, %p416
      %p418 = scmp.ne.s32.totalorder %s404, %s405
      %p419 = scmp.eq.s32.totalorder %s41, 1
      %p420 = por %p418, %p419
      %p422 = scmp.ne.s32.totalorder %s405, %s421
      %p423 = scmp.eq.s32.totalorder %s41, 0
      %p424 = por %p422, %p423
      %s425 = ssub.s32 %s43, %s50
      %p426 = scmp.eq.s32.totalorder %s425, 0
      %s428 = sadd.s32 %s427, 1
      %s429 = scalar_select %p426, %s427, %s428
      %p432 = pneg %p426
      %p433 = scmp.eq.s32.totalorder %s35, 1
      %p434 = por %p432, %p433
      %p435 = scmp.ne.s32.totalorder %s427, %s430
      %p436 = scmp.eq.s32.totalorder %s35, 0
      %p437 = por %p435, %p436
      %p438 = scmp.ne.s32.totalorder %s427, %s430
      %p439 = scmp.eq.s32.totalorder %s40, 1
      %p440 = por %p438, %p439
      %p441 = scmp.ne.s32.totalorder %s430, %s431
      %p442 = scmp.eq.s32.totalorder %s40, 0
      %p443 = por %p441, %p442
      %p444 = scmp.ne.s32.totalorder %s430, %s431
      %p445 = scmp.eq.s32.totalorder %s41, 1
      %p446 = por %p444, %p445
      %p448 = scmp.ne.s32.totalorder %s431, %s447
      %p449 = scmp.eq.s32.totalorder %s41, 0
      %p450 = por %p448, %p449
      %s451 = ssub.s32 %s43, %s50
      %p452 = scmp.eq.s32.totalorder %s451, 0
      %s454 = sadd.s32 %s453, 1
      %s455 = scalar_select %p452, %s453, %s454
      %p458 = pneg %p452
      %p459 = scmp.eq.s32.totalorder %s35, 1
      %p460 = por %p458, %p459
      %p461 = scmp.ne.s32.totalorder %s453, %s456
      %p462 = scmp.eq.s32.totalorder %s35, 0
      %p463 = por %p461, %p462
      %p464 = scmp.ne.s32.totalorder %s453, %s456
      %p465 = scmp.eq.s32.totalorder %s40, 1
      %p466 = por %p464, %p465
      %p467 = scmp.ne.s32.totalorder %s456, %s457
      %p468 = scmp.eq.s32.totalorder %s40, 0
      %p469 = por %p467, %p468
      %p470 = scmp.ne.s32.totalorder %s456, %s457
      %p471 = scmp.eq.s32.totalorder %s41, 1
      %p472 = por %p470, %p471
      %p474 = scmp.ne.s32.totalorder %s457, %s473
      %p475 = scmp.eq.s32.totalorder %s41, 0
      %p476 = por %p474, %p475
      %s477 = ssub.s32 %s42, %s54
      %p478 = scmp.eq.s32.totalorder %s477, 0
      %s480 = sadd.s32 %s479, 1
      %s481 = scalar_select %p478, %s479, %s480
      %p484 = pneg %p478
      %p485 = scmp.eq.s32.totalorder %s35, 1
      %p486 = por %p484, %p485
      %p487 = scmp.ne.s32.totalorder %s479, %s482
      %p488 = scmp.eq.s32.totalorder %s35, 0
      %p489 = por %p487, %p488
      %p490 = scmp.ne.s32.totalorder %s479, %s482
      %p491 = scmp.eq.s32.totalorder %s40, 1
      %p492 = por %p490, %p491
      %p493 = scmp.ne.s32.totalorder %s482, %s483
      %p494 = scmp.eq.s32.totalorder %s40, 0
      %p495 = por %p493, %p494
      %p496 = scmp.ne.s32.totalorder %s482, %s483
      %p497 = scmp.eq.s32.totalorder %s41, 1
      %p498 = por %p496, %p497
      %p500 = scmp.ne.s32.totalorder %s483, %s499
      %p501 = scmp.eq.s32.totalorder %s41, 0
      %p502 = por %p500, %p501
      %p503 = scmp.le.s32.totalorder 1, %s35
      %p504 = scmp.lt.s32.totalorder %s35, 3
      %p505 = pnand %p503, %p504
      %p506 = pneg %p505
      // Predicated region
      $region9: #{tpu_custom_call.1} parent=5 // pred_check
        _
      $region10: #{tpu_custom_call.1} parent=5 // pred_check_branch
        %508 = sbr.rel (%p505) target = $region12
      $region11: #{tpu_custom_call.1} parent=5 // pred_region
        %s509 = ssub.s32 %s35, 1
        // Predicated region
        $region13: #{tpu_custom_call.1} parent=11 // pred_check
          %p510 = pneg %p73
        $region14: #{tpu_custom_call.1} parent=11 // pred_check_branch
          %512 = sbr.rel (%p510) target = $region16
        $region15: #{tpu_custom_call.1} parent=11 // pred_region
          %s514 = ssub.s32 192, 192
          %515 = vsyncadd [#allocation4], %s514
          %s516 = smul.addr %s44, 3
          %s517 = smul.addr %s516, 64
          %s518 = scalar_lea.hbm %s0, %s517
          %s519 = sshll.u32 [#allocation3], 4
          %s520 = int_to_ptr.vmem [resolvable:$true] %s519
          %525 = dma.hbm_to_vmem [thread:$0]  %s518, 192, %s520, [#allocation4], 64, 64, 4
        $region16: #{tpu_custom_call.1} parent=11 // pred_fallthru
          _
        // Predicated region
        $region17: #{tpu_custom_call.1} parent=11 // pred_check
          %p526 = pneg %p94
        $region18: #{tpu_custom_call.1} parent=11 // pred_check_branch
          %528 = sbr.rel (%p526) target = $region20
        $region19: #{tpu_custom_call.1} parent=11 // pred_region
          %s530 = ssub.s32 768, 768
          %531 = vsyncadd [#allocation6], %s530
          %s532 = sshll.u32 [#allocation5], 4
          %s533 = int_to_ptr.vmem [resolvable:$true] %s532
          %538 = dma.hbm_to_vmem [thread:$0]  %s1, 768, %s533, [#allocation6], 128, 128, 8
        $region20: #{tpu_custom_call.1} parent=11 // pred_fallthru
          _
        // Predicated region
        $region21: #{tpu_custom_call.1} parent=11 // pred_check
          %p539 = pneg %p115
        $region22: #{tpu_custom_call.1} parent=11 // pred_check_branch
          %541 = sbr.rel (%p539) target = $region24
        $region23: #{tpu_custom_call.1} parent=11 // pred_region
          %s543 = ssub.s32 768, 768
          %544 = vsyncadd [#allocation6], %s543
          %s545 = sshll.u32 [#allocation7], 4
          %s546 = int_to_ptr.vmem [resolvable:$true] %s545
          %551 = dma.hbm_to_vmem [thread:$0]  %s2, 768, %s546, [#allocation6], 256, 256, 16
        $region24: #{tpu_custom_call.1} parent=11 // pred_fallthru
          _
        // Predicated region
        $region25: #{tpu_custom_call.1} parent=11 // pred_check
          %p552 = pneg %p136
        $region26: #{tpu_custom_call.1} parent=11 // pred_check_branch
          %554 = sbr.rel (%p552) target = $region28
        $region27: #{tpu_custom_call.1} parent=11 // pred_region
          %s556 = ssub.s32 32, 32
          %557 = vsyncadd [#allocation9], %s556
          %s559 = sshll.u32 [#allocation8], 4
          %s560 = int_to_ptr.vmem [resolvable:$true] %s559
          %562 = dma.hbm_to_vmem [thread:$0]  %s3, 32, %s560, [#allocation9]
        $region28: #{tpu_custom_call.1} parent=11 // pred_fallthru
          _
        // Predicated region
        $region29: #{tpu_custom_call.1} parent=11 // pred_check
          %p563 = pneg %p157
        $region30: #{tpu_custom_call.1} parent=11 // pred_check_branch
          %565 = sbr.rel (%p563) target = $region32
        $region31: #{tpu_custom_call.1} parent=11 // pred_region
          %s567 = ssub.s32 32, 32
          %568 = vsyncadd [#allocation9], %s567
          %s570 = sshll.u32 [#allocation10], 4
          %s571 = int_to_ptr.vmem [resolvable:$true] %s570
          %573 = dma.hbm_to_vmem [thread:$0]  %s4, 32, %s571, [#allocation9]
        $region32: #{tpu_custom_call.1} parent=11 // pred_fallthru
          _
      $region12: #{tpu_custom_call.1} parent=5 // pred_fallthru
        _
      %p574 = scmp.lt.s32.totalorder %s35, 2
      // Predicated region
      $region33: #{tpu_custom_call.1} parent=5 // pred_check
        %p575 = pneg %p574
      $region34: #{tpu_custom_call.1} parent=5 // pred_check_branch
        %577 = sbr.rel (%p575) target = $region36
      $region35: #{tpu_custom_call.1} parent=5 // pred_region
        // Predicated region
        $region37: #{tpu_custom_call.1} parent=35 // pred_check
          %p578 = pneg %p177
        $region38: #{tpu_custom_call.1} parent=35 // pred_check_branch
          %580 = sbr.rel (%p578) target = $region40
        $region39: #{tpu_custom_call.1} parent=35 // pred_region
          %s581 = sand.u32 %s35, 1
          %s582 = scalar_lea.sflag [#allocation12], %s581
          %s583 = sand.u32 %s167, 1
          %s584 = smul.addr %s583, 2
          %s585 = scalar_lea.vmem [#allocation11], %s584
          %s587 = ssub.s32 32, 32
          %588 = vsyncadd %s582, %s587
          %s589 = smul.addr %s43, 2
          %s590 = smul.addr %s589, 16
          %s591 = scalar_lea.hbm %s5, %s590
          %s593 = sshll.u32 %s585, 4
          %s594 = int_to_ptr.vmem [resolvable:$true] %s593
          %596 = dma.hbm_to_vmem [thread:$0]  %s591, 32, %s594, %s582
        $region40: #{tpu_custom_call.1} parent=35 // pred_fallthru
          _
        // Predicated region
        $region41: #{tpu_custom_call.1} parent=35 // pred_check
          %p597 = pneg %p203
        $region42: #{tpu_custom_call.1} parent=35 // pred_check_branch
          %599 = sbr.rel (%p597) target = $region44
        $region43: #{tpu_custom_call.1} parent=35 // pred_region
          %s600 = sand.u32 %s35, 1
          %s601 = scalar_lea.sflag [#allocation12], %s600
          %s602 = sand.u32 %s193, 1
          %s603 = smul.addr %s602, 2
          %s604 = scalar_lea.vmem [#allocation13], %s603
          %s606 = ssub.s32 32, 32
          %607 = vsyncadd %s601, %s606
          %s608 = smul.addr %s43, 2
          %s609 = smul.addr %s608, 16
          %s610 = scalar_lea.hbm %s6, %s609
          %s612 = sshll.u32 %s604, 4
          %s613 = int_to_ptr.vmem [resolvable:$true] %s612
          %615 = dma.hbm_to_vmem [thread:$0]  %s610, 32, %s613, %s601
        $region44: #{tpu_custom_call.1} parent=35 // pred_fallthru
          _
        // Predicated region
        $region45: #{tpu_custom_call.1} parent=35 // pred_check
          %p616 = pneg %p229
        $region46: #{tpu_custom_call.1} parent=35 // pred_check_branch
          %618 = sbr.rel (%p616) target = $region48
        $region47: #{tpu_custom_call.1} parent=35 // pred_region
          %s619 = sand.u32 %s35, 1
          %s620 = scalar_lea.sflag [#allocation15], %s619
          %s621 = sand.u32 %s219, 1
          %s622 = smul.addr %s621, 768
          %s623 = scalar_lea.vmem [#allocation14], %s622
          %s625 = ssub.s32 12288, 12288
          %626 = vsyncadd %s620, %s625
          %s627 = smul.addr %s43, 192
          %s628 = smul.addr %s627, 64
          %s629 = scalar_lea.hbm %s7, %s628
          %s630 = sshll.u32 %s623, 4
          %s631 = int_to_ptr.vmem [resolvable:$true] %s630
          %636 = dma.hbm_to_vmem [thread:$0]  %s629, 12288, %s631, %s620, 384, 384, 24
        $region48: #{tpu_custom_call.1} parent=35 // pred_fallthru
          _
        // Predicated region
        $region49: #{tpu_custom_call.1} parent=35 // pred_check
          %p637 = pneg %p255
        $region50: #{tpu_custom_call.1} parent=35 // pred_check_branch
          %639 = sbr.rel (%p637) target = $region52
        $region51: #{tpu_custom_call.1} parent=35 // pred_region
          %p640 = scmp.lt.s32.totalorder %s43, 1
          %s641 = scalar_select %p640, %s43, 1
          %s642 = smul.addr %s641, 6
          %s643 = scalar_lea.vmem %s8, %s642
        $region52: #{tpu_custom_call.1} parent=35 // pred_fallthru
          _
        // Predicated region
        $region53: #{tpu_custom_call.1} parent=35 // pred_check
          %p644 = pneg %p281
        $region54: #{tpu_custom_call.1} parent=35 // pred_check_branch
          %646 = sbr.rel (%p644) target = $region56
        $region55: #{tpu_custom_call.1} parent=35 // pred_region
          %s647 = sand.u32 %s35, 1
          %s648 = scalar_lea.sflag [#allocation15], %s647
          %s649 = sand.u32 %s271, 1
          %s650 = smul.addr %s649, 256
          %s651 = scalar_lea.vmem [#allocation16], %s650
          %s653 = ssub.s32 4096, 4096
          %654 = vsyncadd %s648, %s653
          %s655 = smul.addr %s43, 64
          %s656 = smul.addr %s655, 64
          %s657 = scalar_lea.hbm %s9, %s656
          %s658 = sshll.u32 %s651, 4
          %s659 = int_to_ptr.vmem [resolvable:$true] %s658
          %664 = dma.hbm_to_vmem [thread:$0]  %s657, 4096, %s659, %s648, 128, 128, 8
        $region56: #{tpu_custom_call.1} parent=35 // pred_fallthru
          _
        // Predicated region
        $region57: #{tpu_custom_call.1} parent=35 // pred_check
          %p665 = pneg %p307
        $region58: #{tpu_custom_call.1} parent=35 // pred_check_branch
          %667 = sbr.rel (%p665) target = $region60
        $region59: #{tpu_custom_call.1} parent=35 // pred_region
          %p668 = scmp.lt.s32.totalorder %s43, 1
          %s669 = scalar_select %p668, %s43, 1
          %s670 = smul.addr %s669, 2
          %s671 = scalar_lea.vmem %s10, %s670
        $region60: #{tpu_custom_call.1} parent=35 // pred_fallthru
          _
        // Predicated region
        $region61: #{tpu_custom_call.1} parent=35 // pred_check
          %p672 = pneg %p333
        $region62: #{tpu_custom_call.1} parent=35 // pred_check_branch
          %674 = sbr.rel (%p672) target = $region64
        $region63: #{tpu_custom_call.1} parent=35 // pred_region
          %p675 = scmp.lt.s32.totalorder %s43, 1
          %s676 = scalar_select %p675, %s43, 1
          %s677 = smul.addr %s676, 2
          %s678 = scalar_lea.vmem %s11, %s677
        $region64: #{tpu_custom_call.1} parent=35 // pred_fallthru
          _
        // Predicated region
        $region65: #{tpu_custom_call.1} parent=35 // pred_check
          %p679 = pneg %p359
        $region66: #{tpu_custom_call.1} parent=35 // pred_check_branch
          %681 = sbr.rel (%p679) target = $region68
        $region67: #{tpu_custom_call.1} parent=35 // pred_region
          %p682 = scmp.lt.s32.totalorder %s43, 1
          %s683 = scalar_select %p682, %s43, 1
          %s684 = smul.addr %s683, 2
          %s685 = scalar_lea.vmem %s12, %s684
        $region68: #{tpu_custom_call.1} parent=35 // pred_fallthru
          _
        // Predicated region
        $region69: #{tpu_custom_call.1} parent=35 // pred_check
          %p686 = pneg %p385
        $region70: #{tpu_custom_call.1} parent=35 // pred_check_branch
          %688 = sbr.rel (%p686) target = $region72
        $region71: #{tpu_custom_call.1} parent=35 // pred_region
          %s689 = sand.u32 %s35, 1
          %s690 = scalar_lea.sflag [#allocation18], %s689
          %s691 = sand.u32 %s375, 1
          %s692 = smul.addr %s691, 512
          %s693 = scalar_lea.vmem [#allocation17], %s692
          %s695 = ssub.s32 8192, 8192
          %696 = vsyncadd %s690, %s695
          %s697 = smul.addr %s43, 128
          %s698 = smul.addr %s697, 64
          %s699 = scalar_lea.hbm %s13, %s698
          %s700 = sshll.u32 %s693, 4
          %s701 = int_to_ptr.vmem [resolvable:$true] %s700
          %706 = dma.hbm_to_vmem [thread:$0]  %s699, 8192, %s701, %s690, 256, 256, 16
        $region72: #{tpu_custom_call.1} parent=35 // pred_fallthru
          _
        // Predicated region
        $region73: #{tpu_custom_call.1} parent=35 // pred_check
          %p707 = pneg %p411
        $region74: #{tpu_custom_call.1} parent=35 // pred_check_branch
          %709 = sbr.rel (%p707) target = $region76
        $region75: #{tpu_custom_call.1} parent=35 // pred_region
          %p710 = scmp.lt.s32.totalorder %s43, 1
          %s711 = scalar_select %p710, %s43, 1
          %s712 = smul.addr %s711, 4
          %s713 = scalar_lea.vmem %s14, %s712
        $region76: #{tpu_custom_call.1} parent=35 // pred_fallthru
          _
        // Predicated region
        $region77: #{tpu_custom_call.1} parent=35 // pred_check
          %p714 = pneg %p437
        $region78: #{tpu_custom_call.1} parent=35 // pred_check_branch
          %716 = sbr.rel (%p714) target = $region80
        $region79: #{tpu_custom_call.1} parent=35 // pred_region
          %s717 = sand.u32 %s35, 1
          %s718 = scalar_lea.sflag [#allocation18], %s717
          %s719 = sand.u32 %s427, 1
          %s720 = smul.addr %s719, 512
          %s721 = scalar_lea.vmem [#allocation19], %s720
          %s723 = ssub.s32 8192, 8192
          %724 = vsyncadd %s718, %s723
          %s725 = smul.addr %s43, 128
          %s726 = smul.addr %s725, 64
          %s727 = scalar_lea.hbm %s15, %s726
          %s728 = sshll.u32 %s721, 4
          %s729 = int_to_ptr.vmem [resolvable:$true] %s728
          %734 = dma.hbm_to_vmem [thread:$0]  %s727, 8192, %s729, %s718, 128, 128, 8
        $region80: #{tpu_custom_call.1} parent=35 // pred_fallthru
          _
        // Predicated region
        $region81: #{tpu_custom_call.1} parent=35 // pred_check
          %p735 = pneg %p463
        $region82: #{tpu_custom_call.1} parent=35 // pred_check_branch
          %737 = sbr.rel (%p735) target = $region84
        $region83: #{tpu_custom_call.1} parent=35 // pred_region
          %p738 = scmp.lt.s32.totalorder %s43, 1
          %s739 = scalar_select %p738, %s43, 1
          %s740 = smul.addr %s739, 2
          %s741 = scalar_lea.vmem %s16, %s740
        $region84: #{tpu_custom_call.1} parent=35 // pred_fallthru
          _
      $region36: #{tpu_custom_call.1} parent=5 // pred_fallthru
        _
      %p742 = scmp.le.s32.totalorder 1, %s35
      %p743 = scmp.lt.s32.totalorder %s35, 3
      %p744 = pnand %p742, %p743
      %p745 = pneg %p744
      // Predicated region
      $region85: #{tpu_custom_call.1} parent=5 // pred_check
        _
      $region86: #{tpu_custom_call.1} parent=5 // pred_check_branch
        %747 = sbr.rel (%p744) target = $region88
      $region87: #{tpu_custom_call.1} parent=5 // pred_region
        %s748 = ssub.s32 %s35, 1
        // Predicated region
        $region89: #{tpu_custom_call.1} parent=87 // pred_check
          %p749 = pneg %p73
        $region90: #{tpu_custom_call.1} parent=87 // pred_check_branch
          %751 = sbr.rel (%p749) target = $region92
        $region91: #{tpu_custom_call.1} parent=87 // pred_region
          %752 = dma.done [#allocation4], 192
        $region92: #{tpu_custom_call.1} parent=87 // pred_fallthru
          _
        // Predicated region
        $region93: #{tpu_custom_call.1} parent=87 // pred_check
          %p753 = pneg %p94
        $region94: #{tpu_custom_call.1} parent=87 // pred_check_branch
          %755 = sbr.rel (%p753) target = $region96
        $region95: #{tpu_custom_call.1} parent=87 // pred_region
          %756 = dma.done [#allocation6], 768
        $region96: #{tpu_custom_call.1} parent=87 // pred_fallthru
          _
        // Predicated region
        $region97: #{tpu_custom_call.1} parent=87 // pred_check
          %p757 = pneg %p115
        $region98: #{tpu_custom_call.1} parent=87 // pred_check_branch
          %759 = sbr.rel (%p757) target = $region100
        $region99: #{tpu_custom_call.1} parent=87 // pred_region
          %760 = dma.done [#allocation6], 768
        $region100: #{tpu_custom_call.1} parent=87 // pred_fallthru
          _
        // Predicated region
        $region101: #{tpu_custom_call.1} parent=87 // pred_check
          %p761 = pneg %p136
        $region102: #{tpu_custom_call.1} parent=87 // pred_check_branch
          %763 = sbr.rel (%p761) target = $region104
        $region103: #{tpu_custom_call.1} parent=87 // pred_region
          %764 = dma.done [#allocation9], 32
        $region104: #{tpu_custom_call.1} parent=87 // pred_fallthru
          _
        // Predicated region
        $region105: #{tpu_custom_call.1} parent=87 // pred_check
          %p765 = pneg %p157
        $region106: #{tpu_custom_call.1} parent=87 // pred_check_branch
          %767 = sbr.rel (%p765) target = $region108
        $region107: #{tpu_custom_call.1} parent=87 // pred_region
          %768 = dma.done [#allocation9], 32
        $region108: #{tpu_custom_call.1} parent=87 // pred_fallthru
          _
        %s769 = sand.u32 %s40, 1
        %s770 = scalar_lea.sflag [#allocation12], %s769
        %s771 = sand.u32 %s170, 1
        %s772 = smul.addr %s771, 2
        %s773 = scalar_lea.vmem [#allocation11], %s772
        // Predicated region
        $region109: #{tpu_custom_call.1} parent=87 // pred_check
          %p774 = pneg %p183
        $region110: #{tpu_custom_call.1} parent=87 // pred_check_branch
          %776 = sbr.rel (%p774) target = $region112
        $region111: #{tpu_custom_call.1} parent=87 // pred_region
          %777 = dma.done %s770, 32
        $region112: #{tpu_custom_call.1} parent=87 // pred_fallthru
          _
        %s778 = sand.u32 %s40, 1
        %s779 = scalar_lea.sflag [#allocation12], %s778
        %s780 = sand.u32 %s196, 1
        %s781 = smul.addr %s780, 2
        %s782 = scalar_lea.vmem [#allocation13], %s781
        // Predicated region
        $region113: #{tpu_custom_call.1} parent=87 // pred_check
          %p783 = pneg %p209
        $region114: #{tpu_custom_call.1} parent=87 // pred_check_branch
          %785 = sbr.rel (%p783) target = $region116
        $region115: #{tpu_custom_call.1} parent=87 // pred_region
          %786 = dma.done %s779, 32
        $region116: #{tpu_custom_call.1} parent=87 // pred_fallthru
          _
        %s787 = sand.u32 %s40, 1
        %s788 = scalar_lea.sflag [#allocation15], %s787
        %s789 = sand.u32 %s222, 1
        %s790 = smul.addr %s789, 768
        %s791 = scalar_lea.vmem [#allocation14], %s790
        // Predicated region
        $region117: #{tpu_custom_call.1} parent=87 // pred_check
          %p792 = pneg %p235
        $region118: #{tpu_custom_call.1} parent=87 // pred_check_branch
          %794 = sbr.rel (%p792) target = $region120
        $region119: #{tpu_custom_call.1} parent=87 // pred_region
          %795 = dma.done %s788, 12288
        $region120: #{tpu_custom_call.1} parent=87 // pred_fallthru
          _
        %s796 = sand.u32 %s40, 1
        %s797 = scalar_lea.sflag [#allocation15], %s796
        %s798 = sand.u32 %s274, 1
        %s799 = smul.addr %s798, 256
        %s800 = scalar_lea.vmem [#allocation16], %s799
        // Predicated region
        $region121: #{tpu_custom_call.1} parent=87 // pred_check
          %p801 = pneg %p287
        $region122: #{tpu_custom_call.1} parent=87 // pred_check_branch
          %803 = sbr.rel (%p801) target = $region124
        $region123: #{tpu_custom_call.1} parent=87 // pred_region
          %804 = dma.done %s797, 4096
        $region124: #{tpu_custom_call.1} parent=87 // pred_fallthru
          _
        %s805 = sand.u32 %s40, 1
        %s806 = scalar_lea.sflag [#allocation18], %s805
        %s807 = sand.u32 %s378, 1
        %s808 = smul.addr %s807, 512
        %s809 = scalar_lea.vmem [#allocation17], %s808
        // Predicated region
        $region125: #{tpu_custom_call.1} parent=87 // pred_check
          %p810 = pneg %p391
        $region126: #{tpu_custom_call.1} parent=87 // pred_check_branch
          %812 = sbr.rel (%p810) target = $region128
        $region127: #{tpu_custom_call.1} parent=87 // pred_region
          %813 = dma.done %s806, 8192
        $region128: #{tpu_custom_call.1} parent=87 // pred_fallthru
          _
        %s814 = sand.u32 %s40, 1
        %s815 = scalar_lea.sflag [#allocation18], %s814
        %s816 = sand.u32 %s430, 1
        %s817 = smul.addr %s816, 512
        %s818 = scalar_lea.vmem [#allocation19], %s817
        // Predicated region
        $region129: #{tpu_custom_call.1} parent=87 // pred_check
          %p819 = pneg %p443
        $region130: #{tpu_custom_call.1} parent=87 // pred_check_branch
          %821 = sbr.rel (%p819) target = $region132
        $region131: #{tpu_custom_call.1} parent=87 // pred_region
          %822 = dma.done %s815, 8192
        $region132: #{tpu_custom_call.1} parent=87 // pred_fallthru
          _
        %p823 = pneg %p73
        %p824 = pneg %p70
        %p825 = pneg %p94
        %p826 = pneg %p91
        %p827 = pneg %p115
        %p828 = pneg %p112
        %p829 = pneg %p136
        %p830 = pneg %p133
        %p831 = pneg %p157
        %p832 = pneg %p154
        %s833 = sand.u32 %s40, 1
        %s834 = scalar_lea.sflag [#allocation12], %s833
        %s835 = sand.u32 %s170, 1
        %s836 = smul.addr %s835, 2
        %s837 = scalar_lea.vmem [#allocation11], %s836
        %p838 = pneg %p183
        %p839 = pneg %p180
        %s840 = sand.u32 %s40, 1
        %s841 = scalar_lea.sflag [#allocation12], %s840
        %s842 = sand.u32 %s196, 1
        %s843 = smul.addr %s842, 2
        %s844 = scalar_lea.vmem [#allocation13], %s843
        %p845 = pneg %p209
        %p846 = pneg %p206
        %s847 = sand.u32 %s40, 1
        %s848 = scalar_lea.sflag [#allocation15], %s847
        %s849 = sand.u32 %s222, 1
        %s850 = smul.addr %s849, 768
        %s851 = scalar_lea.vmem [#allocation14], %s850
        %p852 = pneg %p235
        %p853 = pneg %p232
        %p854 = scmp.lt.s32.totalorder %s45, 1
        %s855 = scalar_select %p854, %s45, 1
        %s856 = smul.addr %s855, 6
        %s857 = scalar_lea.vmem %s8, %s856
        %p858 = pneg %p261
        %p859 = pneg %p258
        %s860 = sand.u32 %s40, 1
        %s861 = scalar_lea.sflag [#allocation15], %s860
        %s862 = sand.u32 %s274, 1
        %s863 = smul.addr %s862, 256
        %s864 = scalar_lea.vmem [#allocation16], %s863
        %p865 = pneg %p287
        %p866 = pneg %p284
        %p867 = scmp.lt.s32.totalorder %s45, 1
        %s868 = scalar_select %p867, %s45, 1
        %s869 = smul.addr %s868, 2
        %s870 = scalar_lea.vmem %s10, %s869
        %p871 = pneg %p313
        %p872 = pneg %p310
        %p873 = scmp.lt.s32.totalorder %s45, 1
        %s874 = scalar_select %p873, %s45, 1
        %s875 = smul.addr %s874, 2
        %s876 = scalar_lea.vmem %s11, %s875
        %p877 = pneg %p339
        %p878 = pneg %p336
        %p879 = scmp.lt.s32.totalorder %s45, 1
        %s880 = scalar_select %p879, %s45, 1
        %s881 = smul.addr %s880, 2
        %s882 = scalar_lea.vmem %s12, %s881
        %p883 = pneg %p365
        %p884 = pneg %p362
        %s885 = sand.u32 %s40, 1
        %s886 = scalar_lea.sflag [#allocation18], %s885
        %s887 = sand.u32 %s378, 1
        %s888 = smul.addr %s887, 512
        %s889 = scalar_lea.vmem [#allocation17], %s888
        %p890 = pneg %p391
        %p891 = pneg %p388
        %p892 = scmp.lt.s32.totalorder %s45, 1
        %s893 = scalar_select %p892, %s45, 1
        %s894 = smul.addr %s893, 4
        %s895 = scalar_lea.vmem %s14, %s894
        %p896 = pneg %p417
        %p897 = pneg %p414
        %s898 = sand.u32 %s40, 1
        %s899 = scalar_lea.sflag [#allocation18], %s898
        %s900 = sand.u32 %s430, 1
        %s901 = smul.addr %s900, 512
        %s902 = scalar_lea.vmem [#allocation19], %s901
        %p903 = pneg %p443
        %p904 = pneg %p440
        %p905 = scmp.lt.s32.totalorder %s45, 1
        %s906 = scalar_select %p905, %s45, 1
        %s907 = smul.addr %s906, 2
        %s908 = scalar_lea.vmem %s16, %s907
        %p909 = pneg %p469
        %p910 = pneg %p466
        %p911 = pneg %p495
        %p912 = pneg %p492
        %p913 = scmp.lt.s32.totalorder %s44, 0
        %s914 = scalar_select %p913, %s44, 0
        %s915 = smul.addr %s914, 6
        %s916 = smul.addr %s915, 8
        %s917 = scalar_lea.vmem %s17, %s916
        %p918 = scmp.lt.s32.totalorder %s45, 1
        %s919 = scalar_select %p918, %s45, 1
        %s920 = smul.addr %s919, 6
        %s921 = scalar_lea.vmem %s8, %s920
        %p922 = scmp.lt.s32.totalorder %s45, 1
        %s923 = scalar_select %p922, %s45, 1
        %s924 = smul.addr %s923, 2
        %s925 = scalar_lea.vmem %s10, %s924
        %p926 = scmp.lt.s32.totalorder %s45, 1
        %s927 = scalar_select %p926, %s45, 1
        %s928 = smul.addr %s927, 2
        %s929 = scalar_lea.vmem %s11, %s928
        %p930 = scmp.lt.s32.totalorder %s45, 1
        %s931 = scalar_select %p930, %s45, 1
        %s932 = smul.addr %s931, 2
        %s933 = scalar_lea.vmem %s12, %s932
        %p934 = scmp.lt.s32.totalorder %s45, 1
        %s935 = scalar_select %p934, %s45, 1
        %s936 = smul.addr %s935, 4
        %s937 = scalar_lea.vmem %s14, %s936
        %p938 = scmp.lt.s32.totalorder %s45, 1
        %s939 = scalar_select %p938, %s45, 1
        %s940 = smul.addr %s939, 2
        %s941 = scalar_lea.vmem %s16, %s940
        %p942 = scmp.lt.s32.totalorder %s44, 0
        %s943 = scalar_select %p942, %s44, 0
        %s944 = smul.addr %s943, 6
        %s945 = smul.addr %s944, 8
        %s946 = scalar_lea.vmem %s17, %s945
        %p948 = scmp.eq.s32.totalorder %s45, 0
        // Predicated region
        $region133: #{tpu_custom_call.1} parent=87 // pred_check
          %p949 = pneg %p948
        $region134: #{tpu_custom_call.1} parent=87 // pred_check_branch
          %951 = sbr.rel (%p949) target = $region136
        $region135: #{tpu_custom_call.1} parent=87 // pred_region
          %v952 = vld [vmem:[#allocation3] sm:$0xf]
          %v953 = vld [vmem:[#allocation3 + $0x4] sm:$0xf]
          %v954 = vld [vmem:[#allocation3 + $0x8] sm:$0x1]
          %v955 = vld [vmem:[#allocation5] sm:$0xff]
          %v956 = vld [vmem:[#allocation5 + $0x8] sm:$0xff]
          %v957 = vld [vmem:[#allocation5 + $0x10] sm:$0xff]
          %v958 = vld [vmem:[#allocation5 + $0x18] sm:$0xff]
          %v959 = vld [vmem:[#allocation5 + $0x20] sm:$0xff]
          %v960 = vld [vmem:[#allocation5 + $0x28] sm:$0xff]
          %v961 = vld [vmem:[#allocation7] sm:$0xff]
          %v962 = vld [vmem:[#allocation7 + $0x8] sm:$0xff]
          %v963 = vld [vmem:[#allocation7 + $0x10] sm:$0xff]
          %v964 = vld [vmem:[#allocation7 + $0x18] sm:$0xff]
          %v965 = vld [vmem:[#allocation7 + $0x20] sm:$0x1]
          %v966 = vld [vmem:[#allocation7 + $0x28] sm:$0x1]
          %v970 = vunpack.c.l.b16 %v952
          %v971 = vunpack.c.l.b16 %v953
          %v972 = vunpack.c.l.b16 %v954
          %v973 = vpack.c.b16 %v971, %v970
          %v974 = vpack.c.b16 %v972, %v972
          %v981 = vunpack.c.l.b16 %v955
          %v982 = vunpack.c.h.b16 %v955
          %v983 = vunpack.c.l.b16 %v956
          %v984 = vunpack.c.h.b16 %v956
          %v985 = vunpack.c.l.b16 %v957
          %v986 = vunpack.c.h.b16 %v957
          %v987 = vunpack.c.l.b16 %v958
          %v988 = vunpack.c.h.b16 %v958
          %v989 = vunpack.c.l.b16 %v959
          %v990 = vunpack.c.h.b16 %v959
          %v991 = vunpack.c.l.b16 %v960
          %v992 = vunpack.c.h.b16 %v960
          %v993 = vpack.c.b16 %v983, %v981
          %v994 = vpack.c.b16 %v984, %v982
          %v995 = vpack.c.b16 %v987, %v985
          %v996 = vpack.c.b16 %v988, %v986
          %v997 = vpack.c.b16 %v991, %v989
          %v998 = vpack.c.b16 %v992, %v990
          %vm1005 = vcmask 392192
          %v1007 = vsel %vm1005, %v973, 0
          %v1010 = vsel %vm1005, %v974, 0
          %1012 = vmatprep.subr.bf16.mxu0 %v994
          %1013 = vmatpush1.bf16.msra.mxu0 %v993
          %1014 = vmatprep.subr.bf16.mxu0 %v996
          %1015 = vmatpush1.bf16.msra.mxu0 %v995
          %1016 = vmatprep.subr.bf16.mxu0 %v998
          %1017 = vmatpush1.bf16.msra.mxu0 %v997
          %1018 = vmatprep.subr.bf16.mxu0 0
          %1019 = vmatpush1.bf16.msra.mxu0 0
          %1020 = vmatprep.subr.bf16.mxu0 0
          %1021 = vmatpush1.bf16.msra.mxu0 0
          %1022 = vmatprep.subr.bf16.mxu0 0
          %1023 = vmatpush1.bf16.msra.mxu0 0
          %1024 = vmatprep.subr.bf16.mxu0 0
          %1025 = vmatpush1.bf16.msra.mxu0 0
          %1026 = vmatprep.subr.bf16.mxu0 0
          %1027 = vmatpush1.bf16.msra.mxu0 0
          %1028 = vmatprep.subr.bf16.mxu0 0
          %1029 = vmatpush1.bf16.msra.mxu0 0
          %1030 = vmatprep.subr.bf16.mxu0 0
          %1031 = vmatpush1.bf16.msra.mxu0 0
          %1032 = vmatprep.subr.bf16.mxu0 0
          %1033 = vmatpush1.bf16.msra.mxu0 0
          %1034 = vmatprep.subr.bf16.mxu0 0
          %1035 = vmatpush1.bf16.msra.mxu0 0
          %1036 = vmatprep.subr.bf16.mxu0 0
          %1037 = vmatpush1.bf16.msra.mxu0 0
          %1038 = vmatprep.subr.bf16.mxu0 0
          %1039 = vmatpush1.bf16.msra.mxu0 0
          %1040 = vmatprep.subr.bf16.mxu0 0
          %1041 = vmatpush1.bf16.msra.mxu0 0
          %1042 = vmatprep.subr.bf16.mxu0 0
          %1043 = vmatpush1.bf16.msra.mxu0 0
          %1044 = vmatprep.mubr.bf16.mxu0 0
          %1045 = vmatmul.mubr.bf16.gmra.mrb[0].mxu0 %v1007
          %v1046 = vpop.f32.mrb[0].mxu0
          %v1047 = vadd.f32 %v961, %v1046
          %v1048 = vpop.f32.mrb[0].mxu0
          %v1049 = vadd.f32 %v962, %v1048
          %v1050 = vpop.f32.mrb[0].mxu0
          %v1051 = vadd.f32 %v963, %v1050
          %v1052 = vpop.f32.mrb[0].mxu0
          %v1053 = vadd.f32 %v964, %v1052
          %1054 = vmatprep.mubr.bf16.mxu0 0
          %1055 = vmatmul.mubr.bf16.gmra.mrb[0].mxu0 %v1010
          %v1056 = vpop.f32.mrb[0].mxu0
          %v1057 = vadd.f32 %v965, %v1056
          %v1058 = vpop.f32.mrb[0].mxu0
          %v1059 = vadd.f32 %v966, %v1058
          %v1060 = vpop.f32.mrb[0].mxu0
          %v1061 = vpop.f32.mrb[0].mxu0
          %1062 = vdwg.mxu0
          %1063 = vst [vmem:[#allocation2] sm:$0xff] %v1047
          %1064 = vst [vmem:[#allocation2 + $0x8] sm:$0xff] %v1049
          %1065 = vst [vmem:[#allocation2 + $0x10] sm:$0xff] %v1051
          %1066 = vst [vmem:[#allocation2 + $0x18] sm:$0xff] %v1053
          %1067 = vst [vmem:[#allocation2 + $0x20] sm:$0x1] %v1057
          %1068 = vst [vmem:[#allocation2 + $0x28] sm:$0x1] %v1059
        $region136: #{tpu_custom_call.1} parent=87 // pred_fallthru
          _
        %v1069 = vld [vmem:[#allocation2] sm:$0xff]
        %v1070 = vld [vmem:[#allocation2 + $0x8] sm:$0xff]
        %v1071 = vld [vmem:[#allocation2 + $0x10] sm:$0xff]
        %v1072 = vld [vmem:[#allocation2 + $0x18] sm:$0xff]
        %v1073 = vld [vmem:[#allocation2 + $0x20] sm:$0x1]
        %v1074 = vld [vmem:[#allocation2 + $0x28] sm:$0x1]
        %v1075 = vld [vmem:[%s773] sm:$0x3]
        %v1076 = vld [vmem:[%s782] sm:$0x3]
        %v1077 = vld [vmem:[%s791] sm:$0xff]
        %v1078 = vld [vmem:[%s791 + $0x8] sm:$0xff]
        %v1079 = vld [vmem:[%s791 + $0x10] sm:$0xff]
        %v1080 = vld [vmem:[%s791 + $0x18] sm:$0xff]
        %v1081 = vld [vmem:[%s791 + $0x20] sm:$0xff]
        %v1082 = vld [vmem:[%s791 + $0x28] sm:$0xff]
        %v1083 = vld [vmem:[%s791 + $0x30] sm:$0xff]
        %v1084 = vld [vmem:[%s791 + $0x38] sm:$0xff]
        %v1085 = vld [vmem:[%s791 + $0x40] sm:$0xff]
        %v1086 = vld [vmem:[%s791 + $0x48] sm:$0xff]
        %v1087 = vld [vmem:[%s791 + $0x50] sm:$0xff]
        %v1088 = vld [vmem:[%s791 + $0x58] sm:$0xff]
        %v1089 = vld [vmem:[%s791 + $0x60] sm:$0xff]
        %v1090 = vld [vmem:[%s791 + $0x68] sm:$0xff]
        %v1091 = vld [vmem:[%s791 + $0x70] sm:$0xff]
        %v1092 = vld [vmem:[%s791 + $0x78] sm:$0xff]
        %v1093 = vld [vmem:[%s791 + $0x80] sm:$0xff]
        %v1094 = vld [vmem:[%s791 + $0x88] sm:$0xff]
        %v1095 = vld [vmem:[%s791 + $0x90] sm:$0xff]
        %v1096 = vld [vmem:[%s791 + $0x98] sm:$0xff]
        %v1097 = vld [vmem:[%s791 + $0xa0] sm:$0xff]
        %v1098 = vld [vmem:[%s791 + $0xa8] sm:$0xff]
        %v1099 = vld [vmem:[%s791 + $0xb0] sm:$0xff]
        %v1100 = vld [vmem:[%s791 + $0xb8] sm:$0xff]
        %v1101 = vld [vmem:[%s791 + $0xc0] sm:$0xff]
        %v1102 = vld [vmem:[%s791 + $0xc8] sm:$0xff]
        %v1103 = vld [vmem:[%s791 + $0xd0] sm:$0xff]
        %v1104 = vld [vmem:[%s791 + $0xd8] sm:$0xff]
        %v1105 = vld [vmem:[%s791 + $0xe0] sm:$0xff]
        %v1106 = vld [vmem:[%s791 + $0xe8] sm:$0xff]
        %v1107 = vld [vmem:[%s791 + $0xf0] sm:$0xff]
        %v1108 = vld [vmem:[%s791 + $0xf8] sm:$0xff]
        %v1109 = vld [vmem:[%s791 + $0x100] sm:$0xff]
        %v1110 = vld [vmem:[%s791 + $0x108] sm:$0xff]
        %v1111 = vld [vmem:[%s791 + $0x110] sm:$0xff]
        %v1112 = vld [vmem:[%s791 + $0x118] sm:$0xff]
        %v1113 = vld [vmem:[%s791 + $0x120] sm:$0xff]
        %v1114 = vld [vmem:[%s791 + $0x128] sm:$0xff]
        %v1115 = vld [vmem:[%s791 + $0x130] sm:$0xff]
        %v1116 = vld [vmem:[%s791 + $0x138] sm:$0xff]
        %v1117 = vld [vmem:[%s791 + $0x140] sm:$0xff]
        %v1118 = vld [vmem:[%s791 + $0x148] sm:$0xff]
        %v1119 = vld [vmem:[%s791 + $0x150] sm:$0xff]
        %v1120 = vld [vmem:[%s791 + $0x158] sm:$0xff]
        %v1121 = vld [vmem:[%s791 + $0x160] sm:$0xff]
        %v1122 = vld [vmem:[%s791 + $0x168] sm:$0xff]
        %v1123 = vld [vmem:[%s791 + $0x170] sm:$0xff]
        %v1124 = vld [vmem:[%s791 + $0x178] sm:$0xff]
        %v1125 = vld [vmem:[%s791 + $0x180] sm:$0xff]
        %v1126 = vld [vmem:[%s791 + $0x188] sm:$0xff]
        %v1127 = vld [vmem:[%s791 + $0x190] sm:$0xff]
        %v1128 = vld [vmem:[%s791 + $0x198] sm:$0xff]
        %v1129 = vld [vmem:[%s791 + $0x1a0] sm:$0xff]
        %v1130 = vld [vmem:[%s791 + $0x1a8] sm:$0xff]
        %v1131 = vld [vmem:[%s791 + $0x1b0] sm:$0xff]
        %v1132 = vld [vmem:[%s791 + $0x1b8] sm:$0xff]
        %v1133 = vld [vmem:[%s791 + $0x1c0] sm:$0xff]
        %v1134 = vld [vmem:[%s791 + $0x1c8] sm:$0xff]
        %v1135 = vld [vmem:[%s791 + $0x1d0] sm:$0xff]
        %v1136 = vld [vmem:[%s791 + $0x1d8] sm:$0xff]
        %v1137 = vld [vmem:[%s791 + $0x1e0] sm:$0xff]
        %v1138 = vld [vmem:[%s791 + $0x1e8] sm:$0xff]
        %v1139 = vld [vmem:[%s791 + $0x1f0] sm:$0xff]
        %v1140 = vld [vmem:[%s791 + $0x1f8] sm:$0xff]
        %v1141 = vld [vmem:[%s791 + $0x200] sm:$0xff]
        %v1142 = vld [vmem:[%s791 + $0x208] sm:$0xff]
        %v1143 = vld [vmem:[%s791 + $0x210] sm:$0xff]
        %v1144 = vld [vmem:[%s791 + $0x218] sm:$0xff]
        %v1145 = vld [vmem:[%s791 + $0x220] sm:$0xff]
        %v1146 = vld [vmem:[%s791 + $0x228] sm:$0xff]
        %v1147 = vld [vmem:[%s791 + $0x230] sm:$0xff]
        %v1148 = vld [vmem:[%s791 + $0x238] sm:$0xff]
        %v1149 = vld [vmem:[%s791 + $0x240] sm:$0xff]
        %v1150 = vld [vmem:[%s791 + $0x248] sm:$0xff]
        %v1151 = vld [vmem:[%s791 + $0x250] sm:$0xff]
        %v1152 = vld [vmem:[%s791 + $0x258] sm:$0xff]
        %v1153 = vld [vmem:[%s791 + $0x260] sm:$0xff]
        %v1154 = vld [vmem:[%s791 + $0x268] sm:$0xff]
        %v1155 = vld [vmem:[%s791 + $0x270] sm:$0xff]
        %v1156 = vld [vmem:[%s791 + $0x278] sm:$0xff]
        %v1157 = vld [vmem:[%s791 + $0x280] sm:$0xff]
        %v1158 = vld [vmem:[%s791 + $0x288] sm:$0xff]
        %v1159 = vld [vmem:[%s791 + $0x290] sm:$0xff]
        %v1160 = vld [vmem:[%s791 + $0x298] sm:$0xff]
        %v1161 = vld [vmem:[%s791 + $0x2a0] sm:$0xff]
        %v1162 = vld [vmem:[%s791 + $0x2a8] sm:$0xff]
        %v1163 = vld [vmem:[%s791 + $0x2b0] sm:$0xff]
        %v1164 = vld [vmem:[%s791 + $0x2b8] sm:$0xff]
        %v1165 = vld [vmem:[%s791 + $0x2c0] sm:$0xff]
        %v1166 = vld [vmem:[%s791 + $0x2c8] sm:$0xff]
        %v1167 = vld [vmem:[%s791 + $0x2d0] sm:$0xff]
        %v1168 = vld [vmem:[%s791 + $0x2d8] sm:$0xff]
        %v1169 = vld [vmem:[%s791 + $0x2e0] sm:$0xff]
        %v1170 = vld [vmem:[%s791 + $0x2e8] sm:$0xff]
        %v1171 = vld [vmem:[%s791 + $0x2f0] sm:$0xff]
        %v1172 = vld [vmem:[%s791 + $0x2f8] sm:$0xff]
        %v1173 = vld [vmem:[%s921] sm:$0x3f]
        %v1174 = vld [vmem:[%s800] sm:$0xff]
        %v1175 = vld [vmem:[%s800 + $0x8] sm:$0xff]
        %v1176 = vld [vmem:[%s800 + $0x10] sm:$0xff]
        %v1177 = vld [vmem:[%s800 + $0x18] sm:$0xff]
        %v1178 = vld [vmem:[%s800 + $0x20] sm:$0xff]
        %v1179 = vld [vmem:[%s800 + $0x28] sm:$0xff]
        %v1180 = vld [vmem:[%s800 + $0x30] sm:$0xff]
        %v1181 = vld [vmem:[%s800 + $0x38] sm:$0xff]
        %v1182 = vld [vmem:[%s800 + $0x40] sm:$0xff]
        %v1183 = vld [vmem:[%s800 + $0x48] sm:$0xff]
        %v1184 = vld [vmem:[%s800 + $0x50] sm:$0xff]
        %v1185 = vld [vmem:[%s800 + $0x58] sm:$0xff]
        %v1186 = vld [vmem:[%s800 + $0x60] sm:$0xff]
        %v1187 = vld [vmem:[%s800 + $0x68] sm:$0xff]
        %v1188 = vld [vmem:[%s800 + $0x70] sm:$0xff]
        %v1189 = vld [vmem:[%s800 + $0x78] sm:$0xff]
        %v1190 = vld [vmem:[%s800 + $0x80] sm:$0xff]
        %v1191 = vld [vmem:[%s800 + $0x88] sm:$0xff]
        %v1192 = vld [vmem:[%s800 + $0x90] sm:$0xff]
        %v1193 = vld [vmem:[%s800 + $0x98] sm:$0xff]
        %v1194 = vld [vmem:[%s800 + $0xa0] sm:$0xff]
        %v1195 = vld [vmem:[%s800 + $0xa8] sm:$0xff]
        %v1196 = vld [vmem:[%s800 + $0xb0] sm:$0xff]
        %v1197 = vld [vmem:[%s800 + $0xb8] sm:$0xff]
        %v1198 = vld [vmem:[%s800 + $0xc0] sm:$0xff]
        %v1199 = vld [vmem:[%s800 + $0xc8] sm:$0xff]
        %v1200 = vld [vmem:[%s800 + $0xd0] sm:$0xff]
        %v1201 = vld [vmem:[%s800 + $0xd8] sm:$0xff]
        %v1202 = vld [vmem:[%s800 + $0xe0] sm:$0xff]
        %v1203 = vld [vmem:[%s800 + $0xe8] sm:$0xff]
        %v1204 = vld [vmem:[%s800 + $0xf0] sm:$0xff]
        %v1205 = vld [vmem:[%s800 + $0xf8] sm:$0xff]
        %v1206 = vld [vmem:[%s925] sm:$0x3]
        %v1207 = vld [vmem:[%s929] sm:$0x3]
        %v1208 = vld [vmem:[%s933] sm:$0x3]
        %v1209 = vld [vmem:[%s809] sm:$0xff]
        %v1210 = vld [vmem:[%s809 + $0x8] sm:$0xff]
        %v1211 = vld [vmem:[%s809 + $0x10] sm:$0xff]
        %v1212 = vld [vmem:[%s809 + $0x18] sm:$0xff]
        %v1213 = vld [vmem:[%s809 + $0x20] sm:$0xff]
        %v1214 = vld [vmem:[%s809 + $0x28] sm:$0xff]
        %v1215 = vld [vmem:[%s809 + $0x30] sm:$0xff]
        %v1216 = vld [vmem:[%s809 + $0x38] sm:$0xff]
        %v1217 = vld [vmem:[%s809 + $0x40] sm:$0xff]
        %v1218 = vld [vmem:[%s809 + $0x48] sm:$0xff]
        %v1219 = vld [vmem:[%s809 + $0x50] sm:$0xff]
        %v1220 = vld [vmem:[%s809 + $0x58] sm:$0xff]
        %v1221 = vld [vmem:[%s809 + $0x60] sm:$0xff]
        %v1222 = vld [vmem:[%s809 + $0x68] sm:$0xff]
        %v1223 = vld [vmem:[%s809 + $0x70] sm:$0xff]
        %v1224 = vld [vmem:[%s809 + $0x78] sm:$0xff]
        %v1225 = vld [vmem:[%s809 + $0x80] sm:$0xff]
        %v1226 = vld [vmem:[%s809 + $0x88] sm:$0xff]
        %v1227 = vld [vmem:[%s809 + $0x90] sm:$0xff]
        %v1228 = vld [vmem:[%s809 + $0x98] sm:$0xff]
        %v1229 = vld [vmem:[%s809 + $0xa0] sm:$0xff]
        %v1230 = vld [vmem:[%s809 + $0xa8] sm:$0xff]
        %v1231 = vld [vmem:[%s809 + $0xb0] sm:$0xff]
        %v1232 = vld [vmem:[%s809 + $0xb8] sm:$0xff]
        %v1233 = vld [vmem:[%s809 + $0xc0] sm:$0xff]
        %v1234 = vld [vmem:[%s809 + $0xc8] sm:$0xff]
        %v1235 = vld [vmem:[%s809 + $0xd0] sm:$0xff]
        %v1236 = vld [vmem:[%s809 + $0xd8] sm:$0xff]
        %v1237 = vld [vmem:[%s809 + $0xe0] sm:$0xff]
        %v1238 = vld [vmem:[%s809 + $0xe8] sm:$0xff]
        %v1239 = vld [vmem:[%s809 + $0xf0] sm:$0xff]
        %v1240 = vld [vmem:[%s809 + $0xf8] sm:$0xff]
        %v1241 = vld [vmem:[%s809 + $0x100] sm:$0xff]
        %v1242 = vld [vmem:[%s809 + $0x108] sm:$0xff]
        %v1243 = vld [vmem:[%s809 + $0x110] sm:$0xff]
        %v1244 = vld [vmem:[%s809 + $0x118] sm:$0xff]
        %v1245 = vld [vmem:[%s809 + $0x120] sm:$0xff]
        %v1246 = vld [vmem:[%s809 + $0x128] sm:$0xff]
        %v1247 = vld [vmem:[%s809 + $0x130] sm:$0xff]
        %v1248 = vld [vmem:[%s809 + $0x138] sm:$0xff]
        %v1249 = vld [vmem:[%s809 + $0x140] sm:$0xff]
        %v1250 = vld [vmem:[%s809 + $0x148] sm:$0xff]
        %v1251 = vld [vmem:[%s809 + $0x150] sm:$0xff]
        %v1252 = vld [vmem:[%s809 + $0x158] sm:$0xff]
        %v1253 = vld [vmem:[%s809 + $0x160] sm:$0xff]
        %v1254 = vld [vmem:[%s809 + $0x168] sm:$0xff]
        %v1255 = vld [vmem:[%s809 + $0x170] sm:$0xff]
        %v1256 = vld [vmem:[%s809 + $0x178] sm:$0xff]
        %v1257 = vld [vmem:[%s809 + $0x180] sm:$0xff]
        %v1258 = vld [vmem:[%s809 + $0x188] sm:$0xff]
        %v1259 = vld [vmem:[%s809 + $0x190] sm:$0xff]
        %v1260 = vld [vmem:[%s809 + $0x198] sm:$0xff]
        %v1261 = vld [vmem:[%s809 + $0x1a0] sm:$0xff]
        %v1262 = vld [vmem:[%s809 + $0x1a8] sm:$0xff]
        %v1263 = vld [vmem:[%s809 + $0x1b0] sm:$0xff]
        %v1264 = vld [vmem:[%s809 + $0x1b8] sm:$0xff]
        %v1265 = vld [vmem:[%s809 + $0x1c0] sm:$0xff]
        %v1266 = vld [vmem:[%s809 + $0x1c8] sm:$0xff]
        %v1267 = vld [vmem:[%s809 + $0x1d0] sm:$0xff]
        %v1268 = vld [vmem:[%s809 + $0x1d8] sm:$0xff]
        %v1269 = vld [vmem:[%s809 + $0x1e0] sm:$0xff]
        %v1270 = vld [vmem:[%s809 + $0x1e8] sm:$0xff]
        %v1271 = vld [vmem:[%s809 + $0x1f0] sm:$0xff]
        %v1272 = vld [vmem:[%s809 + $0x1f8] sm:$0xff]
        %v1273 = vld [vmem:[%s937] sm:$0xf]
        %v1274 = vld [vmem:[%s818] sm:$0xff]
        %v1275 = vld [vmem:[%s818 + $0x8] sm:$0xff]
        %v1276 = vld [vmem:[%s818 + $0x10] sm:$0xff]
        %v1277 = vld [vmem:[%s818 + $0x18] sm:$0xff]
        %v1278 = vld [vmem:[%s818 + $0x20] sm:$0xff]
        %v1279 = vld [vmem:[%s818 + $0x28] sm:$0xff]
        %v1280 = vld [vmem:[%s818 + $0x30] sm:$0xff]
        %v1281 = vld [vmem:[%s818 + $0x38] sm:$0xff]
        %v1282 = vld [vmem:[%s818 + $0x40] sm:$0xff]
        %v1283 = vld [vmem:[%s818 + $0x48] sm:$0xff]
        %v1284 = vld [vmem:[%s818 + $0x50] sm:$0xff]
        %v1285 = vld [vmem:[%s818 + $0x58] sm:$0xff]
        %v1286 = vld [vmem:[%s818 + $0x60] sm:$0xff]
        %v1287 = vld [vmem:[%s818 + $0x68] sm:$0xff]
        %v1288 = vld [vmem:[%s818 + $0x70] sm:$0xff]
        %v1289 = vld [vmem:[%s818 + $0x78] sm:$0xff]
        %v1290 = vld [vmem:[%s818 + $0x80] sm:$0xff]
        %v1291 = vld [vmem:[%s818 + $0x88] sm:$0xff]
        %v1292 = vld [vmem:[%s818 + $0x90] sm:$0xff]
        %v1293 = vld [vmem:[%s818 + $0x98] sm:$0xff]
        %v1294 = vld [vmem:[%s818 + $0xa0] sm:$0xff]
        %v1295 = vld [vmem:[%s818 + $0xa8] sm:$0xff]
        %v1296 = vld [vmem:[%s818 + $0xb0] sm:$0xff]
        %v1297 = vld [vmem:[%s818 + $0xb8] sm:$0xff]
        %v1298 = vld [vmem:[%s818 + $0xc0] sm:$0xff]
        %v1299 = vld [vmem:[%s818 + $0xc8] sm:$0xff]
        %v1300 = vld [vmem:[%s818 + $0xd0] sm:$0xff]
        %v1301 = vld [vmem:[%s818 + $0xd8] sm:$0xff]
        %v1302 = vld [vmem:[%s818 + $0xe0] sm:$0xff]
        %v1303 = vld [vmem:[%s818 + $0xe8] sm:$0xff]
        %v1304 = vld [vmem:[%s818 + $0xf0] sm:$0xff]
        %v1305 = vld [vmem:[%s818 + $0xf8] sm:$0xff]
        %v1306 = vld [vmem:[%s818 + $0x100] sm:$0xff]
        %v1307 = vld [vmem:[%s818 + $0x108] sm:$0xff]
        %v1308 = vld [vmem:[%s818 + $0x110] sm:$0xff]
        %v1309 = vld [vmem:[%s818 + $0x118] sm:$0xff]
        %v1310 = vld [vmem:[%s818 + $0x120] sm:$0xff]
        %v1311 = vld [vmem:[%s818 + $0x128] sm:$0xff]
        %v1312 = vld [vmem:[%s818 + $0x130] sm:$0xff]
        %v1313 = vld [vmem:[%s818 + $0x138] sm:$0xff]
        %v1314 = vld [vmem:[%s818 + $0x140] sm:$0xff]
        %v1315 = vld [vmem:[%s818 + $0x148] sm:$0xff]
        %v1316 = vld [vmem:[%s818 + $0x150] sm:$0xff]
        %v1317 = vld [vmem:[%s818 + $0x158] sm:$0xff]
        %v1318 = vld [vmem:[%s818 + $0x160] sm:$0xff]
        %v1319 = vld [vmem:[%s818 + $0x168] sm:$0xff]
        %v1320 = vld [vmem:[%s818 + $0x170] sm:$0xff]
        %v1321 = vld [vmem:[%s818 + $0x178] sm:$0xff]
        %v1322 = vld [vmem:[%s818 + $0x180] sm:$0xff]
        %v1323 = vld [vmem:[%s818 + $0x188] sm:$0xff]
        %v1324 = vld [vmem:[%s818 + $0x190] sm:$0xff]
        %v1325 = vld [vmem:[%s818 + $0x198] sm:$0xff]
        %v1326 = vld [vmem:[%s818 + $0x1a0] sm:$0xff]
        %v1327 = vld [vmem:[%s818 + $0x1a8] sm:$0xff]
        %v1328 = vld [vmem:[%s818 + $0x1b0] sm:$0xff]
        %v1329 = vld [vmem:[%s818 + $0x1b8] sm:$0xff]
        %v1330 = vld [vmem:[%s818 + $0x1c0] sm:$0xff]
        %v1331 = vld [vmem:[%s818 + $0x1c8] sm:$0xff]
        %v1332 = vld [vmem:[%s818 + $0x1d0] sm:$0xff]
        %v1333 = vld [vmem:[%s818 + $0x1d8] sm:$0xff]
        %v1334 = vld [vmem:[%s818 + $0x1e0] sm:$0xff]
        %v1335 = vld [vmem:[%s818 + $0x1e8] sm:$0xff]
        %v1336 = vld [vmem:[%s818 + $0x1f0] sm:$0xff]
        %v1337 = vld [vmem:[%s818 + $0x1f8] sm:$0xff]
        %v1338 = vld [vmem:[%s941] sm:$0x3]
        %v1339 = vadd.f32 %v1069, %v1070
        %1340 = vadd.xlane.f32.xlu0 %v1339
        %v1341 = vpop.xlane.xlu0 %1340
        %v1342 = vadd.f32 %v1071, %v1072
        %1343 = vadd.xlane.f32.xlu0 %v1342
        %v1344 = vpop.xlane.xlu0 %1343
        %vm1345 = vcmask 1040384
        %v1346 = vsel %vm1345, %v1073, 0.0
        %v1347 = vsel %vm1345, %v1074, 0.0
        %v1348 = vadd.f32 %v1346, %v1347
        %1349 = vadd.xlane.f32.xlu0 %v1348
        %v1350 = vpop.xlane.xlu0 %1349
        %v1351 = vrcp.pop 256.0
        %v1352 = vmul.f32 %v1341, %v1351
        %v1353 = vmul.f32 %v1344, %v1351
        %v1354 = vmul.f32 %v1350, %v1351
        %v1355 = vsub.f32 %v1069, %v1352
        %v1356 = vsub.f32 %v1070, %v1352
        %v1357 = vsub.f32 %v1071, %v1353
        %v1358 = vsub.f32 %v1072, %v1353
        %v1359 = vsub.f32 %v1073, %v1354
        %v1360 = vsub.f32 %v1074, %v1354
        %v1361 = vmul.f32 %v1355, %v1355
        %v1362 = vmul.f32 %v1356, %v1356
        %v1363 = vmul.f32 %v1357, %v1357
        %v1364 = vmul.f32 %v1358, %v1358
        %v1365 = vmul.f32 %v1359, %v1359
        %v1366 = vmul.f32 %v1360, %v1360
        %v1367 = vadd.f32 %v1361, %v1362
        %1368 = vadd.xlane.f32.xlu0 %v1367
        %v1369 = vpop.xlane.xlu0 %1368
        %v1370 = vadd.f32 %v1363, %v1364
        %1371 = vadd.xlane.f32.xlu0 %v1370
        %v1372 = vpop.xlane.xlu0 %1371
        %v1373 = vsel %vm1345, %v1365, 0.0
        %v1374 = vsel %vm1345, %v1366, 0.0
        %v1375 = vadd.f32 %v1373, %v1374
        %1376 = vadd.xlane.f32.xlu0 %v1375
        %v1377 = vpop.xlane.xlu0 %1376
        %v1378 = vmul.f32 %v1369, %v1351
        %v1379 = vmul.f32 %v1372, %v1351
        %v1380 = vmul.f32 %v1377, %v1351
        %v1381 = vadd.f32 %v1378, 1e-05
        %v1382 = vadd.f32 %v1379, 1e-05
        %v1383 = vadd.f32 %v1380, 1e-05
        %v1384 = vrsqrt.pop %v1381
        %v1385 = vrsqrt.pop %v1382
        %v1386 = vrsqrt.pop %v1383
        %v1387 = vmul.f32 %v1355, %v1384
        %v1388 = vmul.f32 %v1356, %v1384
        %v1389 = vmul.f32 %v1357, %v1385
        %v1390 = vmul.f32 %v1358, %v1385
        %v1391 = vmul.f32 %v1359, %v1386
        %v1392 = vmul.f32 %v1360, %v1386
        %v1394 = vlaneseq
        %v1395 = vshrl.u32 %v1394, 7
        %v1396 = vsub.s32 0, %v1395
        %v1397 = vrot.slane %v1075, %v1396
        %v1398 = vlaneseq
        %v1399 = vshrl.u32 %v1398, 7
        %v1400 = vsub.s32 1, %v1399
        %v1401 = vrot.slane %v1075, %v1400
        %v1404 = vmul.f32 %v1387, %v1397
        %v1405 = vmul.f32 %v1388, %v1401
        %v1406 = vmul.f32 %v1389, %v1397
        %v1407 = vmul.f32 %v1390, %v1401
        %v1408 = vmul.f32 %v1391, %v1397
        %v1409 = vmul.f32 %v1392, %v1401
        %v1411 = vlaneseq
        %v1412 = vshrl.u32 %v1411, 7
        %v1413 = vsub.s32 0, %v1412
        %v1414 = vrot.slane %v1076, %v1413
        %v1415 = vlaneseq
        %v1416 = vshrl.u32 %v1415, 7
        %v1417 = vsub.s32 1, %v1416
        %v1418 = vrot.slane %v1076, %v1417
        %v1421 = vadd.f32 %v1404, %v1414
        %v1422 = vadd.f32 %v1405, %v1418
        %v1423 = vadd.f32 %v1406, %v1414
        %v1424 = vadd.f32 %v1407, %v1418
        %v1425 = vadd.f32 %v1408, %v1414
        %v1426 = vadd.f32 %v1409, %v1418
        %v1427 = vpack.c.bf16 %v1423, %v1421
        %v1428 = vpack.c.bf16 %v1424, %v1422
        %v1429 = vpack.c.bf16 %v1425, %v1425
        %v1430 = vpack.c.bf16 %v1426, %v1426
        %v1432 = vlaneseq
        %v1433 = vshrl.u32 %v1432, 7
        %v1434 = vsub.s32 0, %v1433
        %v1435 = vrot.slane %v1173, %v1434
        %v1436 = vlaneseq
        %v1437 = vshrl.u32 %v1436, 7
        %v1438 = vsub.s32 1, %v1437
        %v1439 = vrot.slane %v1173, %v1438
        %v1440 = vlaneseq
        %v1441 = vshrl.u32 %v1440, 7
        %v1442 = vsub.s32 2, %v1441
        %v1443 = vrot.slane %v1173, %v1442
        %v1444 = vlaneseq
        %v1445 = vshrl.u32 %v1444, 7
        %v1446 = vsub.s32 3, %v1445
        %v1447 = vrot.slane %v1173, %v1446
        %v1448 = vlaneseq
        %v1449 = vshrl.u32 %v1448, 7
        %v1450 = vsub.s32 4, %v1449
        %v1451 = vrot.slane %v1173, %v1450
        %v1452 = vlaneseq
        %v1453 = vshrl.u32 %v1452, 7
        %v1454 = vsub.s32 5, %v1453
        %v1455 = vrot.slane %v1173, %v1454
        %v1558 = vunpack.c.l.b16 %v1077
        %v1559 = vunpack.c.h.b16 %v1077
        %v1560 = vunpack.c.l.b16 %v1078
        %v1561 = vunpack.c.h.b16 %v1078
        %v1562 = vunpack.c.l.b16 %v1079
        %v1563 = vunpack.c.h.b16 %v1079
        %v1564 = vunpack.c.l.b16 %v1080
        %v1565 = vunpack.c.h.b16 %v1080
        %v1566 = vunpack.c.l.b16 %v1081
        %v1567 = vunpack.c.h.b16 %v1081
        %v1568 = vunpack.c.l.b16 %v1082
        %v1569 = vunpack.c.h.b16 %v1082
        %v1570 = vunpack.c.l.b16 %v1083
        %v1571 = vunpack.c.h.b16 %v1083
        %v1572 = vunpack.c.l.b16 %v1084
        %v1573 = vunpack.c.h.b16 %v1084
        %v1574 = vunpack.c.l.b16 %v1085
        %v1575 = vunpack.c.h.b16 %v1085
        %v1576 = vunpack.c.l.b16 %v1086
        %v1577 = vunpack.c.h.b16 %v1086
        %v1578 = vunpack.c.l.b16 %v1087
        %v1579 = vunpack.c.h.b16 %v1087
        %v1580 = vunpack.c.l.b16 %v1088
        %v1581 = vunpack.c.h.b16 %v1088
        %v1582 = vunpack.c.l.b16 %v1089
        %v1583 = vunpack.c.h.b16 %v1089
        %v1584 = vunpack.c.l.b16 %v1090
        %v1585 = vunpack.c.h.b16 %v1090
        %v1586 = vunpack.c.l.b16 %v1091
        %v1587 = vunpack.c.h.b16 %v1091
        %v1588 = vunpack.c.l.b16 %v1092
        %v1589 = vunpack.c.h.b16 %v1092
        %v1590 = vunpack.c.l.b16 %v1093
        %v1591 = vunpack.c.h.b16 %v1093
        %v1592 = vunpack.c.l.b16 %v1094
        %v1593 = vunpack.c.h.b16 %v1094
        %v1594 = vunpack.c.l.b16 %v1095
        %v1595 = vunpack.c.h.b16 %v1095
        %v1596 = vunpack.c.l.b16 %v1096
        %v1597 = vunpack.c.h.b16 %v1096
        %v1598 = vunpack.c.l.b16 %v1097
        %v1599 = vunpack.c.h.b16 %v1097
        %v1600 = vunpack.c.l.b16 %v1098
        %v1601 = vunpack.c.h.b16 %v1098
        %v1602 = vunpack.c.l.b16 %v1099
        %v1603 = vunpack.c.h.b16 %v1099
        %v1604 = vunpack.c.l.b16 %v1100
        %v1605 = vunpack.c.h.b16 %v1100
        %v1606 = vunpack.c.l.b16 %v1101
        %v1607 = vunpack.c.h.b16 %v1101
        %v1608 = vunpack.c.l.b16 %v1102
        %v1609 = vunpack.c.h.b16 %v1102
        %v1610 = vunpack.c.l.b16 %v1103
        %v1611 = vunpack.c.h.b16 %v1103
        %v1612 = vunpack.c.l.b16 %v1104
        %v1613 = vunpack.c.h.b16 %v1104
        %v1614 = vunpack.c.l.b16 %v1105
        %v1615 = vunpack.c.h.b16 %v1105
        %v1616 = vunpack.c.l.b16 %v1106
        %v1617 = vunpack.c.h.b16 %v1106
        %v1618 = vunpack.c.l.b16 %v1107
        %v1619 = vunpack.c.h.b16 %v1107
        %v1620 = vunpack.c.l.b16 %v1108
        %v1621 = vunpack.c.h.b16 %v1108
        %v1622 = vunpack.c.l.b16 %v1109
        %v1623 = vunpack.c.h.b16 %v1109
        %v1624 = vunpack.c.l.b16 %v1110
        %v1625 = vunpack.c.h.b16 %v1110
        %v1626 = vunpack.c.l.b16 %v1111
        %v1627 = vunpack.c.h.b16 %v1111
        %v1628 = vunpack.c.l.b16 %v1112
        %v1629 = vunpack.c.h.b16 %v1112
        %v1630 = vunpack.c.l.b16 %v1113
        %v1631 = vunpack.c.h.b16 %v1113
        %v1632 = vunpack.c.l.b16 %v1114
        %v1633 = vunpack.c.h.b16 %v1114
        %v1634 = vunpack.c.l.b16 %v1115
        %v1635 = vunpack.c.h.b16 %v1115
        %v1636 = vunpack.c.l.b16 %v1116
        %v1637 = vunpack.c.h.b16 %v1116
        %v1638 = vunpack.c.l.b16 %v1117
        %v1639 = vunpack.c.h.b16 %v1117
        %v1640 = vunpack.c.l.b16 %v1118
        %v1641 = vunpack.c.h.b16 %v1118
        %v1642 = vunpack.c.l.b16 %v1119
        %v1643 = vunpack.c.h.b16 %v1119
        %v1644 = vunpack.c.l.b16 %v1120
        %v1645 = vunpack.c.h.b16 %v1120
        %v1646 = vunpack.c.l.b16 %v1121
        %v1647 = vunpack.c.h.b16 %v1121
        %v1648 = vunpack.c.l.b16 %v1122
        %v1649 = vunpack.c.h.b16 %v1122
        %v1650 = vunpack.c.l.b16 %v1123
        %v1651 = vunpack.c.h.b16 %v1123
        %v1652 = vunpack.c.l.b16 %v1124
        %v1653 = vunpack.c.h.b16 %v1124
        %v1654 = vunpack.c.l.b16 %v1125
        %v1655 = vunpack.c.h.b16 %v1125
        %v1656 = vunpack.c.l.b16 %v1126
        %v1657 = vunpack.c.h.b16 %v1126
        %v1658 = vunpack.c.l.b16 %v1127
        %v1659 = vunpack.c.h.b16 %v1127
        %v1660 = vunpack.c.l.b16 %v1128
        %v1661 = vunpack.c.h.b16 %v1128
        %v1662 = vunpack.c.l.b16 %v1129
        %v1663 = vunpack.c.h.b16 %v1129
        %v1664 = vunpack.c.l.b16 %v1130
        %v1665 = vunpack.c.h.b16 %v1130
        %v1666 = vunpack.c.l.b16 %v1131
        %v1667 = vunpack.c.h.b16 %v1131
        %v1668 = vunpack.c.l.b16 %v1132
        %v1669 = vunpack.c.h.b16 %v1132
        %v1670 = vunpack.c.l.b16 %v1133
        %v1671 = vunpack.c.h.b16 %v1133
        %v1672 = vunpack.c.l.b16 %v1134
        %v1673 = vunpack.c.h.b16 %v1134
        %v1674 = vunpack.c.l.b16 %v1135
        %v1675 = vunpack.c.h.b16 %v1135
        %v1676 = vunpack.c.l.b16 %v1136
        %v1677 = vunpack.c.h.b16 %v1136
        %v1678 = vunpack.c.l.b16 %v1137
        %v1679 = vunpack.c.h.b16 %v1137
        %v1680 = vunpack.c.l.b16 %v1138
        %v1681 = vunpack.c.h.b16 %v1138
        %v1682 = vunpack.c.l.b16 %v1139
        %v1683 = vunpack.c.h.b16 %v1139
        %v1684 = vunpack.c.l.b16 %v1140
        %v1685 = vunpack.c.h.b16 %v1140
        %v1686 = vunpack.c.l.b16 %v1141
        %v1687 = vunpack.c.h.b16 %v1141
        %v1688 = vunpack.c.l.b16 %v1142
        %v1689 = vunpack.c.h.b16 %v1142
        %v1690 = vunpack.c.l.b16 %v1143
        %v1691 = vunpack.c.h.b16 %v1143
        %v1692 = vunpack.c.l.b16 %v1144
        %v1693 = vunpack.c.h.b16 %v1144
        %v1694 = vunpack.c.l.b16 %v1145
        %v1695 = vunpack.c.h.b16 %v1145
        %v1696 = vunpack.c.l.b16 %v1146
        %v1697 = vunpack.c.h.b16 %v1146
        %v1698 = vunpack.c.l.b16 %v1147
        %v1699 = vunpack.c.h.b16 %v1147
        %v1700 = vunpack.c.l.b16 %v1148
        %v1701 = vunpack.c.h.b16 %v1148
        %v1702 = vunpack.c.l.b16 %v1149
        %v1703 = vunpack.c.h.b16 %v1149
        %v1704 = vunpack.c.l.b16 %v1150
        %v1705 = vunpack.c.h.b16 %v1150
        %v1706 = vunpack.c.l.b16 %v1151
        %v1707 = vunpack.c.h.b16 %v1151
        %v1708 = vunpack.c.l.b16 %v1152
        %v1709 = vunpack.c.h.b16 %v1152
        %v1710 = vunpack.c.l.b16 %v1153
        %v1711 = vunpack.c.h.b16 %v1153
        %v1712 = vunpack.c.l.b16 %v1154
        %v1713 = vunpack.c.h.b16 %v1154
        %v1714 = vunpack.c.l.b16 %v1155
        %v1715 = vunpack.c.h.b16 %v1155
        %v1716 = vunpack.c.l.b16 %v1156
        %v1717 = vunpack.c.h.b16 %v1156
        %v1718 = vunpack.c.l.b16 %v1157
        %v1719 = vunpack.c.h.b16 %v1157
        %v1720 = vunpack.c.l.b16 %v1158
        %v1721 = vunpack.c.h.b16 %v1158
        %v1722 = vunpack.c.l.b16 %v1159
        %v1723 = vunpack.c.h.b16 %v1159
        %v1724 = vunpack.c.l.b16 %v1160
        %v1725 = vunpack.c.h.b16 %v1160
        %v1726 = vunpack.c.l.b16 %v1161
        %v1727 = vunpack.c.h.b16 %v1161
        %v1728 = vunpack.c.l.b16 %v1162
        %v1729 = vunpack.c.h.b16 %v1162
        %v1730 = vunpack.c.l.b16 %v1163
        %v1731 = vunpack.c.h.b16 %v1163
        %v1732 = vunpack.c.l.b16 %v1164
        %v1733 = vunpack.c.h.b16 %v1164
        %v1734 = vunpack.c.l.b16 %v1165
        %v1735 = vunpack.c.h.b16 %v1165
        %v1736 = vunpack.c.l.b16 %v1166
        %v1737 = vunpack.c.h.b16 %v1166
        %v1738 = vunpack.c.l.b16 %v1167
        %v1739 = vunpack.c.h.b16 %v1167
        %v1740 = vunpack.c.l.b16 %v1168
        %v1741 = vunpack.c.h.b16 %v1168
        %v1742 = vunpack.c.l.b16 %v1169
        %v1743 = vunpack.c.h.b16 %v1169
        %v1744 = vunpack.c.l.b16 %v1170
        %v1745 = vunpack.c.h.b16 %v1170
        %v1746 = vunpack.c.l.b16 %v1171
        %v1747 = vunpack.c.h.b16 %v1171
        %v1748 = vunpack.c.l.b16 %v1172
        %v1749 = vunpack.c.h.b16 %v1172
        %v1750 = vpack.c.b16 %v1564, %v1558
        %v1751 = vpack.c.b16 %v1565, %v1559
        %v1752 = vpack.c.b16 %v1566, %v1560
        %v1753 = vpack.c.b16 %v1567, %v1561
        %v1754 = vpack.c.b16 %v1568, %v1562
        %v1755 = vpack.c.b16 %v1569, %v1563
        %v1756 = vpack.c.b16 %v1576, %v1570
        %v1757 = vpack.c.b16 %v1577, %v1571
        %v1758 = vpack.c.b16 %v1578, %v1572
        %v1759 = vpack.c.b16 %v1579, %v1573
        %v1760 = vpack.c.b16 %v1580, %v1574
        %v1761 = vpack.c.b16 %v1581, %v1575
        %v1762 = vpack.c.b16 %v1588, %v1582
        %v1763 = vpack.c.b16 %v1589, %v1583
        %v1764 = vpack.c.b16 %v1590, %v1584
        %v1765 = vpack.c.b16 %v1591, %v1585
        %v1766 = vpack.c.b16 %v1592, %v1586
        %v1767 = vpack.c.b16 %v1593, %v1587
        %v1768 = vpack.c.b16 %v1600, %v1594
        %v1769 = vpack.c.b16 %v1601, %v1595
        %v1770 = vpack.c.b16 %v1602, %v1596
        %v1771 = vpack.c.b16 %v1603, %v1597
        %v1772 = vpack.c.b16 %v1604, %v1598
        %v1773 = vpack.c.b16 %v1605, %v1599
        %v1774 = vpack.c.b16 %v1612, %v1606
        %v1775 = vpack.c.b16 %v1613, %v1607
        %v1776 = vpack.c.b16 %v1614, %v1608
        %v1777 = vpack.c.b16 %v1615, %v1609
        %v1778 = vpack.c.b16 %v1616, %v1610
        %v1779 = vpack.c.b16 %v1617, %v1611
        %v1780 = vpack.c.b16 %v1624, %v1618
        %v1781 = vpack.c.b16 %v1625, %v1619
        %v1782 = vpack.c.b16 %v1626, %v1620
        %v1783 = vpack.c.b16 %v1627, %v1621
        %v1784 = vpack.c.b16 %v1628, %v1622
        %v1785 = vpack.c.b16 %v1629, %v1623
        %v1786 = vpack.c.b16 %v1636, %v1630
        %v1787 = vpack.c.b16 %v1637, %v1631
        %v1788 = vpack.c.b16 %v1638, %v1632
        %v1789 = vpack.c.b16 %v1639, %v1633
        %v1790 = vpack.c.b16 %v1640, %v1634
        %v1791 = vpack.c.b16 %v1641, %v1635
        %v1792 = vpack.c.b16 %v1648, %v1642
        %v1793 = vpack.c.b16 %v1649, %v1643
        %v1794 = vpack.c.b16 %v1650, %v1644
        %v1795 = vpack.c.b16 %v1651, %v1645
        %v1796 = vpack.c.b16 %v1652, %v1646
        %v1797 = vpack.c.b16 %v1653, %v1647
        %v1798 = vpack.c.b16 %v1660, %v1654
        %v1799 = vpack.c.b16 %v1661, %v1655
        %v1800 = vpack.c.b16 %v1662, %v1656
        %v1801 = vpack.c.b16 %v1663, %v1657
        %v1802 = vpack.c.b16 %v1664, %v1658
        %v1803 = vpack.c.b16 %v1665, %v1659
        %v1804 = vpack.c.b16 %v1672, %v1666
        %v1805 = vpack.c.b16 %v1673, %v1667
        %v1806 = vpack.c.b16 %v1674, %v1668
        %v1807 = vpack.c.b16 %v1675, %v1669
        %v1808 = vpack.c.b16 %v1676, %v1670
        %v1809 = vpack.c.b16 %v1677, %v1671
        %v1810 = vpack.c.b16 %v1684, %v1678
        %v1811 = vpack.c.b16 %v1685, %v1679
        %v1812 = vpack.c.b16 %v1686, %v1680
        %v1813 = vpack.c.b16 %v1687, %v1681
        %v1814 = vpack.c.b16 %v1688, %v1682
        %v1815 = vpack.c.b16 %v1689, %v1683
        %v1816 = vpack.c.b16 %v1696, %v1690
        %v1817 = vpack.c.b16 %v1697, %v1691
        %v1818 = vpack.c.b16 %v1698, %v1692
        %v1819 = vpack.c.b16 %v1699, %v1693
        %v1820 = vpack.c.b16 %v1700, %v1694
        %v1821 = vpack.c.b16 %v1701, %v1695
        %v1822 = vpack.c.b16 %v1708, %v1702
        %v1823 = vpack.c.b16 %v1709, %v1703
        %v1824 = vpack.c.b16 %v1710, %v1704
        %v1825 = vpack.c.b16 %v1711, %v1705
        %v1826 = vpack.c.b16 %v1712, %v1706
        %v1827 = vpack.c.b16 %v1713, %v1707
        %v1828 = vpack.c.b16 %v1720, %v1714
        %v1829 = vpack.c.b16 %v1721, %v1715
        %v1830 = vpack.c.b16 %v1722, %v1716
        %v1831 = vpack.c.b16 %v1723, %v1717
        %v1832 = vpack.c.b16 %v1724, %v1718
        %v1833 = vpack.c.b16 %v1725, %v1719
        %v1834 = vpack.c.b16 %v1732, %v1726
        %v1835 = vpack.c.b16 %v1733, %v1727
        %v1836 = vpack.c.b16 %v1734, %v1728
        %v1837 = vpack.c.b16 %v1735, %v1729
        %v1838 = vpack.c.b16 %v1736, %v1730
        %v1839 = vpack.c.b16 %v1737, %v1731
        %v1840 = vpack.c.b16 %v1744, %v1738
        %v1841 = vpack.c.b16 %v1745, %v1739
        %v1842 = vpack.c.b16 %v1746, %v1740
        %v1843 = vpack.c.b16 %v1747, %v1741
        %v1844 = vpack.c.b16 %v1748, %v1742
        %v1845 = vpack.c.b16 %v1749, %v1743
        %1942 = vmatprep.subr.bf16.mxu0 %v1751
        %1943 = vmatpush1.bf16.msra.mxu0 %v1750
        %1944 = vmatprep.subr.bf16.mxu0 %v1757
        %1945 = vmatpush1.bf16.msra.mxu0 %v1756
        %1946 = vmatprep.subr.bf16.mxu0 %v1763
        %1947 = vmatpush1.bf16.msra.mxu0 %v1762
        %1948 = vmatprep.subr.bf16.mxu0 %v1769
        %1949 = vmatpush1.bf16.msra.mxu0 %v1768
        %1950 = vmatprep.subr.bf16.mxu0 %v1775
        %1951 = vmatpush1.bf16.msra.mxu0 %v1774
        %1952 = vmatprep.subr.bf16.mxu0 %v1781
        %1953 = vmatpush1.bf16.msra.mxu0 %v1780
        %1954 = vmatprep.subr.bf16.mxu0 %v1787
        %1955 = vmatpush1.bf16.msra.mxu0 %v1786
        %1956 = vmatprep.subr.bf16.mxu0 %v1793
        %1957 = vmatpush1.bf16.msra.mxu0 %v1792
        %1958 = vmatprep.subr.bf16.mxu0 %v1799
        %1959 = vmatpush1.bf16.msra.mxu0 %v1798
        %1960 = vmatprep.subr.bf16.mxu0 %v1805
        %1961 = vmatpush1.bf16.msra.mxu0 %v1804
        %1962 = vmatprep.subr.bf16.mxu0 %v1811
        %1963 = vmatpush1.bf16.msra.mxu0 %v1810
        %1964 = vmatprep.subr.bf16.mxu0 %v1817
        %1965 = vmatpush1.bf16.msra.mxu0 %v1816
        %1966 = vmatprep.subr.bf16.mxu0 %v1823
        %1967 = vmatpush1.bf16.msra.mxu0 %v1822
        %1968 = vmatprep.subr.bf16.mxu0 %v1829
        %1969 = vmatpush1.bf16.msra.mxu0 %v1828
        %1970 = vmatprep.subr.bf16.mxu0 %v1835
        %1971 = vmatpush1.bf16.msra.mxu0 %v1834
        %1972 = vmatprep.subr.bf16.mxu0 %v1841
        %1973 = vmatpush1.bf16.msra.mxu0 %v1840
        %1974 = vmatprep.mubr.bf16.mxu0 %v1428
        %1975 = vmatmul.mubr.bf16.gmra.mrb[0].mxu0 %v1427
        %v1976 = vpop.f32.mrb[0].mxu0
        %v1977 = vadd.f32 %v1435, %v1976
        %v1978 = vpop.f32.mrb[0].mxu0
        %v1979 = vadd.f32 %v1439, %v1978
        %v1980 = vpop.f32.mrb[0].mxu0
        %v1981 = vadd.f32 %v1435, %v1980
        %v1982 = vpop.f32.mrb[0].mxu0
        %v1983 = vadd.f32 %v1439, %v1982
        %1984 = vmatprep.mubr.bf16.mxu0 %v1430
        %1985 = vmatmul.mubr.bf16.gmra.mrb[0].mxu0 %v1429
        %v1986 = vpop.f32.mrb[0].mxu0
        %v1987 = vadd.f32 %v1435, %v1986
        %v1988 = vpop.f32.mrb[0].mxu0
        %v1989 = vadd.f32 %v1439, %v1988
        %v1990 = vpop.f32.mrb[0].mxu0
        %v1991 = vpop.f32.mrb[0].mxu0
        %1992 = vdwg.mxu0
        %1993 = vmatprep.subr.bf16.mxu0 %v1753
        %1994 = vmatpush1.bf16.msra.mxu0 %v1752
        %1995 = vmatprep.subr.bf16.mxu0 %v1759
        %1996 = vmatpush1.bf16.msra.mxu0 %v1758
        %1997 = vmatprep.subr.bf16.mxu0 %v1765
        %1998 = vmatpush1.bf16.msra.mxu0 %v1764
        %1999 = vmatprep.subr.bf16.mxu0 %v1771
        %2000 = vmatpush1.bf16.msra.mxu0 %v1770
        %2001 = vmatprep.subr.bf16.mxu0 %v1777
        %2002 = vmatpush1.bf16.msra.mxu0 %v1776
        %2003 = vmatprep.subr.bf16.mxu0 %v1783
        %2004 = vmatpush1.bf16.msra.mxu0 %v1782
        %2005 = vmatprep.subr.bf16.mxu0 %v1789
        %2006 = vmatpush1.bf16.msra.mxu0 %v1788
        %2007 = vmatprep.subr.bf16.mxu0 %v1795
        %2008 = vmatpush1.bf16.msra.mxu0 %v1794
        %2009 = vmatprep.subr.bf16.mxu0 %v1801
        %2010 = vmatpush1.bf16.msra.mxu0 %v1800
        %2011 = vmatprep.subr.bf16.mxu0 %v1807
        %2012 = vmatpush1.bf16.msra.mxu0 %v1806
        %2013 = vmatprep.subr.bf16.mxu0 %v1813
        %2014 = vmatpush1.bf16.msra.mxu0 %v1812
        %2015 = vmatprep.subr.bf16.mxu0 %v1819
        %2016 = vmatpush1.bf16.msra.mxu0 %v1818
        %2017 = vmatprep.subr.bf16.mxu0 %v1825
        %2018 = vmatpush1.bf16.msra.mxu0 %v1824
        %2019 = vmatprep.subr.bf16.mxu0 %v1831
        %2020 = vmatpush1.bf16.msra.mxu0 %v1830
        %2021 = vmatprep.subr.bf16.mxu0 %v1837
        %2022 = vmatpush1.bf16.msra.mxu0 %v1836
        %2023 = vmatprep.subr.bf16.mxu0 %v1843
        %2024 = vmatpush1.bf16.msra.mxu0 %v1842
        %2025 = vmatprep.mubr.bf16.mxu0 %v1428
        %2026 = vmatmul.mubr.bf16.gmra.mrb[0].mxu0 %v1427
        %v2027 = vpop.f32.mrb[0].mxu0
        %v2028 = vadd.f32 %v1443, %v2027
        %v2029 = vpop.f32.mrb[0].mxu0
        %v2030 = vadd.f32 %v1447, %v2029
        %v2031 = vpop.f32.mrb[0].mxu0
        %v2032 = vadd.f32 %v1443, %v2031
        %v2033 = vpop.f32.mrb[0].mxu0
        %v2034 = vadd.f32 %v1447, %v2033
        %2035 = vmatprep.mubr.bf16.mxu0 %v1430
        %2036 = vmatmul.mubr.bf16.gmra.mrb[0].mxu0 %v1429
        %v2037 = vpop.f32.mrb[0].mxu0
        %v2038 = vadd.f32 %v1443, %v2037
        %v2039 = vpop.f32.mrb[0].mxu0
        %v2040 = vadd.f32 %v1447, %v2039
        %v2041 = vpop.f32.mrb[0].mxu0
        %v2042 = vpop.f32.mrb[0].mxu0
        %2043 = vdwg.mxu0
        %2044 = vmatprep.subr.bf16.mxu0 %v1755
        %2045 = vmatpush1.bf16.msra.mxu0 %v1754
        %2046 = vmatprep.subr.bf16.mxu0 %v1761
        %2047 = vmatpush1.bf16.msra.mxu0 %v1760
        %2048 = vmatprep.subr.bf16.mxu0 %v1767
        %2049 = vmatpush1.bf16.msra.mxu0 %v1766
        %2050 = vmatprep.subr.bf16.mxu0 %v1773
        %2051 = vmatpush1.bf16.msra.mxu0 %v1772
        %2052 = vmatprep.subr.bf16.mxu0 %v1779
        %2053 = vmatpush1.bf16.msra.mxu0 %v1778
        %2054 = vmatprep.subr.bf16.mxu0 %v1785
        %2055 = vmatpush1.bf16.msra.mxu0 %v1784
        %2056 = vmatprep.subr.bf16.mxu0 %v1791
        %2057 = vmatpush1.bf16.msra.mxu0 %v1790
        %2058 = vmatprep.subr.bf16.mxu0 %v1797
        %2059 = vmatpush1.bf16.msra.mxu0 %v1796
        %2060 = vmatprep.subr.bf16.mxu0 %v1803
        %2061 = vmatpush1.bf16.msra.mxu0 %v1802
        %2062 = vmatprep.subr.bf16.mxu0 %v1809
        %2063 = vmatpush1.bf16.msra.mxu0 %v1808
        %2064 = vmatprep.subr.bf16.mxu0 %v1815
        %2065 = vmatpush1.bf16.msra.mxu0 %v1814
        %2066 = vmatprep.subr.bf16.mxu0 %v1821
        %2067 = vmatpush1.bf16.msra.mxu0 %v1820
        %2068 = vmatprep.subr.bf16.mxu0 %v1827
        %2069 = vmatpush1.bf16.msra.mxu0 %v1826
        %2070 = vmatprep.subr.bf16.mxu0 %v1833
        %2071 = vmatpush1.bf16.msra.mxu0 %v1832
        %2072 = vmatprep.subr.bf16.mxu0 %v1839
        %2073 = vmatpush1.bf16.msra.mxu0 %v1838
        %2074 = vmatprep.subr.bf16.mxu0 %v1845
        %2075 = vmatpush1.bf16.msra.mxu0 %v1844
        %2076 = vmatprep.mubr.bf16.mxu0 %v1428
        %2077 = vmatmul.mubr.bf16.gmra.mrb[0].mxu0 %v1427
        %v2078 = vpop.f32.mrb[0].mxu0
        %v2079 = vadd.f32 %v1451, %v2078
        %v2080 = vpop.f32.mrb[0].mxu0
        %v2081 = vadd.f32 %v1455, %v2080
        %v2082 = vpop.f32.mrb[0].mxu0
        %v2083 = vadd.f32 %v1451, %v2082
        %v2084 = vpop.f32.mrb[0].mxu0
        %v2085 = vadd.f32 %v1455, %v2084
        %2086 = vmatprep.mubr.bf16.mxu0 %v1430
        %2087 = vmatmul.mubr.bf16.gmra.mrb[0].mxu0 %v1429
        %v2088 = vpop.f32.mrb[0].mxu0
        %v2089 = vadd.f32 %v1451, %v2088
        %v2090 = vpop.f32.mrb[0].mxu0
        %v2091 = vadd.f32 %v1455, %v2090
        %v2092 = vpop.f32.mrb[0].mxu0
        %v2093 = vpop.f32.mrb[0].mxu0
        %2094 = vdwg.mxu0
        %v2095 = vpack.c.bf16 %v1981, %v1977
        %v2096 = vpack.c.bf16 %v1987, %v1987
        %v2097 = vpack.c.bf16 %v2032, %v2028
        %v2098 = vpack.c.bf16 %v2038, %v2038
        %v2099 = vpack.c.bf16 %v2083, %v2079
        %v2100 = vpack.c.bf16 %v2089, %v2089
        %2101 = vmatprep.subr.bf16.mxu0 0
        %2102 = vmatpush1.bf16.xpose.msra.mxu0 %v2097
        %2103 = vmatprep.subr.bf16.mxu0 0
        %2104 = vmatpush1.bf16.xpose.msra.mxu0 %v2098
        %2105 = vmatprep.subr.bf16.mxu0 0
        %2106 = vmatpush1.bf16.xpose.msra.mxu0 0
        %2107 = vmatprep.subr.bf16.mxu0 0
        %2108 = vmatpush1.bf16.xpose.msra.mxu0 0
        %2109 = vmatprep.subr.bf16.mxu0 0
        %2110 = vmatpush1.bf16.xpose.msra.mxu0 0
        %2111 = vmatprep.subr.bf16.mxu0 0
        %2112 = vmatpush1.bf16.xpose.msra.mxu0 0
        %2113 = vmatprep.subr.bf16.mxu0 0
        %2114 = vmatpush1.bf16.xpose.msra.mxu0 0
        %2115 = vmatprep.subr.bf16.mxu0 0
        %2116 = vmatpush1.bf16.xpose.msra.mxu0 0
        %2117 = vmatprep.subr.bf16.mxu0 0
        %2118 = vmatpush1.bf16.xpose.msra.mxu0 0
        %2119 = vmatprep.subr.bf16.mxu0 0
        %2120 = vmatpush1.bf16.xpose.msra.mxu0 0
        %2121 = vmatprep.subr.bf16.mxu0 0
        %2122 = vmatpush1.bf16.xpose.msra.mxu0 0
        %2123 = vmatprep.subr.bf16.mxu0 0
        %2124 = vmatpush1.bf16.xpose.msra.mxu0 0
        %2125 = vmatprep.subr.bf16.mxu0 0
        %2126 = vmatpush1.bf16.xpose.msra.mxu0 0
        %2127 = vmatprep.subr.bf16.mxu0 0
        %2128 = vmatpush1.bf16.xpose.msra.mxu0 0
        %2129 = vmatprep.subr.bf16.mxu0 0
        %2130 = vmatpush1.bf16.xpose.msra.mxu0 0
        %2131 = vmatprep.subr.bf16.mxu0 0
        %2132 = vmatpush1.bf16.xpose.msra.mxu0 0
        %2133 = vmatprep.mubr.bf16.mxu0 0
        %2134 = vmatmul.mubr.bf16.gmra.mrb[0].mxu0 %v2095
        %v2135 = vpop.f32.mrb[0].mxu0
        %v2136 = vadd.f32 0.0, %v2135
        %v2137 = vpop.f32.mrb[0].mxu0
        %v2138 = vpop.f32.mrb[0].mxu0
        %v2139 = vadd.f32 0.0, %v2138
        %v2140 = vpop.f32.mrb[0].mxu0
        %2141 = vmatprep.mubr.bf16.mxu0 0
        %2142 = vmatmul.mubr.bf16.gmra.mrb[0].mxu0 %v2096
        %v2143 = vpop.f32.mrb[0].mxu0
        %v2144 = vadd.f32 0.0, %v2143
        %v2145 = vpop.f32.mrb[0].mxu0
        %v2146 = vpop.f32.mrb[0].mxu0
        %v2147 = vpop.f32.mrb[0].mxu0
        %2148 = vdwg.mxu0
        %vm2149 = vcmask 138240
        %v2150 = vsel %vm2149, %v2136, -inf
        %2151 = vmax.xlane.f32.xlu0 %v2150
        %v2152 = vpop.xlane.xlu0 %2151
        %v2153 = vsel %vm2149, %v2139, -inf
        %2154 = vmax.xlane.f32.xlu0 %v2153
        %v2155 = vpop.xlane.xlu0 %2154
        %vm2156 = vcmask 131072
        %v2157 = vsel %vm2156, %v2144, -inf
        %2158 = vmax.xlane.f32.xlu0 %v2157
        %v2159 = vpop.xlane.xlu0 %2158
        %v2160 = vsub.f32 %v2136, %v2152
        %v2161 = vsub.f32 %v2139, %v2155
        %v2162 = vsub.f32 %v2144, %v2159
        %v2163 = vmul.f32 %v2160, 1.442695
        %v2164 = vpow.pop %v2163
        %v2165 = vmul.f32 %v2161, 1.442695
        %v2166 = vpow.pop %v2165
        %v2167 = vmul.f32 %v2162, 1.442695
        %v2168 = vpow.pop %v2167
        %v2169 = vsel %vm2149, %v2164, 0.0
        %2170 = vadd.xlane.f32.xlu0 %v2169
        %v2171 = vpop.xlane.xlu0 %2170
        %v2172 = vsel %vm2149, %v2166, 0.0
        %2173 = vadd.xlane.f32.xlu0 %v2172
        %v2174 = vpop.xlane.xlu0 %2173
        %v2175 = vsel %vm2156, %v2168, 0.0
        %2176 = vadd.xlane.f32.xlu0 %v2175
        %v2177 = vpop.xlane.xlu0 %2176
        %v2178 = vrcp.pop %v2171
        %v2179 = vrcp.pop %v2174
        %v2180 = vrcp.pop %v2177
        %v2181 = vmul.f32 %v2164, %v2178
        %v2182 = vmul.f32 %v2166, %v2179
        %v2183 = vmul.f32 %v2168, %v2180
        %v2184 = vpack.c.bf16 %v2182, %v2181
        %v2185 = vpack.c.bf16 %v2183, %v2183
        %v2187 = vsel %vm2149, %v2184, 0
        %v2190 = vsel %vm2149, %v2185, 0
        %v2192 = vsel 0, 4294967295, 65535
        %v2193 = vsel %vm1345, %v2192, 0
        %v2195 = vand.u32 %v2100, %v2193
        %2197 = vmatprep.subr.bf16.mxu0 0
        %2198 = vmatpush1.bf16.msra.mxu0 %v2099
        %2199 = vmatprep.subr.bf16.mxu0 0
        %2200 = vmatpush1.bf16.msra.mxu0 %v2195
        %2201 = vmatprep.subr.bf16.mxu0 0
        %2202 = vmatpush1.bf16.msra.mxu0 0
        %2203 = vmatprep.subr.bf16.mxu0 0
        %2204 = vmatpush1.bf16.msra.mxu0 0
        %2205 = vmatprep.subr.bf16.mxu0 0
        %2206 = vmatpush1.bf16.msra.mxu0 0
        %2207 = vmatprep.subr.bf16.mxu0 0
        %2208 = vmatpush1.bf16.msra.mxu0 0
        %2209 = vmatprep.subr.bf16.mxu0 0
        %2210 = vmatpush1.bf16.msra.mxu0 0
        %2211 = vmatprep.subr.bf16.mxu0 0
        %2212 = vmatpush1.bf16.msra.mxu0 0
        %2213 = vmatprep.subr.bf16.mxu0 0
        %2214 = vmatpush1.bf16.msra.mxu0 0
        %2215 = vmatprep.subr.bf16.mxu0 0
        %2216 = vmatpush1.bf16.msra.mxu0 0
        %2217 = vmatprep.subr.bf16.mxu0 0
        %2218 = vmatpush1.bf16.msra.mxu0 0
        %2219 = vmatprep.subr.bf16.mxu0 0
        %2220 = vmatpush1.bf16.msra.mxu0 0
        %2221 = vmatprep.subr.bf16.mxu0 0
        %2222 = vmatpush1.bf16.msra.mxu0 0
        %2223 = vmatprep.subr.bf16.mxu0 0
        %2224 = vmatpush1.bf16.msra.mxu0 0
        %2225 = vmatprep.subr.bf16.mxu0 0
        %2226 = vmatpush1.bf16.msra.mxu0 0
        %2227 = vmatprep.subr.bf16.mxu0 0
        %2228 = vmatpush1.bf16.msra.mxu0 0
        %2229 = vmatprep.mubr.bf16.mxu0 0
        %2230 = vmatmul.mubr.bf16.gmra.mrb[0].mxu0 %v2187
        %v2231 = vpop.f32.mrb[0].mxu0
        %v2232 = vadd.f32 0.0, %v2231
        %v2233 = vpop.f32.mrb[0].mxu0
        %v2234 = vpop.f32.mrb[0].mxu0
        %v2235 = vadd.f32 0.0, %v2234
        %v2236 = vpop.f32.mrb[0].mxu0
        %2237 = vmatprep.mubr.bf16.mxu0 0
        %2238 = vmatmul.mubr.bf16.gmra.mrb[0].mxu0 %v2190
        %v2239 = vpop.f32.mrb[0].mxu0
        %v2240 = vadd.f32 0.0, %v2239
        %v2241 = vpop.f32.mrb[0].mxu0
        %v2242 = vpop.f32.mrb[0].mxu0
        %v2243 = vpop.f32.mrb[0].mxu0
        %2244 = vdwg.mxu0
        %v2245 = vpack.c.bf16 %v2235, %v2232
        %v2246 = vpack.c.bf16 %v2240, %v2240
        %v2247 = vpack.c.bf16 %v1983, %v1979
        %v2248 = vpack.c.bf16 %v1989, %v1989
        %v2249 = vpack.c.bf16 %v2034, %v2030
        %v2250 = vpack.c.bf16 %v2040, %v2040
        %v2251 = vpack.c.bf16 %v2085, %v2081
        %v2252 = vpack.c.bf16 %v2091, %v2091
        %2253 = vmatprep.subr.bf16.mxu0 0
        %2254 = vmatpush1.bf16.xpose.msra.mxu0 %v2249
        %2255 = vmatprep.subr.bf16.mxu0 0
        %2256 = vmatpush1.bf16.xpose.msra.mxu0 %v2250
        %2257 = vmatprep.subr.bf16.mxu0 0
        %2258 = vmatpush1.bf16.xpose.msra.mxu0 0
        %2259 = vmatprep.subr.bf16.mxu0 0
        %2260 = vmatpush1.bf16.xpose.msra.mxu0 0
        %2261 = vmatprep.subr.bf16.mxu0 0
        %2262 = vmatpush1.bf16.xpose.msra.mxu0 0
        %2263 = vmatprep.subr.bf16.mxu0 0
        %2264 = vmatpush1.bf16.xpose.msra.mxu0 0
        %2265 = vmatprep.subr.bf16.mxu0 0
        %2266 = vmatpush1.bf16.xpose.msra.mxu0 0
        %2267 = vmatprep.subr.bf16.mxu0 0
        %2268 = vmatpush1.bf16.xpose.msra.mxu0 0
        %2269 = vmatprep.subr.bf16.mxu0 0
        %2270 = vmatpush1.bf16.xpose.msra.mxu0 0
        %2271 = vmatprep.subr.bf16.mxu0 0
        %2272 = vmatpush1.bf16.xpose.msra.mxu0 0
        %2273 = vmatprep.subr.bf16.mxu0 0
        %2274 = vmatpush1.bf16.xpose.msra.mxu0 0
        %2275 = vmatprep.subr.bf16.mxu0 0
        %2276 = vmatpush1.bf16.xpose.msra.mxu0 0
        %2277 = vmatprep.subr.bf16.mxu0 0
        %2278 = vmatpush1.bf16.xpose.msra.mxu0 0
        %2279 = vmatprep.subr.bf16.mxu0 0
        %2280 = vmatpush1.bf16.xpose.msra.mxu0 0
        %2281 = vmatprep.subr.bf16.mxu0 0
        %2282 = vmatpush1.bf16.xpose.msra.mxu0 0
        %2283 = vmatprep.subr.bf16.mxu0 0
        %2284 = vmatpush1.bf16.xpose.msra.mxu0 0
        %2285 = vmatprep.mubr.bf16.mxu0 0
        %2286 = vmatmul.mubr.bf16.gmra.mrb[0].mxu0 %v2247
        %v2287 = vpop.f32.mrb[0].mxu0
        %v2288 = vadd.f32 0.0, %v2287
        %v2289 = vpop.f32.mrb[0].mxu0
        %v2290 = vpop.f32.mrb[0].mxu0
        %v2291 = vadd.f32 0.0, %v2290
        %v2292 = vpop.f32.mrb[0].mxu0
        %2293 = vmatprep.mubr.bf16.mxu0 0
        %2294 = vmatmul.mubr.bf16.gmra.mrb[0].mxu0 %v2248
        %v2295 = vpop.f32.mrb[0].mxu0
        %v2296 = vadd.f32 0.0, %v2295
        %v2297 = vpop.f32.mrb[0].mxu0
        %v2298 = vpop.f32.mrb[0].mxu0
        %v2299 = vpop.f32.mrb[0].mxu0
        %2300 = vdwg.mxu0
        %v2301 = vsel %vm2149, %v2288, -inf
        %2302 = vmax.xlane.f32.xlu0 %v2301
        %v2303 = vpop.xlane.xlu0 %2302
        %v2304 = vsel %vm2149, %v2291, -inf
        %2305 = vmax.xlane.f32.xlu0 %v2304
        %v2306 = vpop.xlane.xlu0 %2305
        %v2307 = vsel %vm2156, %v2296, -inf
        %2308 = vmax.xlane.f32.xlu0 %v2307
        %v2309 = vpop.xlane.xlu0 %2308
        %v2310 = vsub.f32 %v2288, %v2303
        %v2311 = vsub.f32 %v2291, %v2306
        %v2312 = vsub.f32 %v2296, %v2309
        %v2313 = vmul.f32 %v2310, 1.442695
        %v2314 = vpow.pop %v2313
        %v2315 = vmul.f32 %v2311, 1.442695
        %v2316 = vpow.pop %v2315
        %v2317 = vmul.f32 %v2312, 1.442695
        %v2318 = vpow.pop %v2317
        %v2319 = vsel %vm2149, %v2314, 0.0
        %2320 = vadd.xlane.f32.xlu0 %v2319
        %v2321 = vpop.xlane.xlu0 %2320
        %v2322 = vsel %vm2149, %v2316, 0.0
        %2323 = vadd.xlane.f32.xlu0 %v2322
        %v2324 = vpop.xlane.xlu0 %2323
        %v2325 = vsel %vm2156, %v2318, 0.0
        %2326 = vadd.xlane.f32.xlu0 %v2325
        %v2327 = vpop.xlane.xlu0 %2326
        %v2328 = vrcp.pop %v2321
        %v2329 = vrcp.pop %v2324
        %v2330 = vrcp.pop %v2327
        %v2331 = vmul.f32 %v2314, %v2328
        %v2332 = vmul.f32 %v2316, %v2329
        %v2333 = vmul.f32 %v2318, %v2330
        %v2334 = vpack.c.bf16 %v2332, %v2331
        %v2335 = vpack.c.bf16 %v2333, %v2333
        %v2337 = vsel %vm2149, %v2334, 0
        %v2340 = vsel %vm2149, %v2335, 0
        %v2343 = vand.u32 %v2252, %v2193
        %2345 = vmatprep.subr.bf16.mxu0 0
        %2346 = vmatpush1.bf16.msra.mxu0 %v2251
        %2347 = vmatprep.subr.bf16.mxu0 0
        %2348 = vmatpush1.bf16.msra.mxu0 %v2343
        %2349 = vmatprep.subr.bf16.mxu0 0
        %2350 = vmatpush1.bf16.msra.mxu0 0
        %2351 = vmatprep.subr.bf16.mxu0 0
        %2352 = vmatpush1.bf16.msra.mxu0 0
        %2353 = vmatprep.subr.bf16.mxu0 0
        %2354 = vmatpush1.bf16.msra.mxu0 0
        %2355 = vmatprep.subr.bf16.mxu0 0
        %2356 = vmatpush1.bf16.msra.mxu0 0
        %2357 = vmatprep.subr.bf16.mxu0 0
        %2358 = vmatpush1.bf16.msra.mxu0 0
        %2359 = vmatprep.subr.bf16.mxu0 0
        %2360 = vmatpush1.bf16.msra.mxu0 0
        %2361 = vmatprep.subr.bf16.mxu0 0
        %2362 = vmatpush1.bf16.msra.mxu0 0
        %2363 = vmatprep.subr.bf16.mxu0 0
        %2364 = vmatpush1.bf16.msra.mxu0 0
        %2365 = vmatprep.subr.bf16.mxu0 0
        %2366 = vmatpush1.bf16.msra.mxu0 0
        %2367 = vmatprep.subr.bf16.mxu0 0
        %2368 = vmatpush1.bf16.msra.mxu0 0
        %2369 = vmatprep.subr.bf16.mxu0 0
        %2370 = vmatpush1.bf16.msra.mxu0 0
        %2371 = vmatprep.subr.bf16.mxu0 0
        %2372 = vmatpush1.bf16.msra.mxu0 0
        %2373 = vmatprep.subr.bf16.mxu0 0
        %2374 = vmatpush1.bf16.msra.mxu0 0
        %2375 = vmatprep.subr.bf16.mxu0 0
        %2376 = vmatpush1.bf16.msra.mxu0 0
        %2377 = vmatprep.mubr.bf16.mxu0 0
        %2378 = vmatmul.mubr.bf16.gmra.mrb[0].mxu0 %v2337
        %v2379 = vpop.f32.mrb[0].mxu0
        %v2380 = vadd.f32 0.0, %v2379
        %v2381 = vpop.f32.mrb[0].mxu0
        %v2382 = vpop.f32.mrb[0].mxu0
        %v2383 = vadd.f32 0.0, %v2382
        %v2384 = vpop.f32.mrb[0].mxu0
        %2385 = vmatprep.mubr.bf16.mxu0 0
        %2386 = vmatmul.mubr.bf16.gmra.mrb[0].mxu0 %v2340
        %v2387 = vpop.f32.mrb[0].mxu0
        %v2388 = vadd.f32 0.0, %v2387
        %v2389 = vpop.f32.mrb[0].mxu0
        %v2390 = vpop.f32.mrb[0].mxu0
        %v2391 = vpop.f32.mrb[0].mxu0
        %2392 = vdwg.mxu0
        %v2393 = vpack.c.bf16 %v2383, %v2380
        %v2394 = vpack.c.bf16 %v2388, %v2388
        %v2411 = vunpack.c.l.b16 %v1190
        %v2412 = vunpack.c.h.b16 %v1190
        %v2413 = vunpack.c.l.b16 %v1191
        %v2414 = vunpack.c.h.b16 %v1191
        %v2415 = vunpack.c.l.b16 %v1192
        %v2416 = vunpack.c.h.b16 %v1192
        %v2417 = vunpack.c.l.b16 %v1193
        %v2418 = vunpack.c.h.b16 %v1193
        %v2419 = vunpack.c.l.b16 %v1194
        %v2420 = vunpack.c.h.b16 %v1194
        %v2421 = vunpack.c.l.b16 %v1195
        %v2422 = vunpack.c.h.b16 %v1195
        %v2423 = vunpack.c.l.b16 %v1196
        %v2424 = vunpack.c.h.b16 %v1196
        %v2425 = vunpack.c.l.b16 %v1197
        %v2426 = vunpack.c.h.b16 %v1197
        %v2427 = vunpack.c.l.b16 %v1198
        %v2428 = vunpack.c.h.b16 %v1198
        %v2429 = vunpack.c.l.b16 %v1199
        %v2430 = vunpack.c.h.b16 %v1199
        %v2431 = vunpack.c.l.b16 %v1200
        %v2432 = vunpack.c.h.b16 %v1200
        %v2433 = vunpack.c.l.b16 %v1201
        %v2434 = vunpack.c.h.b16 %v1201
        %v2435 = vunpack.c.l.b16 %v1202
        %v2436 = vunpack.c.h.b16 %v1202
        %v2437 = vunpack.c.l.b16 %v1203
        %v2438 = vunpack.c.h.b16 %v1203
        %v2439 = vunpack.c.l.b16 %v1204
        %v2440 = vunpack.c.h.b16 %v1204
        %v2441 = vunpack.c.l.b16 %v1205
        %v2442 = vunpack.c.h.b16 %v1205
        %v2443 = vpack.c.b16 %v2413, %v2411
        %v2444 = vpack.c.b16 %v2414, %v2412
        %v2445 = vpack.c.b16 %v2417, %v2415
        %v2446 = vpack.c.b16 %v2418, %v2416
        %v2447 = vpack.c.b16 %v2421, %v2419
        %v2448 = vpack.c.b16 %v2422, %v2420
        %v2449 = vpack.c.b16 %v2425, %v2423
        %v2450 = vpack.c.b16 %v2426, %v2424
        %v2451 = vpack.c.b16 %v2429, %v2427
        %v2452 = vpack.c.b16 %v2430, %v2428
        %v2453 = vpack.c.b16 %v2433, %v2431
        %v2454 = vpack.c.b16 %v2434, %v2432
        %v2455 = vpack.c.b16 %v2437, %v2435
        %v2456 = vpack.c.b16 %v2438, %v2436
        %v2457 = vpack.c.b16 %v2441, %v2439
        %v2458 = vpack.c.b16 %v2442, %v2440
        %2475 = vmatprep.subr.bf16.mxu0 %v2444
        %2476 = vmatpush1.bf16.msra.mxu0 %v2443
        %2477 = vmatprep.subr.bf16.mxu0 %v2446
        %2478 = vmatpush1.bf16.msra.mxu0 %v2445
        %2479 = vmatprep.subr.bf16.mxu0 %v2448
        %2480 = vmatpush1.bf16.msra.mxu0 %v2447
        %2481 = vmatprep.subr.bf16.mxu0 %v2450
        %2482 = vmatpush1.bf16.msra.mxu0 %v2449
        %2483 = vmatprep.subr.bf16.mxu0 %v2452
        %2484 = vmatpush1.bf16.msra.mxu0 %v2451
        %2485 = vmatprep.subr.bf16.mxu0 %v2454
        %2486 = vmatpush1.bf16.msra.mxu0 %v2453
        %2487 = vmatprep.subr.bf16.mxu0 %v2456
        %2488 = vmatpush1.bf16.msra.mxu0 %v2455
        %2489 = vmatprep.subr.bf16.mxu0 %v2458
        %2490 = vmatpush1.bf16.msra.mxu0 %v2457
        %2491 = vmatprep.subr.bf16.mxu0 0
        %2492 = vmatpush1.bf16.msra.mxu0 0
        %2493 = vmatprep.subr.bf16.mxu0 0
        %2494 = vmatpush1.bf16.msra.mxu0 0
        %2495 = vmatprep.subr.bf16.mxu0 0
        %2496 = vmatpush1.bf16.msra.mxu0 0
        %2497 = vmatprep.subr.bf16.mxu0 0
        %2498 = vmatpush1.bf16.msra.mxu0 0
        %2499 = vmatprep.subr.bf16.mxu0 0
        %2500 = vmatpush1.bf16.msra.mxu0 0
        %2501 = vmatprep.subr.bf16.mxu0 0
        %2502 = vmatpush1.bf16.msra.mxu0 0
        %2503 = vmatprep.subr.bf16.mxu0 0
        %2504 = vmatpush1.bf16.msra.mxu0 0
        %2505 = vmatprep.subr.bf16.mxu0 0
        %2506 = vmatpush1.bf16.msra.mxu0 0
        %2507 = vmatprep.mubr.bf16.mxu0 0
        %2508 = vmatmul.mubr.bf16.gmra.mrb[0].mxu0 %v2393
        %v2509 = vpop.f32.mrb[0].mxu0
        %v2510 = vadd.f32 0.0, %v2509
        %v2511 = vpop.f32.mrb[0].mxu0
        %v2512 = vadd.f32 0.0, %v2511
        %v2513 = vpop.f32.mrb[0].mxu0
        %v2514 = vadd.f32 0.0, %v2513
        %v2515 = vpop.f32.mrb[0].mxu0
        %v2516 = vadd.f32 0.0, %v2515
        %2517 = vmatprep.mubr.bf16.mxu0 0
        %2518 = vmatmul.mubr.bf16.gmra.mrb[0].mxu0 %v2394
        %v2519 = vpop.f32.mrb[0].mxu0
        %v2520 = vadd.f32 0.0, %v2519
        %v2521 = vpop.f32.mrb[0].mxu0
        %v2522 = vadd.f32 0.0, %v2521
        %v2523 = vpop.f32.mrb[0].mxu0
        %v2524 = vpop.f32.mrb[0].mxu0
        %2525 = vdwg.mxu0
        %v2542 = vunpack.c.l.b16 %v1174
        %v2543 = vunpack.c.h.b16 %v1174
        %v2544 = vunpack.c.l.b16 %v1175
        %v2545 = vunpack.c.h.b16 %v1175
        %v2546 = vunpack.c.l.b16 %v1176
        %v2547 = vunpack.c.h.b16 %v1176
        %v2548 = vunpack.c.l.b16 %v1177
        %v2549 = vunpack.c.h.b16 %v1177
        %v2550 = vunpack.c.l.b16 %v1178
        %v2551 = vunpack.c.h.b16 %v1178
        %v2552 = vunpack.c.l.b16 %v1179
        %v2553 = vunpack.c.h.b16 %v1179
        %v2554 = vunpack.c.l.b16 %v1180
        %v2555 = vunpack.c.h.b16 %v1180
        %v2556 = vunpack.c.l.b16 %v1181
        %v2557 = vunpack.c.h.b16 %v1181
        %v2558 = vunpack.c.l.b16 %v1182
        %v2559 = vunpack.c.h.b16 %v1182
        %v2560 = vunpack.c.l.b16 %v1183
        %v2561 = vunpack.c.h.b16 %v1183
        %v2562 = vunpack.c.l.b16 %v1184
        %v2563 = vunpack.c.h.b16 %v1184
        %v2564 = vunpack.c.l.b16 %v1185
        %v2565 = vunpack.c.h.b16 %v1185
        %v2566 = vunpack.c.l.b16 %v1186
        %v2567 = vunpack.c.h.b16 %v1186
        %v2568 = vunpack.c.l.b16 %v1187
        %v2569 = vunpack.c.h.b16 %v1187
        %v2570 = vunpack.c.l.b16 %v1188
        %v2571 = vunpack.c.h.b16 %v1188
        %v2572 = vunpack.c.l.b16 %v1189
        %v2573 = vunpack.c.h.b16 %v1189
        %v2574 = vpack.c.b16 %v2544, %v2542
        %v2575 = vpack.c.b16 %v2545, %v2543
        %v2576 = vpack.c.b16 %v2548, %v2546
        %v2577 = vpack.c.b16 %v2549, %v2547
        %v2578 = vpack.c.b16 %v2552, %v2550
        %v2579 = vpack.c.b16 %v2553, %v2551
        %v2580 = vpack.c.b16 %v2556, %v2554
        %v2581 = vpack.c.b16 %v2557, %v2555
        %v2582 = vpack.c.b16 %v2560, %v2558
        %v2583 = vpack.c.b16 %v2561, %v2559
        %v2584 = vpack.c.b16 %v2564, %v2562
        %v2585 = vpack.c.b16 %v2565, %v2563
        %v2586 = vpack.c.b16 %v2568, %v2566
        %v2587 = vpack.c.b16 %v2569, %v2567
        %v2588 = vpack.c.b16 %v2572, %v2570
        %v2589 = vpack.c.b16 %v2573, %v2571
        %2606 = vmatprep.subr.bf16.mxu0 %v2575
        %2607 = vmatpush1.bf16.msra.mxu0 %v2574
        %2608 = vmatprep.subr.bf16.mxu0 %v2577
        %2609 = vmatpush1.bf16.msra.mxu0 %v2576
        %2610 = vmatprep.subr.bf16.mxu0 %v2579
        %2611 = vmatpush1.bf16.msra.mxu0 %v2578
        %2612 = vmatprep.subr.bf16.mxu0 %v2581
        %2613 = vmatpush1.bf16.msra.mxu0 %v2580
        %2614 = vmatprep.subr.bf16.mxu0 %v2583
        %2615 = vmatpush1.bf16.msra.mxu0 %v2582
        %2616 = vmatprep.subr.bf16.mxu0 %v2585
        %2617 = vmatpush1.bf16.msra.mxu0 %v2584
        %2618 = vmatprep.subr.bf16.mxu0 %v2587
        %2619 = vmatpush1.bf16.msra.mxu0 %v2586
        %2620 = vmatprep.subr.bf16.mxu0 %v2589
        %2621 = vmatpush1.bf16.msra.mxu0 %v2588
        %2622 = vmatprep.subr.bf16.mxu0 0
        %2623 = vmatpush1.bf16.msra.mxu0 0
        %2624 = vmatprep.subr.bf16.mxu0 0
        %2625 = vmatpush1.bf16.msra.mxu0 0
        %2626 = vmatprep.subr.bf16.mxu0 0
        %2627 = vmatpush1.bf16.msra.mxu0 0
        %2628 = vmatprep.subr.bf16.mxu0 0
        %2629 = vmatpush1.bf16.msra.mxu0 0
        %2630 = vmatprep.subr.bf16.mxu0 0
        %2631 = vmatpush1.bf16.msra.mxu0 0
        %2632 = vmatprep.subr.bf16.mxu0 0
        %2633 = vmatpush1.bf16.msra.mxu0 0
        %2634 = vmatprep.subr.bf16.mxu0 0
        %2635 = vmatpush1.bf16.msra.mxu0 0
        %2636 = vmatprep.subr.bf16.mxu0 0
        %2637 = vmatpush1.bf16.msra.mxu0 0
        %2638 = vmatprep.mubr.bf16.mxu0 0
        %2639 = vmatmul.mubr.bf16.gmra.mrb[0].mxu0 %v2245
        %v2640 = vpop.f32.mrb[0].mxu0
        %v2641 = vadd.f32 %v2510, %v2640
        %v2642 = vpop.f32.mrb[0].mxu0
        %v2643 = vadd.f32 %v2512, %v2642
        %v2644 = vpop.f32.mrb[0].mxu0
        %v2645 = vadd.f32 %v2514, %v2644
        %v2646 = vpop.f32.mrb[0].mxu0
        %v2647 = vadd.f32 %v2516, %v2646
        %2648 = vmatprep.mubr.bf16.mxu0 0
        %2649 = vmatmul.mubr.bf16.gmra.mrb[0].mxu0 %v2246
        %v2650 = vpop.f32.mrb[0].mxu0
        %v2651 = vadd.f32 %v2520, %v2650
        %v2652 = vpop.f32.mrb[0].mxu0
        %v2653 = vadd.f32 %v2522, %v2652
        %v2654 = vpop.f32.mrb[0].mxu0
        %v2655 = vpop.f32.mrb[0].mxu0
        %2656 = vdwg.mxu0
        %v2657 = vadd.f32 %v1069, %v2641
        %v2658 = vadd.f32 %v1070, %v2643
        %v2659 = vadd.f32 %v1071, %v2645
        %v2660 = vadd.f32 %v1072, %v2647
        %v2661 = vadd.f32 %v1073, %v2651
        %v2662 = vadd.f32 %v1074, %v2653
        %v2664 = vlaneseq
        %v2665 = vshrl.u32 %v2664, 7
        %v2666 = vsub.s32 0, %v2665
        %v2667 = vrot.slane %v1206, %v2666
        %v2668 = vlaneseq
        %v2669 = vshrl.u32 %v2668, 7
        %v2670 = vsub.s32 1, %v2669
        %v2671 = vrot.slane %v1206, %v2670
        %v2674 = vadd.f32 %v2657, %v2667
        %v2675 = vadd.f32 %v2658, %v2671
        %v2676 = vadd.f32 %v2659, %v2667
        %v2677 = vadd.f32 %v2660, %v2671
        %v2678 = vadd.f32 %v2661, %v2667
        %v2679 = vadd.f32 %v2662, %v2671
        %v2680 = vadd.f32 %v2674, %v2675
        %2681 = vadd.xlane.f32.xlu0 %v2680
        %v2682 = vpop.xlane.xlu0 %2681
        %v2683 = vadd.f32 %v2676, %v2677
        %2684 = vadd.xlane.f32.xlu0 %v2683
        %v2685 = vpop.xlane.xlu0 %2684
        %v2686 = vsel %vm1345, %v2678, 0.0
        %v2687 = vsel %vm1345, %v2679, 0.0
        %v2688 = vadd.f32 %v2686, %v2687
        %2689 = vadd.xlane.f32.xlu0 %v2688
        %v2690 = vpop.xlane.xlu0 %2689
        %v2691 = vmul.f32 %v2682, %v1351
        %v2692 = vmul.f32 %v2685, %v1351
        %v2693 = vmul.f32 %v2690, %v1351
        %v2694 = vsub.f32 %v2674, %v2691
        %v2695 = vsub.f32 %v2675, %v2691
        %v2696 = vsub.f32 %v2676, %v2692
        %v2697 = vsub.f32 %v2677, %v2692
        %v2698 = vsub.f32 %v2678, %v2693
        %v2699 = vsub.f32 %v2679, %v2693
        %v2700 = vmul.f32 %v2694, %v2694
        %v2701 = vmul.f32 %v2695, %v2695
        %v2702 = vmul.f32 %v2696, %v2696
        %v2703 = vmul.f32 %v2697, %v2697
        %v2704 = vmul.f32 %v2698, %v2698
        %v2705 = vmul.f32 %v2699, %v2699
        %v2706 = vadd.f32 %v2700, %v2701
        %2707 = vadd.xlane.f32.xlu0 %v2706
        %v2708 = vpop.xlane.xlu0 %2707
        %v2709 = vadd.f32 %v2702, %v2703
        %2710 = vadd.xlane.f32.xlu0 %v2709
        %v2711 = vpop.xlane.xlu0 %2710
        %v2712 = vsel %vm1345, %v2704, 0.0
        %v2713 = vsel %vm1345, %v2705, 0.0
        %v2714 = vadd.f32 %v2712, %v2713
        %2715 = vadd.xlane.f32.xlu0 %v2714
        %v2716 = vpop.xlane.xlu0 %2715
        %v2717 = vmul.f32 %v2708, %v1351
        %v2718 = vmul.f32 %v2711, %v1351
        %v2719 = vmul.f32 %v2716, %v1351
        %v2720 = vadd.f32 %v2717, 1e-05
        %v2721 = vadd.f32 %v2718, 1e-05
        %v2722 = vadd.f32 %v2719, 1e-05
        %v2723 = vrsqrt.pop %v2720
        %v2724 = vrsqrt.pop %v2721
        %v2725 = vrsqrt.pop %v2722
        %v2726 = vmul.f32 %v2694, %v2723
        %v2727 = vmul.f32 %v2695, %v2723
        %v2728 = vmul.f32 %v2696, %v2724
        %v2729 = vmul.f32 %v2697, %v2724
        %v2730 = vmul.f32 %v2698, %v2725
        %v2731 = vmul.f32 %v2699, %v2725
        %v2733 = vlaneseq
        %v2734 = vshrl.u32 %v2733, 7
        %v2735 = vsub.s32 0, %v2734
        %v2736 = vrot.slane %v1207, %v2735
        %v2737 = vlaneseq
        %v2738 = vshrl.u32 %v2737, 7
        %v2739 = vsub.s32 1, %v2738
        %v2740 = vrot.slane %v1207, %v2739
        %v2743 = vmul.f32 %v2726, %v2736
        %v2744 = vmul.f32 %v2727, %v2740
        %v2745 = vmul.f32 %v2728, %v2736
        %v2746 = vmul.f32 %v2729, %v2740
        %v2747 = vmul.f32 %v2730, %v2736
        %v2748 = vmul.f32 %v2731, %v2740
        %v2750 = vlaneseq
        %v2751 = vshrl.u32 %v2750, 7
        %v2752 = vsub.s32 0, %v2751
        %v2753 = vrot.slane %v1208, %v2752
        %v2754 = vlaneseq
        %v2755 = vshrl.u32 %v2754, 7
        %v2756 = vsub.s32 1, %v2755
        %v2757 = vrot.slane %v1208, %v2756
        %v2760 = vadd.f32 %v2743, %v2753
        %v2761 = vadd.f32 %v2744, %v2757
        %v2762 = vadd.f32 %v2745, %v2753
        %v2763 = vadd.f32 %v2746, %v2757
        %v2764 = vadd.f32 %v2747, %v2753
        %v2765 = vadd.f32 %v2748, %v2757
        %v2766 = vpack.c.bf16 %v2762, %v2760
        %v2767 = vpack.c.bf16 %v2763, %v2761
        %v2768 = vpack.c.bf16 %v2764, %v2764
        %v2769 = vpack.c.bf16 %v2765, %v2765
        %v2771 = vlaneseq
        %v2772 = vshrl.u32 %v2771, 7
        %v2773 = vsub.s32 0, %v2772
        %v2774 = vrot.slane %v1273, %v2773
        %v2775 = vlaneseq
        %v2776 = vshrl.u32 %v2775, 7
        %v2777 = vsub.s32 1, %v2776
        %v2778 = vrot.slane %v1273, %v2777
        %v2779 = vlaneseq
        %v2780 = vshrl.u32 %v2779, 7
        %v2781 = vsub.s32 2, %v2780
        %v2782 = vrot.slane %v1273, %v2781
        %v2783 = vlaneseq
        %v2784 = vshrl.u32 %v2783, 7
        %v2785 = vsub.s32 3, %v2784
        %v2786 = vrot.slane %v1273, %v2785
        %v2855 = vunpack.c.l.b16 %v1209
        %v2856 = vunpack.c.h.b16 %v1209
        %v2857 = vunpack.c.l.b16 %v1210
        %v2858 = vunpack.c.h.b16 %v1210
        %v2859 = vunpack.c.l.b16 %v1211
        %v2860 = vunpack.c.h.b16 %v1211
        %v2861 = vunpack.c.l.b16 %v1212
        %v2862 = vunpack.c.h.b16 %v1212
        %v2863 = vunpack.c.l.b16 %v1213
        %v2864 = vunpack.c.h.b16 %v1213
        %v2865 = vunpack.c.l.b16 %v1214
        %v2866 = vunpack.c.h.b16 %v1214
        %v2867 = vunpack.c.l.b16 %v1215
        %v2868 = vunpack.c.h.b16 %v1215
        %v2869 = vunpack.c.l.b16 %v1216
        %v2870 = vunpack.c.h.b16 %v1216
        %v2871 = vunpack.c.l.b16 %v1217
        %v2872 = vunpack.c.h.b16 %v1217
        %v2873 = vunpack.c.l.b16 %v1218
        %v2874 = vunpack.c.h.b16 %v1218
        %v2875 = vunpack.c.l.b16 %v1219
        %v2876 = vunpack.c.h.b16 %v1219
        %v2877 = vunpack.c.l.b16 %v1220
        %v2878 = vunpack.c.h.b16 %v1220
        %v2879 = vunpack.c.l.b16 %v1221
        %v2880 = vunpack.c.h.b16 %v1221
        %v2881 = vunpack.c.l.b16 %v1222
        %v2882 = vunpack.c.h.b16 %v1222
        %v2883 = vunpack.c.l.b16 %v1223
        %v2884 = vunpack.c.h.b16 %v1223
        %v2885 = vunpack.c.l.b16 %v1224
        %v2886 = vunpack.c.h.b16 %v1224
        %v2887 = vunpack.c.l.b16 %v1225
        %v2888 = vunpack.c.h.b16 %v1225
        %v2889 = vunpack.c.l.b16 %v1226
        %v2890 = vunpack.c.h.b16 %v1226
        %v2891 = vunpack.c.l.b16 %v1227
        %v2892 = vunpack.c.h.b16 %v1227
        %v2893 = vunpack.c.l.b16 %v1228
        %v2894 = vunpack.c.h.b16 %v1228
        %v2895 = vunpack.c.l.b16 %v1229
        %v2896 = vunpack.c.h.b16 %v1229
        %v2897 = vunpack.c.l.b16 %v1230
        %v2898 = vunpack.c.h.b16 %v1230
        %v2899 = vunpack.c.l.b16 %v1231
        %v2900 = vunpack.c.h.b16 %v1231
        %v2901 = vunpack.c.l.b16 %v1232
        %v2902 = vunpack.c.h.b16 %v1232
        %v2903 = vunpack.c.l.b16 %v1233
        %v2904 = vunpack.c.h.b16 %v1233
        %v2905 = vunpack.c.l.b16 %v1234
        %v2906 = vunpack.c.h.b16 %v1234
        %v2907 = vunpack.c.l.b16 %v1235
        %v2908 = vunpack.c.h.b16 %v1235
        %v2909 = vunpack.c.l.b16 %v1236
        %v2910 = vunpack.c.h.b16 %v1236
        %v2911 = vunpack.c.l.b16 %v1237
        %v2912 = vunpack.c.h.b16 %v1237
        %v2913 = vunpack.c.l.b16 %v1238
        %v2914 = vunpack.c.h.b16 %v1238
        %v2915 = vunpack.c.l.b16 %v1239
        %v2916 = vunpack.c.h.b16 %v1239
        %v2917 = vunpack.c.l.b16 %v1240
        %v2918 = vunpack.c.h.b16 %v1240
        %v2919 = vunpack.c.l.b16 %v1241
        %v2920 = vunpack.c.h.b16 %v1241
        %v2921 = vunpack.c.l.b16 %v1242
        %v2922 = vunpack.c.h.b16 %v1242
        %v2923 = vunpack.c.l.b16 %v1243
        %v2924 = vunpack.c.h.b16 %v1243
        %v2925 = vunpack.c.l.b16 %v1244
        %v2926 = vunpack.c.h.b16 %v1244
        %v2927 = vunpack.c.l.b16 %v1245
        %v2928 = vunpack.c.h.b16 %v1245
        %v2929 = vunpack.c.l.b16 %v1246
        %v2930 = vunpack.c.h.b16 %v1246
        %v2931 = vunpack.c.l.b16 %v1247
        %v2932 = vunpack.c.h.b16 %v1247
        %v2933 = vunpack.c.l.b16 %v1248
        %v2934 = vunpack.c.h.b16 %v1248
        %v2935 = vunpack.c.l.b16 %v1249
        %v2936 = vunpack.c.h.b16 %v1249
        %v2937 = vunpack.c.l.b16 %v1250
        %v2938 = vunpack.c.h.b16 %v1250
        %v2939 = vunpack.c.l.b16 %v1251
        %v2940 = vunpack.c.h.b16 %v1251
        %v2941 = vunpack.c.l.b16 %v1252
        %v2942 = vunpack.c.h.b16 %v1252
        %v2943 = vunpack.c.l.b16 %v1253
        %v2944 = vunpack.c.h.b16 %v1253
        %v2945 = vunpack.c.l.b16 %v1254
        %v2946 = vunpack.c.h.b16 %v1254
        %v2947 = vunpack.c.l.b16 %v1255
        %v2948 = vunpack.c.h.b16 %v1255
        %v2949 = vunpack.c.l.b16 %v1256
        %v2950 = vunpack.c.h.b16 %v1256
        %v2951 = vunpack.c.l.b16 %v1257
        %v2952 = vunpack.c.h.b16 %v1257
        %v2953 = vunpack.c.l.b16 %v1258
        %v2954 = vunpack.c.h.b16 %v1258
        %v2955 = vunpack.c.l.b16 %v1259
        %v2956 = vunpack.c.h.b16 %v1259
        %v2957 = vunpack.c.l.b16 %v1260
        %v2958 = vunpack.c.h.b16 %v1260
        %v2959 = vunpack.c.l.b16 %v1261
        %v2960 = vunpack.c.h.b16 %v1261
        %v2961 = vunpack.c.l.b16 %v1262
        %v2962 = vunpack.c.h.b16 %v1262
        %v2963 = vunpack.c.l.b16 %v1263
        %v2964 = vunpack.c.h.b16 %v1263
        %v2965 = vunpack.c.l.b16 %v1264
        %v2966 = vunpack.c.h.b16 %v1264
        %v2967 = vunpack.c.l.b16 %v1265
        %v2968 = vunpack.c.h.b16 %v1265
        %v2969 = vunpack.c.l.b16 %v1266
        %v2970 = vunpack.c.h.b16 %v1266
        %v2971 = vunpack.c.l.b16 %v1267
        %v2972 = vunpack.c.h.b16 %v1267
        %v2973 = vunpack.c.l.b16 %v1268
        %v2974 = vunpack.c.h.b16 %v1268
        %v2975 = vunpack.c.l.b16 %v1269
        %v2976 = vunpack.c.h.b16 %v1269
        %v2977 = vunpack.c.l.b16 %v1270
        %v2978 = vunpack.c.h.b16 %v1270
        %v2979 = vunpack.c.l.b16 %v1271
        %v2980 = vunpack.c.h.b16 %v1271
        %v2981 = vunpack.c.l.b16 %v1272
        %v2982 = vunpack.c.h.b16 %v1272
        %v2983 = vpack.c.b16 %v2859, %v2855
        %v2984 = vpack.c.b16 %v2860, %v2856
        %v2985 = vpack.c.b16 %v2861, %v2857
        %v2986 = vpack.c.b16 %v2862, %v2858
        %v2987 = vpack.c.b16 %v2867, %v2863
        %v2988 = vpack.c.b16 %v2868, %v2864
        %v2989 = vpack.c.b16 %v2869, %v2865
        %v2990 = vpack.c.b16 %v2870, %v2866
        %v2991 = vpack.c.b16 %v2875, %v2871
        %v2992 = vpack.c.b16 %v2876, %v2872
        %v2993 = vpack.c.b16 %v2877, %v2873
        %v2994 = vpack.c.b16 %v2878, %v2874
        %v2995 = vpack.c.b16 %v2883, %v2879
        %v2996 = vpack.c.b16 %v2884, %v2880
        %v2997 = vpack.c.b16 %v2885, %v2881
        %v2998 = vpack.c.b16 %v2886, %v2882
        %v2999 = vpack.c.b16 %v2891, %v2887
        %v3000 = vpack.c.b16 %v2892, %v2888
        %v3001 = vpack.c.b16 %v2893, %v2889
        %v3002 = vpack.c.b16 %v2894, %v2890
        %v3003 = vpack.c.b16 %v2899, %v2895
        %v3004 = vpack.c.b16 %v2900, %v2896
        %v3005 = vpack.c.b16 %v2901, %v2897
        %v3006 = vpack.c.b16 %v2902, %v2898
        %v3007 = vpack.c.b16 %v2907, %v2903
        %v3008 = vpack.c.b16 %v2908, %v2904
        %v3009 = vpack.c.b16 %v2909, %v2905
        %v3010 = vpack.c.b16 %v2910, %v2906
        %v3011 = vpack.c.b16 %v2915, %v2911
        %v3012 = vpack.c.b16 %v2916, %v2912
        %v3013 = vpack.c.b16 %v2917, %v2913
        %v3014 = vpack.c.b16 %v2918, %v2914
        %v3015 = vpack.c.b16 %v2923, %v2919
        %v3016 = vpack.c.b16 %v2924, %v2920
        %v3017 = vpack.c.b16 %v2925, %v2921
        %v3018 = vpack.c.b16 %v2926, %v2922
        %v3019 = vpack.c.b16 %v2931, %v2927
        %v3020 = vpack.c.b16 %v2932, %v2928
        %v3021 = vpack.c.b16 %v2933, %v2929
        %v3022 = vpack.c.b16 %v2934, %v2930
        %v3023 = vpack.c.b16 %v2939, %v2935
        %v3024 = vpack.c.b16 %v2940, %v2936
        %v3025 = vpack.c.b16 %v2941, %v2937
        %v3026 = vpack.c.b16 %v2942, %v2938
        %v3027 = vpack.c.b16 %v2947, %v2943
        %v3028 = vpack.c.b16 %v2948, %v2944
        %v3029 = vpack.c.b16 %v2949, %v2945
        %v3030 = vpack.c.b16 %v2950, %v2946
        %v3031 = vpack.c.b16 %v2955, %v2951
        %v3032 = vpack.c.b16 %v2956, %v2952
        %v3033 = vpack.c.b16 %v2957, %v2953
        %v3034 = vpack.c.b16 %v2958, %v2954
        %v3035 = vpack.c.b16 %v2963, %v2959
        %v3036 = vpack.c.b16 %v2964, %v2960
        %v3037 = vpack.c.b16 %v2965, %v2961
        %v3038 = vpack.c.b16 %v2966, %v2962
        %v3039 = vpack.c.b16 %v2971, %v2967
        %v3040 = vpack.c.b16 %v2972, %v2968
        %v3041 = vpack.c.b16 %v2973, %v2969
        %v3042 = vpack.c.b16 %v2974, %v2970
        %v3043 = vpack.c.b16 %v2979, %v2975
        %v3044 = vpack.c.b16 %v2980, %v2976
        %v3045 = vpack.c.b16 %v2981, %v2977
        %v3046 = vpack.c.b16 %v2982, %v2978
        %3111 = vmatprep.subr.bf16.mxu0 %v2984
        %3112 = vmatpush1.bf16.msra.mxu0 %v2983
        %3113 = vmatprep.subr.bf16.mxu0 %v2988
        %3114 = vmatpush1.bf16.msra.mxu0 %v2987
        %3115 = vmatprep.subr.bf16.mxu0 %v2992
        %3116 = vmatpush1.bf16.msra.mxu0 %v2991
        %3117 = vmatprep.subr.bf16.mxu0 %v2996
        %3118 = vmatpush1.bf16.msra.mxu0 %v2995
        %3119 = vmatprep.subr.bf16.mxu0 %v3000
        %3120 = vmatpush1.bf16.msra.mxu0 %v2999
        %3121 = vmatprep.subr.bf16.mxu0 %v3004
        %3122 = vmatpush1.bf16.msra.mxu0 %v3003
        %3123 = vmatprep.subr.bf16.mxu0 %v3008
        %3124 = vmatpush1.bf16.msra.mxu0 %v3007
        %3125 = vmatprep.subr.bf16.mxu0 %v3012
        %3126 = vmatpush1.bf16.msra.mxu0 %v3011
        %3127 = vmatprep.subr.bf16.mxu0 %v3016
        %3128 = vmatpush1.bf16.msra.mxu0 %v3015
        %3129 = vmatprep.subr.bf16.mxu0 %v3020
        %3130 = vmatpush1.bf16.msra.mxu0 %v3019
        %3131 = vmatprep.subr.bf16.mxu0 %v3024
        %3132 = vmatpush1.bf16.msra.mxu0 %v3023
        %3133 = vmatprep.subr.bf16.mxu0 %v3028
        %3134 = vmatpush1.bf16.msra.mxu0 %v3027
        %3135 = vmatprep.subr.bf16.mxu0 %v3032
        %3136 = vmatpush1.bf16.msra.mxu0 %v3031
        %3137 = vmatprep.subr.bf16.mxu0 %v3036
        %3138 = vmatpush1.bf16.msra.mxu0 %v3035
        %3139 = vmatprep.subr.bf16.mxu0 %v3040
        %3140 = vmatpush1.bf16.msra.mxu0 %v3039
        %3141 = vmatprep.subr.bf16.mxu0 %v3044
        %3142 = vmatpush1.bf16.msra.mxu0 %v3043
        %3143 = vmatprep.mubr.bf16.mxu0 %v2767
        %3144 = vmatmul.mubr.bf16.gmra.mrb[0].mxu0 %v2766
        %v3145 = vpop.f32.mrb[0].mxu0
        %v3146 = vadd.f32 %v2774, %v3145
        %v3147 = vpop.f32.mrb[0].mxu0
        %v3148 = vadd.f32 %v2778, %v3147
        %v3149 = vpop.f32.mrb[0].mxu0
        %v3150 = vadd.f32 %v2774, %v3149
        %v3151 = vpop.f32.mrb[0].mxu0
        %v3152 = vadd.f32 %v2778, %v3151
        %3153 = vmatprep.mubr.bf16.mxu0 %v2769
        %3154 = vmatmul.mubr.bf16.gmra.mrb[0].mxu0 %v2768
        %v3155 = vpop.f32.mrb[0].mxu0
        %v3156 = vadd.f32 %v2774, %v3155
        %v3157 = vpop.f32.mrb[0].mxu0
        %v3158 = vadd.f32 %v2778, %v3157
        %v3159 = vpop.f32.mrb[0].mxu0
        %v3160 = vpop.f32.mrb[0].mxu0
        %3161 = vdwg.mxu0
        %3162 = vmatprep.subr.bf16.mxu0 %v2986
        %3163 = vmatpush1.bf16.msra.mxu0 %v2985
        %3164 = vmatprep.subr.bf16.mxu0 %v2990
        %3165 = vmatpush1.bf16.msra.mxu0 %v2989
        %3166 = vmatprep.subr.bf16.mxu0 %v2994
        %3167 = vmatpush1.bf16.msra.mxu0 %v2993
        %3168 = vmatprep.subr.bf16.mxu0 %v2998
        %3169 = vmatpush1.bf16.msra.mxu0 %v2997
        %3170 = vmatprep.subr.bf16.mxu0 %v3002
        %3171 = vmatpush1.bf16.msra.mxu0 %v3001
        %3172 = vmatprep.subr.bf16.mxu0 %v3006
        %3173 = vmatpush1.bf16.msra.mxu0 %v3005
        %3174 = vmatprep.subr.bf16.mxu0 %v3010
        %3175 = vmatpush1.bf16.msra.mxu0 %v3009
        %3176 = vmatprep.subr.bf16.mxu0 %v3014
        %3177 = vmatpush1.bf16.msra.mxu0 %v3013
        %3178 = vmatprep.subr.bf16.mxu0 %v3018
        %3179 = vmatpush1.bf16.msra.mxu0 %v3017
        %3180 = vmatprep.subr.bf16.mxu0 %v3022
        %3181 = vmatpush1.bf16.msra.mxu0 %v3021
        %3182 = vmatprep.subr.bf16.mxu0 %v3026
        %3183 = vmatpush1.bf16.msra.mxu0 %v3025
        %3184 = vmatprep.subr.bf16.mxu0 %v3030
        %3185 = vmatpush1.bf16.msra.mxu0 %v3029
        %3186 = vmatprep.subr.bf16.mxu0 %v3034
        %3187 = vmatpush1.bf16.msra.mxu0 %v3033
        %3188 = vmatprep.subr.bf16.mxu0 %v3038
        %3189 = vmatpush1.bf16.msra.mxu0 %v3037
        %3190 = vmatprep.subr.bf16.mxu0 %v3042
        %3191 = vmatpush1.bf16.msra.mxu0 %v3041
        %3192 = vmatprep.subr.bf16.mxu0 %v3046
        %3193 = vmatpush1.bf16.msra.mxu0 %v3045
        %3194 = vmatprep.mubr.bf16.mxu0 %v2767
        %3195 = vmatmul.mubr.bf16.gmra.mrb[0].mxu0 %v2766
        %v3196 = vpop.f32.mrb[0].mxu0
        %v3197 = vadd.f32 %v2782, %v3196
        %v3198 = vpop.f32.mrb[0].mxu0
        %v3199 = vadd.f32 %v2786, %v3198
        %v3200 = vpop.f32.mrb[0].mxu0
        %v3201 = vadd.f32 %v2782, %v3200
        %v3202 = vpop.f32.mrb[0].mxu0
        %v3203 = vadd.f32 %v2786, %v3202
        %3204 = vmatprep.mubr.bf16.mxu0 %v2769
        %3205 = vmatmul.mubr.bf16.gmra.mrb[0].mxu0 %v2768
        %v3206 = vpop.f32.mrb[0].mxu0
        %v3207 = vadd.f32 %v2782, %v3206
        %v3208 = vpop.f32.mrb[0].mxu0
        %v3209 = vadd.f32 %v2786, %v3208
        %v3210 = vpop.f32.mrb[0].mxu0
        %v3211 = vpop.f32.mrb[0].mxu0
        %3212 = vdwg.mxu0
        %v3213 = vmul.f32 %v3146, 0.5
        %v3214 = vmul.f32 %v3148, 0.5
        %v3215 = vmul.f32 %v3197, 0.5
        %v3216 = vmul.f32 %v3199, 0.5
        %v3217 = vmul.f32 %v3150, 0.5
        %v3218 = vmul.f32 %v3152, 0.5
        %v3219 = vmul.f32 %v3201, 0.5
        %v3220 = vmul.f32 %v3203, 0.5
        %v3221 = vmul.f32 %v3156, 0.5
        %v3222 = vmul.f32 %v3158, 0.5
        %v3223 = vmul.f32 %v3207, 0.5
        %v3224 = vmul.f32 %v3209, 0.5
        %v3225 = vmul.f32 %v3146, 0.044715
        %v3226 = vmul.f32 %v3148, 0.044715
        %v3227 = vmul.f32 %v3197, 0.044715
        %v3228 = vmul.f32 %v3199, 0.044715
        %v3229 = vmul.f32 %v3150, 0.044715
        %v3230 = vmul.f32 %v3152, 0.044715
        %v3231 = vmul.f32 %v3201, 0.044715
        %v3232 = vmul.f32 %v3203, 0.044715
        %v3233 = vmul.f32 %v3156, 0.044715
        %v3234 = vmul.f32 %v3158, 0.044715
        %v3235 = vmul.f32 %v3207, 0.044715
        %v3236 = vmul.f32 %v3209, 0.044715
        %v3237 = vmul.f32 %v3225, %v3146
        %v3238 = vmul.f32 %v3226, %v3148
        %v3239 = vmul.f32 %v3227, %v3197
        %v3240 = vmul.f32 %v3228, %v3199
        %v3241 = vmul.f32 %v3229, %v3150
        %v3242 = vmul.f32 %v3230, %v3152
        %v3243 = vmul.f32 %v3231, %v3201
        %v3244 = vmul.f32 %v3232, %v3203
        %v3245 = vmul.f32 %v3233, %v3156
        %v3246 = vmul.f32 %v3234, %v3158
        %v3247 = vmul.f32 %v3235, %v3207
        %v3248 = vmul.f32 %v3236, %v3209
        %v3249 = vmul.f32 %v3237, %v3146
        %v3250 = vmul.f32 %v3238, %v3148
        %v3251 = vmul.f32 %v3239, %v3197
        %v3252 = vmul.f32 %v3240, %v3199
        %v3253 = vmul.f32 %v3241, %v3150
        %v3254 = vmul.f32 %v3242, %v3152
        %v3255 = vmul.f32 %v3243, %v3201
        %v3256 = vmul.f32 %v3244, %v3203
        %v3257 = vmul.f32 %v3245, %v3156
        %v3258 = vmul.f32 %v3246, %v3158
        %v3259 = vmul.f32 %v3247, %v3207
        %v3260 = vmul.f32 %v3248, %v3209
        %v3261 = vadd.f32 %v3146, %v3249
        %v3262 = vadd.f32 %v3148, %v3250
        %v3263 = vadd.f32 %v3197, %v3251
        %v3264 = vadd.f32 %v3199, %v3252
        %v3265 = vadd.f32 %v3150, %v3253
        %v3266 = vadd.f32 %v3152, %v3254
        %v3267 = vadd.f32 %v3201, %v3255
        %v3268 = vadd.f32 %v3203, %v3256
        %v3269 = vadd.f32 %v3156, %v3257
        %v3270 = vadd.f32 %v3158, %v3258
        %v3271 = vadd.f32 %v3207, %v3259
        %v3272 = vadd.f32 %v3209, %v3260
        %v3273 = vmul.f32 %v3261, 0.7978846
        %v3274 = vmul.f32 %v3262, 0.7978846
        %v3275 = vmul.f32 %v3263, 0.7978846
        %v3276 = vmul.f32 %v3264, 0.7978846
        %v3277 = vmul.f32 %v3265, 0.7978846
        %v3278 = vmul.f32 %v3266, 0.7978846
        %v3279 = vmul.f32 %v3267, 0.7978846
        %v3280 = vmul.f32 %v3268, 0.7978846
        %v3281 = vmul.f32 %v3269, 0.7978846
        %v3282 = vmul.f32 %v3270, 0.7978846
        %v3283 = vmul.f32 %v3271, 0.7978846
        %v3284 = vmul.f32 %v3272, 0.7978846
        %v3285 = vtanh.pop %v3273
        %v3286 = vtanh.pop %v3274
        %v3287 = vtanh.pop %v3275
        %v3288 = vtanh.pop %v3276
        %v3289 = vtanh.pop %v3277
        %v3290 = vtanh.pop %v3278
        %v3291 = vtanh.pop %v3279
        %v3292 = vtanh.pop %v3280
        %v3293 = vtanh.pop %v3281
        %v3294 = vtanh.pop %v3282
        %v3295 = vtanh.pop %v3283
        %v3296 = vtanh.pop %v3284
        %v3297 = vadd.f32 %v3285, 1.0
        %v3298 = vadd.f32 %v3286, 1.0
        %v3299 = vadd.f32 %v3287, 1.0
        %v3300 = vadd.f32 %v3288, 1.0
        %v3301 = vadd.f32 %v3289, 1.0
        %v3302 = vadd.f32 %v3290, 1.0
        %v3303 = vadd.f32 %v3291, 1.0
        %v3304 = vadd.f32 %v3292, 1.0
        %v3305 = vadd.f32 %v3293, 1.0
        %v3306 = vadd.f32 %v3294, 1.0
        %v3307 = vadd.f32 %v3295, 1.0
        %v3308 = vadd.f32 %v3296, 1.0
        %v3309 = vmul.f32 %v3213, %v3297
        %v3310 = vmul.f32 %v3214, %v3298
        %v3311 = vmul.f32 %v3215, %v3299
        %v3312 = vmul.f32 %v3216, %v3300
        %v3313 = vmul.f32 %v3217, %v3301
        %v3314 = vmul.f32 %v3218, %v3302
        %v3315 = vmul.f32 %v3219, %v3303
        %v3316 = vmul.f32 %v3220, %v3304
        %v3317 = vmul.f32 %v3221, %v3305
        %v3318 = vmul.f32 %v3222, %v3306
        %v3319 = vmul.f32 %v3223, %v3307
        %v3320 = vmul.f32 %v3224, %v3308
        %v3321 = vpack.c.bf16 %v3313, %v3309
        %v3322 = vpack.c.bf16 %v3314, %v3310
        %v3323 = vpack.c.bf16 %v3315, %v3311
        %v3324 = vpack.c.bf16 %v3316, %v3312
        %v3325 = vpack.c.bf16 %v3317, %v3317
        %v3326 = vpack.c.bf16 %v3318, %v3318
        %v3327 = vpack.c.bf16 %v3319, %v3319
        %v3328 = vpack.c.bf16 %v3320, %v3320
        %v3330 = vlaneseq
        %v3331 = vshrl.u32 %v3330, 7
        %v3332 = vsub.s32 0, %v3331
        %v3333 = vrot.slane %v1338, %v3332
        %v3334 = vlaneseq
        %v3335 = vshrl.u32 %v3334, 7
        %v3336 = vsub.s32 1, %v3335
        %v3337 = vrot.slane %v1338, %v3336
        %v3404 = vunpack.c.l.b16 %v1274
        %v3405 = vunpack.c.h.b16 %v1274
        %v3406 = vunpack.c.l.b16 %v1275
        %v3407 = vunpack.c.h.b16 %v1275
        %v3408 = vunpack.c.l.b16 %v1276
        %v3409 = vunpack.c.h.b16 %v1276
        %v3410 = vunpack.c.l.b16 %v1277
        %v3411 = vunpack.c.h.b16 %v1277
        %v3412 = vunpack.c.l.b16 %v1278
        %v3413 = vunpack.c.h.b16 %v1278
        %v3414 = vunpack.c.l.b16 %v1279
        %v3415 = vunpack.c.h.b16 %v1279
        %v3416 = vunpack.c.l.b16 %v1280
        %v3417 = vunpack.c.h.b16 %v1280
        %v3418 = vunpack.c.l.b16 %v1281
        %v3419 = vunpack.c.h.b16 %v1281
        %v3420 = vunpack.c.l.b16 %v1282
        %v3421 = vunpack.c.h.b16 %v1282
        %v3422 = vunpack.c.l.b16 %v1283
        %v3423 = vunpack.c.h.b16 %v1283
        %v3424 = vunpack.c.l.b16 %v1284
        %v3425 = vunpack.c.h.b16 %v1284
        %v3426 = vunpack.c.l.b16 %v1285
        %v3427 = vunpack.c.h.b16 %v1285
        %v3428 = vunpack.c.l.b16 %v1286
        %v3429 = vunpack.c.h.b16 %v1286
        %v3430 = vunpack.c.l.b16 %v1287
        %v3431 = vunpack.c.h.b16 %v1287
        %v3432 = vunpack.c.l.b16 %v1288
        %v3433 = vunpack.c.h.b16 %v1288
        %v3434 = vunpack.c.l.b16 %v1289
        %v3435 = vunpack.c.h.b16 %v1289
        %v3436 = vunpack.c.l.b16 %v1290
        %v3437 = vunpack.c.h.b16 %v1290
        %v3438 = vunpack.c.l.b16 %v1291
        %v3439 = vunpack.c.h.b16 %v1291
        %v3440 = vunpack.c.l.b16 %v1292
        %v3441 = vunpack.c.h.b16 %v1292
        %v3442 = vunpack.c.l.b16 %v1293
        %v3443 = vunpack.c.h.b16 %v1293
        %v3444 = vunpack.c.l.b16 %v1294
        %v3445 = vunpack.c.h.b16 %v1294
        %v3446 = vunpack.c.l.b16 %v1295
        %v3447 = vunpack.c.h.b16 %v1295
        %v3448 = vunpack.c.l.b16 %v1296
        %v3449 = vunpack.c.h.b16 %v1296
        %v3450 = vunpack.c.l.b16 %v1297
        %v3451 = vunpack.c.h.b16 %v1297
        %v3452 = vunpack.c.l.b16 %v1298
        %v3453 = vunpack.c.h.b16 %v1298
        %v3454 = vunpack.c.l.b16 %v1299
        %v3455 = vunpack.c.h.b16 %v1299
        %v3456 = vunpack.c.l.b16 %v1300
        %v3457 = vunpack.c.h.b16 %v1300
        %v3458 = vunpack.c.l.b16 %v1301
        %v3459 = vunpack.c.h.b16 %v1301
        %v3460 = vunpack.c.l.b16 %v1302
        %v3461 = vunpack.c.h.b16 %v1302
        %v3462 = vunpack.c.l.b16 %v1303
        %v3463 = vunpack.c.h.b16 %v1303
        %v3464 = vunpack.c.l.b16 %v1304
        %v3465 = vunpack.c.h.b16 %v1304
        %v3466 = vunpack.c.l.b16 %v1305
        %v3467 = vunpack.c.h.b16 %v1305
        %v3468 = vunpack.c.l.b16 %v1306
        %v3469 = vunpack.c.h.b16 %v1306
        %v3470 = vunpack.c.l.b16 %v1307
        %v3471 = vunpack.c.h.b16 %v1307
        %v3472 = vunpack.c.l.b16 %v1308
        %v3473 = vunpack.c.h.b16 %v1308
        %v3474 = vunpack.c.l.b16 %v1309
        %v3475 = vunpack.c.h.b16 %v1309
        %v3476 = vunpack.c.l.b16 %v1310
        %v3477 = vunpack.c.h.b16 %v1310
        %v3478 = vunpack.c.l.b16 %v1311
        %v3479 = vunpack.c.h.b16 %v1311
        %v3480 = vunpack.c.l.b16 %v1312
        %v3481 = vunpack.c.h.b16 %v1312
        %v3482 = vunpack.c.l.b16 %v1313
        %v3483 = vunpack.c.h.b16 %v1313
        %v3484 = vunpack.c.l.b16 %v1314
        %v3485 = vunpack.c.h.b16 %v1314
        %v3486 = vunpack.c.l.b16 %v1315
        %v3487 = vunpack.c.h.b16 %v1315
        %v3488 = vunpack.c.l.b16 %v1316
        %v3489 = vunpack.c.h.b16 %v1316
        %v3490 = vunpack.c.l.b16 %v1317
        %v3491 = vunpack.c.h.b16 %v1317
        %v3492 = vunpack.c.l.b16 %v1318
        %v3493 = vunpack.c.h.b16 %v1318
        %v3494 = vunpack.c.l.b16 %v1319
        %v3495 = vunpack.c.h.b16 %v1319
        %v3496 = vunpack.c.l.b16 %v1320
        %v3497 = vunpack.c.h.b16 %v1320
        %v3498 = vunpack.c.l.b16 %v1321
        %v3499 = vunpack.c.h.b16 %v1321
        %v3500 = vunpack.c.l.b16 %v1322
        %v3501 = vunpack.c.h.b16 %v1322
        %v3502 = vunpack.c.l.b16 %v1323
        %v3503 = vunpack.c.h.b16 %v1323
        %v3504 = vunpack.c.l.b16 %v1324
        %v3505 = vunpack.c.h.b16 %v1324
        %v3506 = vunpack.c.l.b16 %v1325
        %v3507 = vunpack.c.h.b16 %v1325
        %v3508 = vunpack.c.l.b16 %v1326
        %v3509 = vunpack.c.h.b16 %v1326
        %v3510 = vunpack.c.l.b16 %v1327
        %v3511 = vunpack.c.h.b16 %v1327
        %v3512 = vunpack.c.l.b16 %v1328
        %v3513 = vunpack.c.h.b16 %v1328
        %v3514 = vunpack.c.l.b16 %v1329
        %v3515 = vunpack.c.h.b16 %v1329
        %v3516 = vunpack.c.l.b16 %v1330
        %v3517 = vunpack.c.h.b16 %v1330
        %v3518 = vunpack.c.l.b16 %v1331
        %v3519 = vunpack.c.h.b16 %v1331
        %v3520 = vunpack.c.l.b16 %v1332
        %v3521 = vunpack.c.h.b16 %v1332
        %v3522 = vunpack.c.l.b16 %v1333
        %v3523 = vunpack.c.h.b16 %v1333
        %v3524 = vunpack.c.l.b16 %v1334
        %v3525 = vunpack.c.h.b16 %v1334
        %v3526 = vunpack.c.l.b16 %v1335
        %v3527 = vunpack.c.h.b16 %v1335
        %v3528 = vunpack.c.l.b16 %v1336
        %v3529 = vunpack.c.h.b16 %v1336
        %v3530 = vunpack.c.l.b16 %v1337
        %v3531 = vunpack.c.h.b16 %v1337
        %v3532 = vpack.c.b16 %v3406, %v3404
        %v3533 = vpack.c.b16 %v3407, %v3405
        %v3534 = vpack.c.b16 %v3410, %v3408
        %v3535 = vpack.c.b16 %v3411, %v3409
        %v3536 = vpack.c.b16 %v3414, %v3412
        %v3537 = vpack.c.b16 %v3415, %v3413
        %v3538 = vpack.c.b16 %v3418, %v3416
        %v3539 = vpack.c.b16 %v3419, %v3417
        %v3540 = vpack.c.b16 %v3422, %v3420
        %v3541 = vpack.c.b16 %v3423, %v3421
        %v3542 = vpack.c.b16 %v3426, %v3424
        %v3543 = vpack.c.b16 %v3427, %v3425
        %v3544 = vpack.c.b16 %v3430, %v3428
        %v3545 = vpack.c.b16 %v3431, %v3429
        %v3546 = vpack.c.b16 %v3434, %v3432
        %v3547 = vpack.c.b16 %v3435, %v3433
        %v3548 = vpack.c.b16 %v3438, %v3436
        %v3549 = vpack.c.b16 %v3439, %v3437
        %v3550 = vpack.c.b16 %v3442, %v3440
        %v3551 = vpack.c.b16 %v3443, %v3441
        %v3552 = vpack.c.b16 %v3446, %v3444
        %v3553 = vpack.c.b16 %v3447, %v3445
        %v3554 = vpack.c.b16 %v3450, %v3448
        %v3555 = vpack.c.b16 %v3451, %v3449
        %v3556 = vpack.c.b16 %v3454, %v3452
        %v3557 = vpack.c.b16 %v3455, %v3453
        %v3558 = vpack.c.b16 %v3458, %v3456
        %v3559 = vpack.c.b16 %v3459, %v3457
        %v3560 = vpack.c.b16 %v3462, %v3460
        %v3561 = vpack.c.b16 %v3463, %v3461
        %v3562 = vpack.c.b16 %v3466, %v3464
        %v3563 = vpack.c.b16 %v3467, %v3465
        %v3564 = vpack.c.b16 %v3470, %v3468
        %v3565 = vpack.c.b16 %v3471, %v3469
        %v3566 = vpack.c.b16 %v3474, %v3472
        %v3567 = vpack.c.b16 %v3475, %v3473
        %v3568 = vpack.c.b16 %v3478, %v3476
        %v3569 = vpack.c.b16 %v3479, %v3477
        %v3570 = vpack.c.b16 %v3482, %v3480
        %v3571 = vpack.c.b16 %v3483, %v3481
        %v3572 = vpack.c.b16 %v3486, %v3484
        %v3573 = vpack.c.b16 %v3487, %v3485
        %v3574 = vpack.c.b16 %v3490, %v3488
        %v3575 = vpack.c.b16 %v3491, %v3489
        %v3576 = vpack.c.b16 %v3494, %v3492
        %v3577 = vpack.c.b16 %v3495, %v3493
        %v3578 = vpack.c.b16 %v3498, %v3496
        %v3579 = vpack.c.b16 %v3499, %v3497
        %v3580 = vpack.c.b16 %v3502, %v3500
        %v3581 = vpack.c.b16 %v3503, %v3501
        %v3582 = vpack.c.b16 %v3506, %v3504
        %v3583 = vpack.c.b16 %v3507, %v3505
        %v3584 = vpack.c.b16 %v3510, %v3508
        %v3585 = vpack.c.b16 %v3511, %v3509
        %v3586 = vpack.c.b16 %v3514, %v3512
        %v3587 = vpack.c.b16 %v3515, %v3513
        %v3588 = vpack.c.b16 %v3518, %v3516
        %v3589 = vpack.c.b16 %v3519, %v3517
        %v3590 = vpack.c.b16 %v3522, %v3520
        %v3591 = vpack.c.b16 %v3523, %v3521
        %v3592 = vpack.c.b16 %v3526, %v3524
        %v3593 = vpack.c.b16 %v3527, %v3525
        %v3594 = vpack.c.b16 %v3530, %v3528
        %v3595 = vpack.c.b16 %v3531, %v3529
        %3660 = vmatprep.subr.bf16.mxu0 %v3533
        %3661 = vmatpush1.bf16.msra.mxu0 %v3532
        %3662 = vmatprep.subr.bf16.mxu0 %v3535
        %3663 = vmatpush1.bf16.msra.mxu0 %v3534
        %3664 = vmatprep.subr.bf16.mxu0 %v3537
        %3665 = vmatpush1.bf16.msra.mxu0 %v3536
        %3666 = vmatprep.subr.bf16.mxu0 %v3539
        %3667 = vmatpush1.bf16.msra.mxu0 %v3538
        %3668 = vmatprep.subr.bf16.mxu0 %v3541
        %3669 = vmatpush1.bf16.msra.mxu0 %v3540
        %3670 = vmatprep.subr.bf16.mxu0 %v3543
        %3671 = vmatpush1.bf16.msra.mxu0 %v3542
        %3672 = vmatprep.subr.bf16.mxu0 %v3545
        %3673 = vmatpush1.bf16.msra.mxu0 %v3544
        %3674 = vmatprep.subr.bf16.mxu0 %v3547
        %3675 = vmatpush1.bf16.msra.mxu0 %v3546
        %3676 = vmatprep.subr.bf16.mxu0 %v3549
        %3677 = vmatpush1.bf16.msra.mxu0 %v3548
        %3678 = vmatprep.subr.bf16.mxu0 %v3551
        %3679 = vmatpush1.bf16.msra.mxu0 %v3550
        %3680 = vmatprep.subr.bf16.mxu0 %v3553
        %3681 = vmatpush1.bf16.msra.mxu0 %v3552
        %3682 = vmatprep.subr.bf16.mxu0 %v3555
        %3683 = vmatpush1.bf16.msra.mxu0 %v3554
        %3684 = vmatprep.subr.bf16.mxu0 %v3557
        %3685 = vmatpush1.bf16.msra.mxu0 %v3556
        %3686 = vmatprep.subr.bf16.mxu0 %v3559
        %3687 = vmatpush1.bf16.msra.mxu0 %v3558
        %3688 = vmatprep.subr.bf16.mxu0 %v3561
        %3689 = vmatpush1.bf16.msra.mxu0 %v3560
        %3690 = vmatprep.subr.bf16.mxu0 %v3563
        %3691 = vmatpush1.bf16.msra.mxu0 %v3562
        %3692 = vmatprep.mubr.bf16.mxu0 %v3322
        %3693 = vmatmul.mubr.bf16.gmra.mrb[0].mxu0 %v3321
        %v3694 = vpop.f32.mrb[0].mxu0
        %v3695 = vadd.f32 %v3333, %v3694
        %v3696 = vpop.f32.mrb[0].mxu0
        %v3697 = vadd.f32 %v3337, %v3696
        %v3698 = vpop.f32.mrb[0].mxu0
        %v3699 = vadd.f32 %v3333, %v3698
        %v3700 = vpop.f32.mrb[0].mxu0
        %v3701 = vadd.f32 %v3337, %v3700
        %3702 = vmatprep.mubr.bf16.mxu0 %v3326
        %3703 = vmatmul.mubr.bf16.gmra.mrb[0].mxu0 %v3325
        %v3704 = vpop.f32.mrb[0].mxu0
        %v3705 = vadd.f32 %v3333, %v3704
        %v3706 = vpop.f32.mrb[0].mxu0
        %v3707 = vadd.f32 %v3337, %v3706
        %v3708 = vpop.f32.mrb[0].mxu0
        %v3709 = vpop.f32.mrb[0].mxu0
        %3710 = vdwg.mxu0
        %3711 = vmatprep.subr.bf16.mxu0 %v3565
        %3712 = vmatpush1.bf16.msra.mxu0 %v3564
        %3713 = vmatprep.subr.bf16.mxu0 %v3567
        %3714 = vmatpush1.bf16.msra.mxu0 %v3566
        %3715 = vmatprep.subr.bf16.mxu0 %v3569
        %3716 = vmatpush1.bf16.msra.mxu0 %v3568
        %3717 = vmatprep.subr.bf16.mxu0 %v3571
        %3718 = vmatpush1.bf16.msra.mxu0 %v3570
        %3719 = vmatprep.subr.bf16.mxu0 %v3573
        %3720 = vmatpush1.bf16.msra.mxu0 %v3572
        %3721 = vmatprep.subr.bf16.mxu0 %v3575
        %3722 = vmatpush1.bf16.msra.mxu0 %v3574
        %3723 = vmatprep.subr.bf16.mxu0 %v3577
        %3724 = vmatpush1.bf16.msra.mxu0 %v3576
        %3725 = vmatprep.subr.bf16.mxu0 %v3579
        %3726 = vmatpush1.bf16.msra.mxu0 %v3578
        %3727 = vmatprep.subr.bf16.mxu0 %v3581
        %3728 = vmatpush1.bf16.msra.mxu0 %v3580
        %3729 = vmatprep.subr.bf16.mxu0 %v3583
        %3730 = vmatpush1.bf16.msra.mxu0 %v3582
        %3731 = vmatprep.subr.bf16.mxu0 %v3585
        %3732 = vmatpush1.bf16.msra.mxu0 %v3584
        %3733 = vmatprep.subr.bf16.mxu0 %v3587
        %3734 = vmatpush1.bf16.msra.mxu0 %v3586
        %3735 = vmatprep.subr.bf16.mxu0 %v3589
        %3736 = vmatpush1.bf16.msra.mxu0 %v3588
        %3737 = vmatprep.subr.bf16.mxu0 %v3591
        %3738 = vmatpush1.bf16.msra.mxu0 %v3590
        %3739 = vmatprep.subr.bf16.mxu0 %v3593
        %3740 = vmatpush1.bf16.msra.mxu0 %v3592
        %3741 = vmatprep.subr.bf16.mxu0 %v3595
        %3742 = vmatpush1.bf16.msra.mxu0 %v3594
        %3743 = vmatprep.mubr.bf16.mxu0 %v3324
        %3744 = vmatmul.mubr.bf16.gmra.mrb[0].mxu0 %v3323
        %v3745 = vpop.f32.mrb[0].mxu0
        %v3746 = vadd.f32 %v3695, %v3745
        %v3747 = vpop.f32.mrb[0].mxu0
        %v3748 = vadd.f32 %v3697, %v3747
        %v3749 = vpop.f32.mrb[0].mxu0
        %v3750 = vadd.f32 %v3699, %v3749
        %v3751 = vpop.f32.mrb[0].mxu0
        %v3752 = vadd.f32 %v3701, %v3751
        %3753 = vmatprep.mubr.bf16.mxu0 %v3328
        %3754 = vmatmul.mubr.bf16.gmra.mrb[0].mxu0 %v3327
        %v3755 = vpop.f32.mrb[0].mxu0
        %v3756 = vadd.f32 %v3705, %v3755
        %v3757 = vpop.f32.mrb[0].mxu0
        %v3758 = vadd.f32 %v3707, %v3757
        %v3759 = vpop.f32.mrb[0].mxu0
        %v3760 = vpop.f32.mrb[0].mxu0
        %3761 = vdwg.mxu0
        %v3762 = vadd.f32 %v2674, %v3746
        %v3763 = vadd.f32 %v2675, %v3748
        %v3764 = vadd.f32 %v2676, %v3750
        %v3765 = vadd.f32 %v2677, %v3752
        %v3766 = vadd.f32 %v2678, %v3756
        %v3767 = vadd.f32 %v2679, %v3758
        %3768 = vst [vmem:[#allocation2] sm:$0xff] %v3762
        %3769 = vst [vmem:[#allocation2 + $0x8] sm:$0xff] %v3763
        %3770 = vst [vmem:[#allocation2 + $0x10] sm:$0xff] %v3764
        %3771 = vst [vmem:[#allocation2 + $0x18] sm:$0xff] %v3765
        %3772 = vst [vmem:[#allocation2 + $0x20] sm:$0x1] %v3766
        %3773 = vst [vmem:[#allocation2 + $0x28] sm:$0x1] %v3767
        %p3774 = scmp.eq.s32.totalorder %s45, 1
        // Predicated region
        $region137: #{tpu_custom_call.1} parent=87 // pred_check
          %p3775 = pneg %p3774
        $region138: #{tpu_custom_call.1} parent=87 // pred_check_branch
          %3777 = sbr.rel (%p3775) target = $region140
        $region139: #{tpu_custom_call.1} parent=87 // pred_region
          %v3778 = vld [vmem:[#allocation2] sm:$0xff]
          %v3779 = vld [vmem:[#allocation2 + $0x8] sm:$0xff]
          %v3780 = vld [vmem:[#allocation2 + $0x10] sm:$0xff]
          %v3781 = vld [vmem:[#allocation2 + $0x18] sm:$0xff]
          %v3782 = vld [vmem:[#allocation2 + $0x20] sm:$0x1]
          %v3783 = vld [vmem:[#allocation2 + $0x28] sm:$0x1]
          %v3784 = vld [vmem:[#allocation8] sm:$0x3]
          %v3785 = vld [vmem:[#allocation10] sm:$0x3]
          %v3786 = vadd.f32 %v3778, %v3779
          %3787 = vadd.xlane.f32.xlu0 %v3786
          %v3788 = vpop.xlane.xlu0 %3787
          %v3789 = vadd.f32 %v3780, %v3781
          %3790 = vadd.xlane.f32.xlu0 %v3789
          %v3791 = vpop.xlane.xlu0 %3790
          %v3792 = vsel %vm1345, %v3782, 0.0
          %v3793 = vsel %vm1345, %v3783, 0.0
          %v3794 = vadd.f32 %v3792, %v3793
          %3795 = vadd.xlane.f32.xlu0 %v3794
          %v3796 = vpop.xlane.xlu0 %3795
          %v3797 = vmul.f32 %v3788, %v1351
          %v3798 = vmul.f32 %v3791, %v1351
          %v3799 = vmul.f32 %v3796, %v1351
          %v3800 = vsub.f32 %v3778, %v3797
          %v3801 = vsub.f32 %v3779, %v3797
          %v3802 = vsub.f32 %v3780, %v3798
          %v3803 = vsub.f32 %v3781, %v3798
          %v3804 = vsub.f32 %v3782, %v3799
          %v3805 = vsub.f32 %v3783, %v3799
          %v3806 = vmul.f32 %v3800, %v3800
          %v3807 = vmul.f32 %v3801, %v3801
          %v3808 = vmul.f32 %v3802, %v3802
          %v3809 = vmul.f32 %v3803, %v3803
          %v3810 = vmul.f32 %v3804, %v3804
          %v3811 = vmul.f32 %v3805, %v3805
          %v3812 = vadd.f32 %v3806, %v3807
          %3813 = vadd.xlane.f32.xlu0 %v3812
          %v3814 = vpop.xlane.xlu0 %3813
          %v3815 = vadd.f32 %v3808, %v3809
          %3816 = vadd.xlane.f32.xlu0 %v3815
          %v3817 = vpop.xlane.xlu0 %3816
          %v3818 = vsel %vm1345, %v3810, 0.0
          %v3819 = vsel %vm1345, %v3811, 0.0
          %v3820 = vadd.f32 %v3818, %v3819
          %3821 = vadd.xlane.f32.xlu0 %v3820
          %v3822 = vpop.xlane.xlu0 %3821
          %v3823 = vmul.f32 %v3814, %v1351
          %v3824 = vmul.f32 %v3817, %v1351
          %v3825 = vmul.f32 %v3822, %v1351
          %v3826 = vadd.f32 %v3823, 1e-05
          %v3827 = vadd.f32 %v3824, 1e-05
          %v3828 = vadd.f32 %v3825, 1e-05
          %v3829 = vrsqrt.pop %v3826
          %v3830 = vrsqrt.pop %v3827
          %v3831 = vrsqrt.pop %v3828
          %v3832 = vmul.f32 %v3800, %v3829
          %v3833 = vmul.f32 %v3801, %v3829
          %v3834 = vmul.f32 %v3802, %v3830
          %v3835 = vmul.f32 %v3803, %v3830
          %v3836 = vmul.f32 %v3804, %v3831
          %v3837 = vmul.f32 %v3805, %v3831
          %v3839 = vlaneseq
          %v3840 = vshrl.u32 %v3839, 7
          %v3841 = vsub.s32 0, %v3840
          %v3842 = vrot.slane %v3784, %v3841
          %v3843 = vlaneseq
          %v3844 = vshrl.u32 %v3843, 7
          %v3845 = vsub.s32 1, %v3844
          %v3846 = vrot.slane %v3784, %v3845
          %v3849 = vmul.f32 %v3832, %v3842
          %v3850 = vmul.f32 %v3833, %v3846
          %v3851 = vmul.f32 %v3834, %v3842
          %v3852 = vmul.f32 %v3835, %v3846
          %v3853 = vmul.f32 %v3836, %v3842
          %v3854 = vmul.f32 %v3837, %v3846
          %v3856 = vlaneseq
          %v3857 = vshrl.u32 %v3856, 7
          %v3858 = vsub.s32 0, %v3857
          %v3859 = vrot.slane %v3785, %v3858
          %v3860 = vlaneseq
          %v3861 = vshrl.u32 %v3860, 7
          %v3862 = vsub.s32 1, %v3861
          %v3863 = vrot.slane %v3785, %v3862
          %v3866 = vadd.f32 %v3849, %v3859
          %v3867 = vadd.f32 %v3850, %v3863
          %v3868 = vadd.f32 %v3851, %v3859
          %v3869 = vadd.f32 %v3852, %v3863
          %v3870 = vadd.f32 %v3853, %v3859
          %v3871 = vadd.f32 %v3854, %v3863
          %3872 = vst [vmem:[%s946] sm:$0xff] %v3866
          %3873 = vst [vmem:[%s946 + $0x8] sm:$0xff] %v3867
          %3874 = vst [vmem:[%s946 + $0x10] sm:$0xff] %v3868
          %3875 = vst [vmem:[%s946 + $0x18] sm:$0xff] %v3869
          %3876 = vst [vmem:[%s946 + $0x20] sm:$0x1] %v3870
          %3877 = vst [vmem:[%s946 + $0x28] sm:$0x1] %v3871
        $region140: #{tpu_custom_call.1} parent=87 // pred_fallthru
          _
        %p3878 = scmp.lt.s32.totalorder %s44, 0
        %s3879 = scalar_select %p3878, %s44, 0
        %s3880 = smul.addr %s3879, 6
        %s3881 = smul.addr %s3880, 8
        %s3882 = scalar_lea.vmem %s17, %s3881
        // Predicated region
        $region141: #{tpu_custom_call.1} parent=87 // pred_check
          %p3883 = pneg %p492
        $region142: #{tpu_custom_call.1} parent=87 // pred_check_branch
          %3885 = sbr.rel (%p3883) target = $region144
        $region143: #{tpu_custom_call.1} parent=87 // pred_region
          _
        $region144: #{tpu_custom_call.1} parent=87 // pred_fallthru
          _
        // Predicated region
        $region145: #{tpu_custom_call.1} parent=87 // pred_check
          %p3886 = pneg %p492
        $region146: #{tpu_custom_call.1} parent=87 // pred_check_branch
          %3888 = sbr.rel (%p3886) target = $region148
        $region147: #{tpu_custom_call.1} parent=87 // pred_region
          %p3889 = scmp.lt.s32.totalorder %s44, 0
          %s3890 = scalar_select %p3889, %s44, 0
          %s3891 = smul.addr %s3890, 6
          %s3892 = smul.addr %s3891, 8
          %s3893 = scalar_lea.vmem %s17, %s3892
        $region148: #{tpu_custom_call.1} parent=87 // pred_fallthru
          _
      $region88: #{tpu_custom_call.1} parent=5 // pred_fallthru
        _
      %p3894 = scmp.le.s32.totalorder 2, %s35
      // Predicated region
      $region149: #{tpu_custom_call.1} parent=5 // pred_check
        %p3895 = pneg %p3894
      $region150: #{tpu_custom_call.1} parent=5 // pred_check_branch
        %3897 = sbr.rel (%p3895) target = $region152
      $region151: #{tpu_custom_call.1} parent=5 // pred_region
        %s3898 = ssub.s32 %s35, 2
      $region152: #{tpu_custom_call.1} parent=5 // pred_fallthru
        _
    $region6: #{tpu_custom_call.1} parent=1 // loop_footer
      %s39 = sadd.s32 1, %s35
    $region7: #{tpu_custom_call.1} parent=1 // loop_footer_branch
      %34 = sbr.rel target = $region3
    $region8: #{tpu_custom_call.1} parent=1 // loop_exit
      _
    %3899 = vsyncpa [#allocation4], 1
    %s3900 = scalar_lea.sflag [#allocation4], 1
    %3901 = vsyncpa %s3900, 1
    %3902 = vsyncpa [#allocation6], 1
    %3903 = vsyncpa [#allocation9], 1
    %3904 = vsyncpa [#allocation12], 1
    %s3905 = scalar_lea.sflag [#allocation12], 1
    %3906 = vsyncpa %s3905, 1
    %3907 = vsyncpa [#allocation15], 1
    %s3908 = scalar_lea.sflag [#allocation15], 1
    %3909 = vsyncpa %s3908, 1
    %3910 = vsyncpa [#allocation18], 1
    %s3911 = scalar_lea.sflag [#allocation18], 1
    %3912 = vsyncpa %s3911, 1

</llo_original>
